<compile_context>
chip_gen: v6e
topology: v6e:2x2x1
jax: 0.10.0
libtpu: 0.0.40
codegen_flags: <defaults>
</compile_context>

<pallas_src>
import jax
import jax.numpy as jnp
from jax import lax
from jax.experimental import pallas as pl
from jax.experimental.pallas import tpu as pltpu

K = 5  # all DBlock kernels are 5x5


# ----------------------------------------------------------------------------
# Host-side weight packing (done ONCE at parameter-load time, not per forward).
# ----------------------------------------------------------------------------
def _conv_band(w, W):
    """PyTorch Conv2d weight (Cout, Cin, K, K), padding=2 ->
       (K, W*Cin, W*Cout) banded matrices: M[kh][xin*Cin+ci, x*Cout+co] = w[co,ci,kh,xin-x+2]."""
    cout, cin = w.shape[0], w.shape[1]
    wt = jnp.transpose(w, (2, 3, 1, 0))                  # (kh, kw, Cin, Cout)
    m = jnp.zeros((K, W, cin, W, cout), jnp.float32)     # [kh, x_in, ci, x_out, co]
    for kw in range(K):
        d = kw - 2                                       # x_in = x_out + d
        xs = jnp.arange(max(0, -d), min(W, W - d))
        vals = jnp.broadcast_to(wt[:, kw][None], (xs.shape[0], K, cin, cout))
        m = m.at[:, xs + d, :, xs, :].set(vals)
    return m.reshape(K, W * cin, W * cout)


def _deconv_band(wd, W, Wout):
    """ConvTranspose2d weight (Cin, Cout, K, K) with stride=2, padding=2, output_padding=1
       -> (K, W*Cin, Wout*Cout) phase matrices:
       j=0,1,2 build EVEN output rows from input rows yo-1, yo, yo+1 (kh = 4,2,0)
       j=3,4   build ODD  output rows from input rows yo,   yo+1     (kh = 3,1)."""
    cin, cout = wd.shape[0], wd.shape[1]
    wdt = jnp.transpose(wd, (2, 3, 0, 1))                # (kh, kw, Cin, Cout)
    kh_of_j = jnp.array([4, 2, 0, 3, 1])
    m = jnp.zeros((K, W, cin, Wout, cout), jnp.float32)  # [j, w_in, ci, X_out, co]
    for kw in range(K):
        lo = max(0, -((kw - 2) // 2))                    # X = 2*w + kw - 2 >= 0
        hi = min(W - 1, (Wout + 1 - kw) // 2)            # X <= Wout - 1
        ws = jnp.arange(lo, hi + 1)
        xs = 2 * ws + kw - 2
        vals = jnp.broadcast_to(wdt[kh_of_j, kw][None], (ws.shape[0], K, cin, cout))
        m = m.at[:, ws, :, xs, :].set(vals)
    return m.reshape(K, W * cin, Wout * cout)


def pack_dblock_params(params, W, stride=2, output_padding=1):
    """One-time host-side packing of DBlock weights into matmul-ready banded form (bf16)
    and pre-tiled biases (f32). Call once; dblock_forward consumes the result."""
    assert stride == 2 and output_padding == 1
    Wout = stride * W
    w1s = jnp.stack([_conv_band(w1, W) for (w1, _, _, _) in params["resblocks"]]).astype(jnp.bfloat16)
    w2s = jnp.stack([_conv_band(w2, W) for (_, _, w2, _) in params["resblocks"]]).astype(jnp.bfloat16)
    b1s = jnp.stack([jnp.tile(b1, W)[None] for (_, b1, _, _) in params["resblocks"]])
    b2s = jnp.stack([jnp.tile(b2, W)[None] for (_, _, _, b2) in params["resblocks"]])
    band = _deconv_band(params["deconv_w"], W, Wout).astype(jnp.bfloat16)   # (5, W*Cin, Wout*Cout)
    wd0 = band[0]                                                           # d=0 window: even (kh=4)
    wd12 = jnp.stack([jnp.concatenate([band[1], band[3]], axis=-1),         # d=1: even kh=2 | odd kh=3
                      jnp.concatenate([band[2], band[4]], axis=-1)])        # d=2: even kh=0 | odd kh=1
    bd = jnp.tile(params["deconv_b"], Wout)[None]
    return dict(w1=w1s, b1=b1s, w2=w2s, b2=b2s, wd0=wd0, wd12=wd12, bd=bd)


def _pick_batch_tile(n, h, target_m=256):
    """Largest batch tile whose M = Nb*H fits the target, preferring >=2 grid steps
    (v7x megacore) as long as that does not shrink M below ~128 rows."""
    divisors = [d for d in range(1, n + 1) if n % d == 0]
    fitting = [d for d in divisors if d * h <= target_m] or [1]
    multi = [d for d in fitting if n // d >= 2]
    if multi and (max(multi) * h >= 128 or max(fitting) * h < 128):
        return max(multi)
    return max(fitting)


# ----------------------------------------------------------------------------
# The fused Pallas kernel: one batch TILE (Nb elements) per grid step.
# ----------------------------------------------------------------------------
def _dblock_kernel(x_ref, w1_ref, b1_ref, w2_ref, b2_ref,
                   wd0_ref, wd12_ref, bd_ref, out_ref, pad_ref):
    # x_ref    : (Nb, H, WCin)  f32        flattened NHWC rows, W*Cin on lanes
    # w1/w2    : (3, K, WCin, WCin) bf16   banded conv matrices per resblock
    # b1/b2    : (3, 1, WCin) f32          biases pre-tiled along W
    # wd0_ref  : (WCin, WCout) bf16        deconv even phase, window d=0 (kh=4)
    # wd12_ref : (2, WCin, 2*WCout) bf16   windows d=1,2: [even || odd] fused along lanes
    # bd_ref   : (1, WCout) f32
    # out_ref  : (2, Nb, H, WCout) f32     leading dim = output-row parity (even / odd)
    # pad_ref  : (Nb, H+4, WCin) bf16      persistent staging scratch, 2-row halo / element
    nb, h, wcin = x_ref.shape
    m = nb * h
    wcout = out_ref.shape[3]

    # Zero the halo rows every step (cheap; safe under "parallel" grid sharding since
    # each TensorCore owns its own scratch).
    halo = jnp.zeros((nb, 2, wcin), jnp.bfloat16)
    pad_ref[:, 0:2, :] = halo
    pad_ref[:, h + 2:h + 4, :] = halo

    def stage(act):
        # One f32->bf16 cast per conv layer: write activation into scratch rows [2:H+2].
        pad_ref[:, 2:2 + h, :] = act.reshape(nb, h, wcin).astype(jnp.bfloat16)

    def window(off):
        # Shifted (already bf16) LHS window, stacked over the batch tile: (M, WCin).
        return pad_ref[:, off:off + h, :].reshape(m, wcin)

    def conv5(w_ref, r, bias, relu):
        acc = None
        for kh in range(K):                    # 5 taps, 128-deep contraction, f32 accumulation
            d = jnp.dot(window(kh), w_ref[r, kh, :, :],
                        preferred_element_type=jnp.float32)
            acc = d if acc is None else acc + d
        acc = acc + bias
        if relu:
            acc = jnp.maximum(acc, 0.0)
        return acc

    x = x_ref[...].reshape(m, wcin)            # f32 residual trunk stays in f32

    # --- 3 residual blocks: conv5x5 + ReLU -> conv5x5 -> + identity (no last activation) ---
    for r in range(3):
        stage(x)
        hid = conv5(w1_ref, r, b1_ref[r, :, :], relu=True)
        stage(hid)
        hid = conv5(w2_ref, r, b2_ref[r, :, :], relu=False)
        x = x + hid

    # --- ConvTranspose2d(5x5, stride 2, pad 2, output_pad 1) + ReLU ---
    # Phase decomposition with shared-LHS fusion: 3 matmuls (128, 256, 256 wide).
    stage(x)                                   # deconv's 1-row halo = scratch rows [1:H+3]
    even = jnp.dot(window(1), wd0_ref[...], preferred_element_type=jnp.float32)
    r1 = jnp.dot(window(2), wd12_ref[0, :, :], preferred_element_type=jnp.float32)
    r2 = jnp.dot(window(3), wd12_ref[1, :, :], preferred_element_type=jnp.float32)
    even = even + r1[:, :wcout] + r2[:, :wcout]
    odd = r1[:, wcout:] + r2[:, wcout:]
    bd = bd_ref[...]
    out_ref[0, :, :, :] = jnp.maximum(even + bd, 0.0).reshape(nb, h, wcout)   # even rows
    out_ref[1, :, :, :] = jnp.maximum(odd + bd, 0.0).reshape(nb, h, wcout)    # odd rows


# ----------------------------------------------------------------------------
# Public wrapper: NCHW in -> NCHW out (PyTorch convention).
# ----------------------------------------------------------------------------
def _dblock_forward(x_nchw, packed, stride, output_padding):
    # TODO(synk): only stride=2 / output_padding=1 (the SRNNet DBlock config) is implemented
    #             via the 2-phase decomposition; other strides need their own phase sets.
    assert stride == 2 and output_padding == 1
    N, cin, H, W = x_nchw.shape
    Hout, Wout = stride * H, stride * W
    wcin = W * cin
    wcout = packed["bd"].shape[-1]
    cout = wcout // Wout
    # Lane-density assumption of this packing (see perf review): keep row widths 128-aligned.
    assert wcin % 128 == 0 and wcout % 128 == 0, (wcin, wcout)
    assert packed["w1"].shape[-1] == wcin, "packed params do not match input width/channels"

    nb = _pick_batch_tile(N, H)

    # NCHW -> flattened NHWC rows (N, H, W*Cin), channels minor on lanes.
    # TODO(synk): if the surrounding network can run NHWC end-to-end, drop this transpose and
    #             the output one below; they are the only HBM round-trips besides the kernel.
    x_rows = jnp.transpose(x_nchw, (0, 2, 3, 1)).reshape(N, H, wcin)

    out = pl.pallas_call(
        _dblock_kernel,
        out_shape=jax.ShapeDtypeStruct((2, N, H, wcout), jnp.float32),
        grid=(N // nb,),
        in_specs=[
            pl.BlockSpec((nb, H, wcin), lambda g: (g, 0, 0)),
            pl.BlockSpec((3, K, wcin, wcin), lambda g: (0, 0, 0, 0)),
            pl.BlockSpec((3, 1, wcin), lambda g: (0, 0, 0)),
            pl.BlockSpec((3, K, wcin, wcin), lambda g: (0, 0, 0, 0)),
            pl.BlockSpec((3, 1, wcin), lambda g: (0, 0, 0)),
            pl.BlockSpec((wcin, wcout), lambda g: (0, 0)),
            pl.BlockSpec((2, wcin, 2 * wcout), lambda g: (0, 0, 0)),
            pl.BlockSpec((1, wcout), lambda g: (0, 0)),
        ],
        out_specs=pl.BlockSpec((2, nb, H, wcout), lambda g: (0, g, 0, 0)),
        scratch_shapes=[pltpu.VMEM((nb, H + 4, wcin), jnp.bfloat16)],
        compiler_params=pltpu.CompilerParams(dimension_semantics=("parallel",)),
        # TODO(synk): when scaling H/W, set vmem_limit_bytes here (banded weights grow as
        #             (W*Cin)^2 and are double-buffered by default).
    )(x_rows, packed["w1"], packed["b1"], packed["w2"], packed["b2"],
      packed["wd0"], packed["wd12"], packed["bd"])

    # (2, N, H, Wout*Cout) -> NCHW with even/odd row interleave; one XLA transpose.
    y = out.reshape(2, N, H, Wout, cout)
    y = jnp.transpose(y, (1, 4, 2, 0, 3)).reshape(N, cout, Hout, Wout)
    return y


dblock_forward = jax.jit(_dblock_forward, static_argnums=(2, 3))


# ----------------------------------------------------------------------------
# Pure-JAX reference (lax convs, f32) for correctness checking.
# ----------------------------------------------------------------------------
def dblock_reference(x_nchw, params, stride, output_padding):
    dn = ("NHWC", "HWIO", "NHWC")
    x = jnp.transpose(x_nchw, (0, 2, 3, 1))
    for (w1, b1, w2, b2) in params["resblocks"]:
        h = lax.conv_general_dilated(x, jnp.transpose(w1, (2, 3, 1, 0)), (1, 1),
                                     ((2, 2), (2, 2)), dimension_numbers=dn) + b1
        h = jnp.maximum(h, 0.0)
        h = lax.conv_general_dilated(h, jnp.transpose(w2, (2, 3, 1, 0)), (1, 1),
                                     ((2, 2), (2, 2)), dimension_numbers=dn) + b2
        x = h + x
    wct = params["deconv_w"]
    w_hwio = jnp.transpose(wct, (2, 3, 0, 1))[::-1, ::-1, :, :]
    p = K - 1 - 2
    y = lax.conv_general_dilated(x, w_hwio, (1, 1),
                                 ((p, p + output_padding), (p, p + output_padding)),
                                 lhs_dilation=(stride, stride),
                                 dimension_numbers=dn) + params["deconv_b"]
    y = jnp.maximum(y, 0.0)
    return jnp.transpose(y, (0, 3, 1, 2))


# ----------------------------------------------------------------------------
# Deterministic parameter init (shapes follow the PyTorch module __init__).
# ----------------------------------------------------------------------------
def init_dblock_params(key, in_channels, out_channels):
    def init_conv(k, cout, cin):
        kw, kb = jax.random.split(k)
        fan_in = cin * K * K
        w = jax.random.normal(kw, (cout, cin, K, K), jnp.float32) / jnp.sqrt(fan_in)
        b = jax.random.normal(kb, (cout,), jnp.float32) * 0.01
        return w, b

    keys = jax.random.split(key, 7)
    resblocks = []
    for i in range(3):
        w1, b1 = init_conv(keys[2 * i], in_channels, in_channels)
        w2, b2 = init_conv(keys[2 * i + 1], in_channels, in_channels)
        resblocks.append((w1, b1, w2, b2))
    kdw, kdb = jax.random.split(keys[6])
    fan_in = in_channels * K * K
    deconv_w = jax.random.normal(kdw, (in_channels, out_channels, K, K),
                                 jnp.float32) / jnp.sqrt(fan_in)
    deconv_b = jax.random.normal(kdb, (out_channels,), jnp.float32) * 0.01
    return {"resblocks": resblocks, "deconv_w": deconv_w, "deconv_b": deconv_b}


if __name__ == "__main__":
    in_channels, out_channels = 8, 4
    stride, output_padding = 2, 1
    N, H, W = 4, 16, 16

    key = jax.random.PRNGKey(0)
    k_x, k_p = jax.random.split(key)
    x = jax.random.normal(k_x, (N, in_channels, H, W), jnp.float32)   # NCHW input
    params = init_dblock_params(k_p, in_channels, out_channels)

    # Pack weights ONCE (outside the jitted forward) — inference weights never re-pack.
    packed = pack_dblock_params(params, W, stride, output_padding)
    packed = jax.block_until_ready(packed)

    y = dblock_forward(x, packed, stride, output_padding)
    y = jax.block_until_ready(y)

    assert y.shape == (N, out_channels, H * stride, W * stride), y.shape

    # f32 lax reference; tolerance accounts for bf16 matmul operands (f32 accumulation).
    y_ref = dblock_reference(x, params, stride, output_padding)
    if not bool(jnp.allclose(y, y_ref, rtol=3e-2, atol=3e-2)):
        raise AssertionError("Pallas DBlock does not match JAX reference")

    print("KERNEL_OK")
</pallas_src>

<mosaic_0001>
module attributes {stable_mosaic.version = 11 : i64} {
  func.func @_dblock_kernel(%arg0: i32, %arg1: memref<2x16x128xf32, #tpu.memory_space<vmem>>, %arg2: memref<3x5x128x128xbf16, #tpu.memory_space<vmem>>, %arg3: memref<3x1x128xf32, #tpu.memory_space<vmem>>, %arg4: memref<3x5x128x128xbf16, #tpu.memory_space<vmem>>, %arg5: memref<3x1x128xf32, #tpu.memory_space<vmem>>, %arg6: memref<128x128xbf16, #tpu.memory_space<vmem>>, %arg7: memref<2x128x256xbf16, #tpu.memory_space<vmem>>, %arg8: memref<1x128xf32, #tpu.memory_space<vmem>>, %arg9: memref<2x2x16x128xf32, #tpu.memory_space<vmem>>, %arg10: memref<2x20x128xbf16, #tpu.memory_space<vmem>>) attributes {dimension_semantics = [#tpu.dimension_semantics<parallel>], iteration_bounds = array<i64: 2>, scalar_prefetch = 0 : i64, scratch_operands = 1 : i64, tpu.core_type = #tpu.core_type<tc>, window_params = [{transform_indices = @transform_0, window_bounds = array<i64: 2, 16, 128>}, {pipeline_mode = #tpu.pipeline_mode<synchronous>, transform_indices = @transform_1, window_bounds = array<i64: 3, 5, 128, 128>}, {pipeline_mode = #tpu.pipeline_mode<synchronous>, transform_indices = @transform_2, window_bounds = array<i64: 3, 1, 128>}, {pipeline_mode = #tpu.pipeline_mode<synchronous>, transform_indices = @transform_3, window_bounds = array<i64: 3, 5, 128, 128>}, {pipeline_mode = #tpu.pipeline_mode<synchronous>, transform_indices = @transform_4, window_bounds = array<i64: 3, 1, 128>}, {pipeline_mode = #tpu.pipeline_mode<synchronous>, transform_indices = @transform_5, window_bounds = array<i64: 128, 128>}, {pipeline_mode = #tpu.pipeline_mode<synchronous>, transform_indices = @transform_6, window_bounds = array<i64: 2, 128, 256>}, {pipeline_mode = #tpu.pipeline_mode<synchronous>, transform_indices = @transform_7, window_bounds = array<i64: 1, 128>}, {transform_indices = @transform_8, window_bounds = array<i64: 2, 2, 16, 128>}]} {
    %cst = arith.constant 0.000000e+00 : bf16
    %0 = vector.broadcast %cst : bf16 to vector<2x2x128xbf16>
    %c0 = arith.constant 0 : index
    %c0_0 = arith.constant 0 : index
    %c0_1 = arith.constant 0 : index
    %1 = vector.load %arg10[%c0, %c0_0, %c0_1] : memref<2x20x128xbf16, #tpu.memory_space<vmem>>, vector<2x2x128xbf16>
    tpu.vector_store %arg10[%c0, %c0_0, %c0_1], %0 {strides = array<i32>} : memref<2x20x128xbf16, #tpu.memory_space<vmem>>, vector<2x2x128xbf16>,
    %c0_2 = arith.constant 0 : index
    %c18 = arith.constant 18 : index
    %c0_3 = arith.constant 0 : index
    %2 = vector.load %arg10[%c0_2, %c18, %c0_3] : memref<2x20x128xbf16, #tpu.memory_space<vmem>>, vector<2x2x128xbf16>
    tpu.vector_store %arg10[%c0_2, %c18, %c0_3], %0 {strides = array<i32>} : memref<2x20x128xbf16, #tpu.memory_space<vmem>>, vector<2x2x128xbf16>,
    %c0_4 = arith.constant 0 : index
    %c0_5 = arith.constant 0 : index
    %c0_6 = arith.constant 0 : index
    %3 = vector.load %arg1[%c0_4, %c0_5, %c0_6] : memref<2x16x128xf32, #tpu.memory_space<vmem>>, vector<2x16x128xf32>
    %4 = vector.shape_cast %3 : vector<2x16x128xf32> to vector<32x128xf32>
    %5 = vector.shape_cast %4 : vector<32x128xf32> to vector<2x16x128xf32>
    %6 = arith.truncf %5 : vector<2x16x128xf32> to vector<2x16x128xbf16>
    %c0_7 = arith.constant 0 : index
    %c2 = arith.constant 2 : index
    %c0_8 = arith.constant 0 : index
    %7 = vector.load %arg10[%c0_7, %c2, %c0_8] : memref<2x20x128xbf16, #tpu.memory_space<vmem>>, vector<2x16x128xbf16>
    tpu.vector_store %arg10[%c0_7, %c2, %c0_8], %6 {strides = array<i32>} : memref<2x20x128xbf16, #tpu.memory_space<vmem>>, vector<2x16x128xbf16>,
    %c0_9 = arith.constant 0 : index
    %c0_10 = arith.constant 0 : index
    %c0_11 = arith.constant 0 : index
    %8 = vector.load %arg3[%c0_9, %c0_10, %c0_11] : memref<3x1x128xf32, #tpu.memory_space<vmem>>, vector<1x1x128xf32>
    %9 = vector.shape_cast %8 : vector<1x1x128xf32> to vector<1x128xf32>
    %c0_12 = arith.constant 0 : index
    %c0_13 = arith.constant 0 : index
    %c0_14 = arith.constant 0 : index
    %10 = vector.load %arg10[%c0_12, %c0_13, %c0_14] : memref<2x20x128xbf16, #tpu.memory_space<vmem>>, vector<2x16x128xbf16>
    %11 = vector.shape_cast %10 : vector<2x16x128xbf16> to vector<32x128xbf16>
    %c0_15 = arith.constant 0 : index
    %c0_16 = arith.constant 0 : index
    %c0_17 = arith.constant 0 : index
    %c0_18 = arith.constant 0 : index
    %12 = vector.load %arg2[%c0_15, %c0_16, %c0_17, %c0_18] : memref<3x5x128x128xbf16, #tpu.memory_space<vmem>>, vector<1x1x128x128xbf16>
    %13 = vector.shape_cast %12 : vector<1x1x128x128xbf16> to vector<128x128xbf16>
    %cst_19 = arith.constant dense<0.000000e+00> : vector<32x128xf32>
    %14 = tpu.matmul %11, %13, %cst_19 {dimension_numbers = #tpu.dot_dimension_numbers<[1], [0], [0], [1], [0, 0, 1, 1], [], []>} : vector<32x128xbf16>, vector<128x128xbf16>, vector<32x128xf32> -> vector<32x128xf32>
    %c0_20 = arith.constant 0 : index
    %c1 = arith.constant 1 : index
    %c0_21 = arith.constant 0 : index
    %15 = vector.load %arg10[%c0_20, %c1, %c0_21] : memref<2x20x128xbf16, #tpu.memory_space<vmem>>, vector<2x16x128xbf16>
    %16 = vector.shape_cast %15 : vector<2x16x128xbf16> to vector<32x128xbf16>
    %c0_22 = arith.constant 0 : index
    %c1_23 = arith.constant 1 : index
    %c0_24 = arith.constant 0 : index
    %c0_25 = arith.constant 0 : index
    %17 = vector.load %arg2[%c0_22, %c1_23, %c0_24, %c0_25] : memref<3x5x128x128xbf16, #tpu.memory_space<vmem>>, vector<1x1x128x128xbf16>
    %18 = vector.shape_cast %17 : vector<1x1x128x128xbf16> to vector<128x128xbf16>
    %cst_26 = arith.constant dense<0.000000e+00> : vector<32x128xf32>
    %19 = tpu.matmul %16, %18, %cst_26 {dimension_numbers = #tpu.dot_dimension_numbers<[1], [0], [0], [1], [0, 0, 1, 1], [], []>} : vector<32x128xbf16>, vector<128x128xbf16>, vector<32x128xf32> -> vector<32x128xf32>
    %20 = arith.addf %14, %19 : vector<32x128xf32>
    %c0_27 = arith.constant 0 : index
    %c2_28 = arith.constant 2 : index
    %c0_29 = arith.constant 0 : index
    %21 = vector.load %arg10[%c0_27, %c2_28, %c0_29] : memref<2x20x128xbf16, #tpu.memory_space<vmem>>, vector<2x16x128xbf16>
    %22 = vector.shape_cast %21 : vector<2x16x128xbf16> to vector<32x128xbf16>
    %c0_30 = arith.constant 0 : index
    %c2_31 = arith.constant 2 : index
    %c0_32 = arith.constant 0 : index
    %c0_33 = arith.constant 0 : index
    %23 = vector.load %arg2[%c0_30, %c2_31, %c0_32, %c0_33] : memref<3x5x128x128xbf16, #tpu.memory_space<vmem>>, vector<1x1x128x128xbf16>
    %24 = vector.shape_cast %23 : vector<1x1x128x128xbf16> to vector<128x128xbf16>
    %cst_34 = arith.constant dense<0.000000e+00> : vector<32x128xf32>
    %25 = tpu.matmul %22, %24, %cst_34 {dimension_numbers = #tpu.dot_dimension_numbers<[1], [0], [0], [1], [0, 0, 1, 1], [], []>} : vector<32x128xbf16>, vector<128x128xbf16>, vector<32x128xf32> -> vector<32x128xf32>
    %26 = arith.addf %20, %25 : vector<32x128xf32>
    %c0_35 = arith.constant 0 : index
    %c3 = arith.constant 3 : index
    %c0_36 = arith.constant 0 : index
    %27 = vector.load %arg10[%c0_35, %c3, %c0_36] : memref<2x20x128xbf16, #tpu.memory_space<vmem>>, vector<2x16x128xbf16>
    %28 = vector.shape_cast %27 : vector<2x16x128xbf16> to vector<32x128xbf16>
    %c0_37 = arith.constant 0 : index
    %c3_38 = arith.constant 3 : index
    %c0_39 = arith.constant 0 : index
    %c0_40 = arith.constant 0 : index
    %29 = vector.load %arg2[%c0_37, %c3_38, %c0_39, %c0_40] : memref<3x5x128x128xbf16, #tpu.memory_space<vmem>>, vector<1x1x128x128xbf16>
    %30 = vector.shape_cast %29 : vector<1x1x128x128xbf16> to vector<128x128xbf16>
    %cst_41 = arith.constant dense<0.000000e+00> : vector<32x128xf32>
    %31 = tpu.matmul %28, %30, %cst_41 {dimension_numbers = #tpu.dot_dimension_numbers<[1], [0], [0], [1], [0, 0, 1, 1], [], []>} : vector<32x128xbf16>, vector<128x128xbf16>, vector<32x128xf32> -> vector<32x128xf32>
    %32 = arith.addf %26, %31 : vector<32x128xf32>
    %c0_42 = arith.constant 0 : index
    %c4 = arith.constant 4 : index
    %c0_43 = arith.constant 0 : index
    %33 = vector.load %arg10[%c0_42, %c4, %c0_43] : memref<2x20x128xbf16, #tpu.memory_space<vmem>>, vector<2x16x128xbf16>
    %34 = vector.shape_cast %33 : vector<2x16x128xbf16> to vector<32x128xbf16>
    %c0_44 = arith.constant 0 : index
    %c4_45 = arith.constant 4 : index
    %c0_46 = arith.constant 0 : index
    %c0_47 = arith.constant 0 : index
    %35 = vector.load %arg2[%c0_44, %c4_45, %c0_46, %c0_47] : memref<3x5x128x128xbf16, #tpu.memory_space<vmem>>, vector<1x1x128x128xbf16>
    %36 = vector.shape_cast %35 : vector<1x1x128x128xbf16> to vector<128x128xbf16>
    %cst_48 = arith.constant dense<0.000000e+00> : vector<32x128xf32>
    %37 = tpu.matmul %34, %36, %cst_48 {dimension_numbers = #tpu.dot_dimension_numbers<[1], [0], [0], [1], [0, 0, 1, 1], [], []>} : vector<32x128xbf16>, vector<128x128xbf16>, vector<32x128xf32> -> vector<32x128xf32>
    %38 = arith.addf %32, %37 : vector<32x128xf32>
    %39 = vector.broadcast %9 : vector<1x128xf32> to vector<32x128xf32>
    %40 = arith.addf %38, %39 : vector<32x128xf32>
    %cst_49 = arith.constant 0.000000e+00 : f32
    %41 = vector.broadcast %cst_49 : f32 to vector<32x128xf32>
    %42 = arith.maximumf %40, %41 : vector<32x128xf32>
    %43 = vector.shape_cast %42 : vector<32x128xf32> to vector<2x16x128xf32>
    %44 = arith.truncf %43 : vector<2x16x128xf32> to vector<2x16x128xbf16>
    %c0_50 = arith.constant 0 : index
    %c2_51 = arith.constant 2 : index
    %c0_52 = arith.constant 0 : index
    %45 = vector.load %arg10[%c0_50, %c2_51, %c0_52] : memref<2x20x128xbf16, #tpu.memory_space<vmem>>, vector<2x16x128xbf16>
    tpu.vector_store %arg10[%c0_50, %c2_51, %c0_52], %44 {strides = array<i32>} : memref<2x20x128xbf16, #tpu.memory_space<vmem>>, vector<2x16x128xbf16>,
    %c0_53 = arith.constant 0 : index
    %c0_54 = arith.constant 0 : index
    %c0_55 = arith.constant 0 : index
    %46 = vector.load %arg5[%c0_53, %c0_54, %c0_55] : memref<3x1x128xf32, #tpu.memory_space<vmem>>, vector<1x1x128xf32>
    %47 = vector.shape_cast %46 : vector<1x1x128xf32> to vector<1x128xf32>
    %c0_56 = arith.constant 0 : index
    %c0_57 = arith.constant 0 : index
    %c0_58 = arith.constant 0 : index
    %48 = vector.load %arg10[%c0_56, %c0_57, %c0_58] : memref<2x20x128xbf16, #tpu.memory_space<vmem>>, vector<2x16x128xbf16>
    %49 = vector.shape_cast %48 : vector<2x16x128xbf16> to vector<32x128xbf16>
    %c0_59 = arith.constant 0 : index
    %c0_60 = arith.constant 0 : index
    %c0_61 = arith.constant 0 : index
    %c0_62 = arith.constant 0 : index
    %50 = vector.load %arg4[%c0_59, %c0_60, %c0_61, %c0_62] : memref<3x5x128x128xbf16, #tpu.memory_space<vmem>>, vector<1x1x128x128xbf16>
    %51 = vector.shape_cast %50 : vector<1x1x128x128xbf16> to vector<128x128xbf16>
    %cst_63 = arith.constant dense<0.000000e+00> : vector<32x128xf32>
    %52 = tpu.matmul %49, %51, %cst_63 {dimension_numbers = #tpu.dot_dimension_numbers<[1], [0], [0], [1], [0, 0, 1, 1], [], []>} : vector<32x128xbf16>, vector<128x128xbf16>, vector<32x128xf32> -> vector<32x128xf32>
    %c0_64 = arith.constant 0 : index
    %c1_65 = arith.constant 1 : index
    %c0_66 = arith.constant 0 : index
    %53 = vector.load %arg10[%c0_64, %c1_65, %c0_66] : memref<2x20x128xbf16, #tpu.memory_space<vmem>>, vector<2x16x128xbf16>
    %54 = vector.shape_cast %53 : vector<2x16x128xbf16> to vector<32x128xbf16>
    %c0_67 = arith.constant 0 : index
    %c1_68 = arith.constant 1 : index
    %c0_69 = arith.constant 0 : index
    %c0_70 = arith.constant 0 : index
    %55 = vector.load %arg4[%c0_67, %c1_68, %c0_69, %c0_70] : memref<3x5x128x128xbf16, #tpu.memory_space<vmem>>, vector<1x1x128x128xbf16>
    %56 = vector.shape_cast %55 : vector<1x1x128x128xbf16> to vector<128x128xbf16>
    %cst_71 = arith.constant dense<0.000000e+00> : vector<32x128xf32>
    %57 = tpu.matmul %54, %56, %cst_71 {dimension_numbers = #tpu.dot_dimension_numbers<[1], [0], [0], [1], [0, 0, 1, 1], [], []>} : vector<32x128xbf16>, vector<128x128xbf16>, vector<32x128xf32> -> vector<32x128xf32>
    %58 = arith.addf %52, %57 : vector<32x128xf32>
    %c0_72 = arith.constant 0 : index
    %c2_73 = arith.constant 2 : index
    %c0_74 = arith.constant 0 : index
    %59 = vector.load %arg10[%c0_72, %c2_73, %c0_74] : memref<2x20x128xbf16, #tpu.memory_space<vmem>>, vector<2x16x128xbf16>
    %60 = vector.shape_cast %59 : vector<2x16x128xbf16> to vector<32x128xbf16>
    %c0_75 = arith.constant 0 : index
    %c2_76 = arith.constant 2 : index
    %c0_77 = arith.constant 0 : index
    %c0_78 = arith.constant 0 : index
    %61 = vector.load %arg4[%c0_75, %c2_76, %c0_77, %c0_78] : memref<3x5x128x128xbf16, #tpu.memory_space<vmem>>, vector<1x1x128x128xbf16>
    %62 = vector.shape_cast %61 : vector<1x1x128x128xbf16> to vector<128x128xbf16>
    %cst_79 = arith.constant dense<0.000000e+00> : vector<32x128xf32>
    %63 = tpu.matmul %60, %62, %cst_79 {dimension_numbers = #tpu.dot_dimension_numbers<[1], [0], [0], [1], [0, 0, 1, 1], [], []>} : vector<32x128xbf16>, vector<128x128xbf16>, vector<32x128xf32> -> vector<32x128xf32>
    %64 = arith.addf %58, %63 : vector<32x128xf32>
    %c0_80 = arith.constant 0 : index
    %c3_81 = arith.constant 3 : index
    %c0_82 = arith.constant 0 : index
    %65 = vector.load %arg10[%c0_80, %c3_81, %c0_82] : memref<2x20x128xbf16, #tpu.memory_space<vmem>>, vector<2x16x128xbf16>
    %66 = vector.shape_cast %65 : vector<2x16x128xbf16> to vector<32x128xbf16>
    %c0_83 = arith.constant 0 : index
    %c3_84 = arith.constant 3 : index
    %c0_85 = arith.constant 0 : index
    %c0_86 = arith.constant 0 : index
    %67 = vector.load %arg4[%c0_83, %c3_84, %c0_85, %c0_86] : memref<3x5x128x128xbf16, #tpu.memory_space<vmem>>, vector<1x1x128x128xbf16>
    %68 = vector.shape_cast %67 : vector<1x1x128x128xbf16> to vector<128x128xbf16>
    %cst_87 = arith.constant dense<0.000000e+00> : vector<32x128xf32>
    %69 = tpu.matmul %66, %68, %cst_87 {dimension_numbers = #tpu.dot_dimension_numbers<[1], [0], [0], [1], [0, 0, 1, 1], [], []>} : vector<32x128xbf16>, vector<128x128xbf16>, vector<32x128xf32> -> vector<32x128xf32>
    %70 = arith.addf %64, %69 : vector<32x128xf32>
    %c0_88 = arith.constant 0 : index
    %c4_89 = arith.constant 4 : index
    %c0_90 = arith.constant 0 : index
    %71 = vector.load %arg10[%c0_88, %c4_89, %c0_90] : memref<2x20x128xbf16, #tpu.memory_space<vmem>>, vector<2x16x128xbf16>
    %72 = vector.shape_cast %71 : vector<2x16x128xbf16> to vector<32x128xbf16>
    %c0_91 = arith.constant 0 : index
    %c4_92 = arith.constant 4 : index
    %c0_93 = arith.constant 0 : index
    %c0_94 = arith.constant 0 : index
    %73 = vector.load %arg4[%c0_91, %c4_92, %c0_93, %c0_94] : memref<3x5x128x128xbf16, #tpu.memory_space<vmem>>, vector<1x1x128x128xbf16>
    %74 = vector.shape_cast %73 : vector<1x1x128x128xbf16> to vector<128x128xbf16>
    %cst_95 = arith.constant dense<0.000000e+00> : vector<32x128xf32>
    %75 = tpu.matmul %72, %74, %cst_95 {dimension_numbers = #tpu.dot_dimension_numbers<[1], [0], [0], [1], [0, 0, 1, 1], [], []>} : vector<32x128xbf16>, vector<128x128xbf16>, vector<32x128xf32> -> vector<32x128xf32>
    %76 = arith.addf %70, %75 : vector<32x128xf32>
    %77 = vector.broadcast %47 : vector<1x128xf32> to vector<32x128xf32>
    %78 = arith.addf %76, %77 : vector<32x128xf32>
    %79 = arith.addf %4, %78 : vector<32x128xf32>
    %80 = vector.shape_cast %79 : vector<32x128xf32> to vector<2x16x128xf32>
    %81 = arith.truncf %80 : vector<2x16x128xf32> to vector<2x16x128xbf16>
    %c0_96 = arith.constant 0 : index
    %c2_97 = arith.constant 2 : index
    %c0_98 = arith.constant 0 : index
    %82 = vector.load %arg10[%c0_96, %c2_97, %c0_98] : memref<2x20x128xbf16, #tpu.memory_space<vmem>>, vector<2x16x128xbf16>
    tpu.vector_store %arg10[%c0_96, %c2_97, %c0_98], %81 {strides = array<i32>} : memref<2x20x128xbf16, #tpu.memory_space<vmem>>, vector<2x16x128xbf16>,
    %c1_99 = arith.constant 1 : index
    %c0_100 = arith.constant 0 : index
    %c0_101 = arith.constant 0 : index
    %83 = vector.load %arg3[%c1_99, %c0_100, %c0_101] : memref<3x1x128xf32, #tpu.memory_space<vmem>>, vector<1x1x128xf32>
    %84 = vector.shape_cast %83 : vector<1x1x128xf32> to vector<1x128xf32>
    %c0_102 = arith.constant 0 : index
    %c0_103 = arith.constant 0 : index
    %c0_104 = arith.constant 0 : index
    %85 = vector.load %arg10[%c0_102, %c0_103, %c0_104] : memref<2x20x128xbf16, #tpu.memory_space<vmem>>, vector<2x16x128xbf16>
    %86 = vector.shape_cast %85 : vector<2x16x128xbf16> to vector<32x128xbf16>
    %c1_105 = arith.constant 1 : index
    %c0_106 = arith.constant 0 : index
    %c0_107 = arith.constant 0 : index
    %c0_108 = arith.constant 0 : index
    %87 = vector.load %arg2[%c1_105, %c0_106, %c0_107, %c0_108] : memref<3x5x128x128xbf16, #tpu.memory_space<vmem>>, vector<1x1x128x128xbf16>
    %88 = vector.shape_cast %87 : vector<1x1x128x128xbf16> to vector<128x128xbf16>
    %cst_109 = arith.constant dense<0.000000e+00> : vector<32x128xf32>
    %89 = tpu.matmul %86, %88, %cst_109 {dimension_numbers = #tpu.dot_dimension_numbers<[1], [0], [0], [1], [0, 0, 1, 1], [], []>} : vector<32x128xbf16>, vector<128x128xbf16>, vector<32x128xf32> -> vector<32x128xf32>
    %c0_110 = arith.constant 0 : index
    %c1_111 = arith.constant 1 : index
    %c0_112 = arith.constant 0 : index
    %90 = vector.load %arg10[%c0_110, %c1_111, %c0_112] : memref<2x20x128xbf16, #tpu.memory_space<vmem>>, vector<2x16x128xbf16>
    %91 = vector.shape_cast %90 : vector<2x16x128xbf16> to vector<32x128xbf16>
    %c1_113 = arith.constant 1 : index
    %c1_114 = arith.constant 1 : index
    %c0_115 = arith.constant 0 : index
    %c0_116 = arith.constant 0 : index
    %92 = vector.load %arg2[%c1_113, %c1_114, %c0_115, %c0_116] : memref<3x5x128x128xbf16, #tpu.memory_space<vmem>>, vector<1x1x128x128xbf16>
    %93 = vector.shape_cast %92 : vector<1x1x128x128xbf16> to vector<128x128xbf16>
    %cst_117 = arith.constant dense<0.000000e+00> : vector<32x128xf32>
    %94 = tpu.matmul %91, %93, %cst_117 {dimension_numbers = #tpu.dot_dimension_numbers<[1], [0], [0], [1], [0, 0, 1, 1], [], []>} : vector<32x128xbf16>, vector<128x128xbf16>, vector<32x128xf32> -> vector<32x128xf32>
    %95 = arith.addf %89, %94 : vector<32x128xf32>
    %c0_118 = arith.constant 0 : index
    %c2_119 = arith.constant 2 : index
    %c0_120 = arith.constant 0 : index
    %96 = vector.load %arg10[%c0_118, %c2_119, %c0_120] : memref<2x20x128xbf16, #tpu.memory_space<vmem>>, vector<2x16x128xbf16>
    %97 = vector.shape_cast %96 : vector<2x16x128xbf16> to vector<32x128xbf16>
    %c1_121 = arith.constant 1 : index
    %c2_122 = arith.constant 2 : index
    %c0_123 = arith.constant 0 : index
    %c0_124 = arith.constant 0 : index
    %98 = vector.load %arg2[%c1_121, %c2_122, %c0_123, %c0_124] : memref<3x5x128x128xbf16, #tpu.memory_space<vmem>>, vector<1x1x128x128xbf16>
    %99 = vector.shape_cast %98 : vector<1x1x128x128xbf16> to vector<128x128xbf16>
    %cst_125 = arith.constant dense<0.000000e+00> : vector<32x128xf32>
    %100 = tpu.matmul %97, %99, %cst_125 {dimension_numbers = #tpu.dot_dimension_numbers<[1], [0], [0], [1], [0, 0, 1, 1], [], []>} : vector<32x128xbf16>, vector<128x128xbf16>, vector<32x128xf32> -> vector<32x128xf32>
    %101 = arith.addf %95, %100 : vector<32x128xf32>
    %c0_126 = arith.constant 0 : index
    %c3_127 = arith.constant 3 : index
    %c0_128 = arith.constant 0 : index
    %102 = vector.load %arg10[%c0_126, %c3_127, %c0_128] : memref<2x20x128xbf16, #tpu.memory_space<vmem>>, vector<2x16x128xbf16>
    %103 = vector.shape_cast %102 : vector<2x16x128xbf16> to vector<32x128xbf16>
    %c1_129 = arith.constant 1 : index
    %c3_130 = arith.constant 3 : index
    %c0_131 = arith.constant 0 : index
    %c0_132 = arith.constant 0 : index
    %104 = vector.load %arg2[%c1_129, %c3_130, %c0_131, %c0_132] : memref<3x5x128x128xbf16, #tpu.memory_space<vmem>>, vector<1x1x128x128xbf16>
    %105 = vector.shape_cast %104 : vector<1x1x128x128xbf16> to vector<128x128xbf16>
    %cst_133 = arith.constant dense<0.000000e+00> : vector<32x128xf32>
    %106 = tpu.matmul %103, %105, %cst_133 {dimension_numbers = #tpu.dot_dimension_numbers<[1], [0], [0], [1], [0, 0, 1, 1], [], []>} : vector<32x128xbf16>, vector<128x128xbf16>, vector<32x128xf32> -> vector<32x128xf32>
    %107 = arith.addf %101, %106 : vector<32x128xf32>
    %c0_134 = arith.constant 0 : index
    %c4_135 = arith.constant 4 : index
    %c0_136 = arith.constant 0 : index
    %108 = vector.load %arg10[%c0_134, %c4_135, %c0_136] : memref<2x20x128xbf16, #tpu.memory_space<vmem>>, vector<2x16x128xbf16>
    %109 = vector.shape_cast %108 : vector<2x16x128xbf16> to vector<32x128xbf16>
    %c1_137 = arith.constant 1 : index
    %c4_138 = arith.constant 4 : index
    %c0_139 = arith.constant 0 : index
    %c0_140 = arith.constant 0 : index
    %110 = vector.load %arg2[%c1_137, %c4_138, %c0_139, %c0_140] : memref<3x5x128x128xbf16, #tpu.memory_space<vmem>>, vector<1x1x128x128xbf16>
    %111 = vector.shape_cast %110 : vector<1x1x128x128xbf16> to vector<128x128xbf16>
    %cst_141 = arith.constant dense<0.000000e+00> : vector<32x128xf32>
    %112 = tpu.matmul %109, %111, %cst_141 {dimension_numbers = #tpu.dot_dimension_numbers<[1], [0], [0], [1], [0, 0, 1, 1], [], []>} : vector<32x128xbf16>, vector<128x128xbf16>, vector<32x128xf32> -> vector<32x128xf32>
    %113 = arith.addf %107, %112 : vector<32x128xf32>
    %114 = vector.broadcast %84 : vector<1x128xf32> to vector<32x128xf32>
    %115 = arith.addf %113, %114 : vector<32x128xf32>
    %cst_142 = arith.constant 0.000000e+00 : f32
    %116 = vector.broadcast %cst_142 : f32 to vector<32x128xf32>
    %117 = arith.maximumf %115, %116 : vector<32x128xf32>
    %118 = vector.shape_cast %117 : vector<32x128xf32> to vector<2x16x128xf32>
    %119 = arith.truncf %118 : vector<2x16x128xf32> to vector<2x16x128xbf16>
    %c0_143 = arith.constant 0 : index
    %c2_144 = arith.constant 2 : index
    %c0_145 = arith.constant 0 : index
    %120 = vector.load %arg10[%c0_143, %c2_144, %c0_145] : memref<2x20x128xbf16, #tpu.memory_space<vmem>>, vector<2x16x128xbf16>
    tpu.vector_store %arg10[%c0_143, %c2_144, %c0_145], %119 {strides = array<i32>} : memref<2x20x128xbf16, #tpu.memory_space<vmem>>, vector<2x16x128xbf16>,
    %c1_146 = arith.constant 1 : index
    %c0_147 = arith.constant 0 : index
    %c0_148 = arith.constant 0 : index
    %121 = vector.load %arg5[%c1_146, %c0_147, %c0_148] : memref<3x1x128xf32, #tpu.memory_space<vmem>>, vector<1x1x128xf32>
    %122 = vector.shape_cast %121 : vector<1x1x128xf32> to vector<1x128xf32>
    %c0_149 = arith.constant 0 : index
    %c0_150 = arith.constant 0 : index
    %c0_151 = arith.constant 0 : index
    %123 = vector.load %arg10[%c0_149, %c0_150, %c0_151] : memref<2x20x128xbf16, #tpu.memory_space<vmem>>, vector<2x16x128xbf16>
    %124 = vector.shape_cast %123 : vector<2x16x128xbf16> to vector<32x128xbf16>
    %c1_152 = arith.constant 1 : index
    %c0_153 = arith.constant 0 : index
    %c0_154 = arith.constant 0 : index
    %c0_155 = arith.constant 0 : index
    %125 = vector.load %arg4[%c1_152, %c0_153, %c0_154, %c0_155] : memref<3x5x128x128xbf16, #tpu.memory_space<vmem>>, vector<1x1x128x128xbf16>
    %126 = vector.shape_cast %125 : vector<1x1x128x128xbf16> to vector<128x128xbf16>
    %cst_156 = arith.constant dense<0.000000e+00> : vector<32x128xf32>
    %127 = tpu.matmul %124, %126, %cst_156 {dimension_numbers = #tpu.dot_dimension_numbers<[1], [0], [0], [1], [0, 0, 1, 1], [], []>} : vector<32x128xbf16>, vector<128x128xbf16>, vector<32x128xf32> -> vector<32x128xf32>
    %c0_157 = arith.constant 0 : index
    %c1_158 = arith.constant 1 : index
    %c0_159 = arith.constant 0 : index
    %128 = vector.load %arg10[%c0_157, %c1_158, %c0_159] : memref<2x20x128xbf16, #tpu.memory_space<vmem>>, vector<2x16x128xbf16>
    %129 = vector.shape_cast %128 : vector<2x16x128xbf16> to vector<32x128xbf16>
    %c1_160 = arith.constant 1 : index
    %c1_161 = arith.constant 1 : index
    %c0_162 = arith.constant 0 : index
    %c0_163 = arith.constant 0 : index
    %130 = vector.load %arg4[%c1_160, %c1_161, %c0_162, %c0_163] : memref<3x5x128x128xbf16, #tpu.memory_space<vmem>>, vector<1x1x128x128xbf16>
    %131 = vector.shape_cast %130 : vector<1x1x128x128xbf16> to vector<128x128xbf16>
    %cst_164 = arith.constant dense<0.000000e+00> : vector<32x128xf32>
    %132 = tpu.matmul %129, %131, %cst_164 {dimension_numbers = #tpu.dot_dimension_numbers<[1], [0], [0], [1], [0, 0, 1, 1], [], []>} : vector<32x128xbf16>, vector<128x128xbf16>, vector<32x128xf32> -> vector<32x128xf32>
    %133 = arith.addf %127, %132 : vector<32x128xf32>
    %c0_165 = arith.constant 0 : index
    %c2_166 = arith.constant 2 : index
    %c0_167 = arith.constant 0 : index
    %134 = vector.load %arg10[%c0_165, %c2_166, %c0_167] : memref<2x20x128xbf16, #tpu.memory_space<vmem>>, vector<2x16x128xbf16>
    %135 = vector.shape_cast %134 : vector<2x16x128xbf16> to vector<32x128xbf16>
    %c1_168 = arith.constant 1 : index
    %c2_169 = arith.constant 2 : index
    %c0_170 = arith.constant 0 : index
    %c0_171 = arith.constant 0 : index
    %136 = vector.load %arg4[%c1_168, %c2_169, %c0_170, %c0_171] : memref<3x5x128x128xbf16, #tpu.memory_space<vmem>>, vector<1x1x128x128xbf16>
    %137 = vector.shape_cast %136 : vector<1x1x128x128xbf16> to vector<128x128xbf16>
    %cst_172 = arith.constant dense<0.000000e+00> : vector<32x128xf32>
    %138 = tpu.matmul %135, %137, %cst_172 {dimension_numbers = #tpu.dot_dimension_numbers<[1], [0], [0], [1], [0, 0, 1, 1], [], []>} : vector<32x128xbf16>, vector<128x128xbf16>, vector<32x128xf32> -> vector<32x128xf32>
    %139 = arith.addf %133, %138 : vector<32x128xf32>
    %c0_173 = arith.constant 0 : index
    %c3_174 = arith.constant 3 : index
    %c0_175 = arith.constant 0 : index
    %140 = vector.load %arg10[%c0_173, %c3_174, %c0_175] : memref<2x20x128xbf16, #tpu.memory_space<vmem>>, vector<2x16x128xbf16>
    %141 = vector.shape_cast %140 : vector<2x16x128xbf16> to vector<32x128xbf16>
    %c1_176 = arith.constant 1 : index
    %c3_177 = arith.constant 3 : index
    %c0_178 = arith.constant 0 : index
    %c0_179 = arith.constant 0 : index
    %142 = vector.load %arg4[%c1_176, %c3_177, %c0_178, %c0_179] : memref<3x5x128x128xbf16, #tpu.memory_space<vmem>>, vector<1x1x128x128xbf16>
    %143 = vector.shape_cast %142 : vector<1x1x128x128xbf16> to vector<128x128xbf16>
    %cst_180 = arith.constant dense<0.000000e+00> : vector<32x128xf32>
    %144 = tpu.matmul %141, %143, %cst_180 {dimension_numbers = #tpu.dot_dimension_numbers<[1], [0], [0], [1], [0, 0, 1, 1], [], []>} : vector<32x128xbf16>, vector<128x128xbf16>, vector<32x128xf32> -> vector<32x128xf32>
    %145 = arith.addf %139, %144 : vector<32x128xf32>
    %c0_181 = arith.constant 0 : index
    %c4_182 = arith.constant 4 : index
    %c0_183 = arith.constant 0 : index
    %146 = vector.load %arg10[%c0_181, %c4_182, %c0_183] : memref<2x20x128xbf16, #tpu.memory_space<vmem>>, vector<2x16x128xbf16>
    %147 = vector.shape_cast %146 : vector<2x16x128xbf16> to vector<32x128xbf16>
    %c1_184 = arith.constant 1 : index
    %c4_185 = arith.constant 4 : index
    %c0_186 = arith.constant 0 : index
    %c0_187 = arith.constant 0 : index
    %148 = vector.load %arg4[%c1_184, %c4_185, %c0_186, %c0_187] : memref<3x5x128x128xbf16, #tpu.memory_space<vmem>>, vector<1x1x128x128xbf16>
    %149 = vector.shape_cast %148 : vector<1x1x128x128xbf16> to vector<128x128xbf16>
    %cst_188 = arith.constant dense<0.000000e+00> : vector<32x128xf32>
    %150 = tpu.matmul %147, %149, %cst_188 {dimension_numbers = #tpu.dot_dimension_numbers<[1], [0], [0], [1], [0, 0, 1, 1], [], []>} : vector<32x128xbf16>, vector<128x128xbf16>, vector<32x128xf32> -> vector<32x128xf32>
    %151 = arith.addf %145, %150 : vector<32x128xf32>
    %152 = vector.broadcast %122 : vector<1x128xf32> to vector<32x128xf32>
    %153 = arith.addf %151, %152 : vector<32x128xf32>
    %154 = arith.addf %79, %153 : vector<32x128xf32>
    %155 = vector.shape_cast %154 : vector<32x128xf32> to vector<2x16x128xf32>
    %156 = arith.truncf %155 : vector<2x16x128xf32> to vector<2x16x128xbf16>
    %c0_189 = arith.constant 0 : index
    %c2_190 = arith.constant 2 : index
    %c0_191 = arith.constant 0 : index
    %157 = vector.load %arg10[%c0_189, %c2_190, %c0_191] : memref<2x20x128xbf16, #tpu.memory_space<vmem>>, vector<2x16x128xbf16>
    tpu.vector_store %arg10[%c0_189, %c2_190, %c0_191], %156 {strides = array<i32>} : memref<2x20x128xbf16, #tpu.memory_space<vmem>>, vector<2x16x128xbf16>,
    %c2_192 = arith.constant 2 : index
    %c0_193 = arith.constant 0 : index
    %c0_194 = arith.constant 0 : index
    %158 = vector.load %arg3[%c2_192, %c0_193, %c0_194] : memref<3x1x128xf32, #tpu.memory_space<vmem>>, vector<1x1x128xf32>
    %159 = vector.shape_cast %158 : vector<1x1x128xf32> to vector<1x128xf32>
    %c0_195 = arith.constant 0 : index
    %c0_196 = arith.constant 0 : index
    %c0_197 = arith.constant 0 : index
    %160 = vector.load %arg10[%c0_195, %c0_196, %c0_197] : memref<2x20x128xbf16, #tpu.memory_space<vmem>>, vector<2x16x128xbf16>
    %161 = vector.shape_cast %160 : vector<2x16x128xbf16> to vector<32x128xbf16>
    %c2_198 = arith.constant 2 : index
    %c0_199 = arith.constant 0 : index
    %c0_200 = arith.constant 0 : index
    %c0_201 = arith.constant 0 : index
    %162 = vector.load %arg2[%c2_198, %c0_199, %c0_200, %c0_201] : memref<3x5x128x128xbf16, #tpu.memory_space<vmem>>, vector<1x1x128x128xbf16>
    %163 = vector.shape_cast %162 : vector<1x1x128x128xbf16> to vector<128x128xbf16>
    %cst_202 = arith.constant dense<0.000000e+00> : vector<32x128xf32>
    %164 = tpu.matmul %161, %163, %cst_202 {dimension_numbers = #tpu.dot_dimension_numbers<[1], [0], [0], [1], [0, 0, 1, 1], [], []>} : vector<32x128xbf16>, vector<128x128xbf16>, vector<32x128xf32> -> vector<32x128xf32>
    %c0_203 = arith.constant 0 : index
    %c1_204 = arith.constant 1 : index
    %c0_205 = arith.constant 0 : index
    %165 = vector.load %arg10[%c0_203, %c1_204, %c0_205] : memref<2x20x128xbf16, #tpu.memory_space<vmem>>, vector<2x16x128xbf16>
    %166 = vector.shape_cast %165 : vector<2x16x128xbf16> to vector<32x128xbf16>
    %c2_206 = arith.constant 2 : index
    %c1_207 = arith.constant 1 : index
    %c0_208 = arith.constant 0 : index
    %c0_209 = arith.constant 0 : index
    %167 = vector.load %arg2[%c2_206, %c1_207, %c0_208, %c0_209] : memref<3x5x128x128xbf16, #tpu.memory_space<vmem>>, vector<1x1x128x128xbf16>
    %168 = vector.shape_cast %167 : vector<1x1x128x128xbf16> to vector<128x128xbf16>
    %cst_210 = arith.constant dense<0.000000e+00> : vector<32x128xf32>
    %169 = tpu.matmul %166, %168, %cst_210 {dimension_numbers = #tpu.dot_dimension_numbers<[1], [0], [0], [1], [0, 0, 1, 1], [], []>} : vector<32x128xbf16>, vector<128x128xbf16>, vector<32x128xf32> -> vector<32x128xf32>
    %170 = arith.addf %164, %169 : vector<32x128xf32>
    %c0_211 = arith.constant 0 : index
    %c2_212 = arith.constant 2 : index
    %c0_213 = arith.constant 0 : index
    %171 = vector.load %arg10[%c0_211, %c2_212, %c0_213] : memref<2x20x128xbf16, #tpu.memory_space<vmem>>, vector<2x16x128xbf16>
    %172 = vector.shape_cast %171 : vector<2x16x128xbf16> to vector<32x128xbf16>
    %c2_214 = arith.constant 2 : index
    %c2_215 = arith.constant 2 : index
    %c0_216 = arith.constant 0 : index
    %c0_217 = arith.constant 0 : index
    %173 = vector.load %arg2[%c2_214, %c2_215, %c0_216, %c0_217] : memref<3x5x128x128xbf16, #tpu.memory_space<vmem>>, vector<1x1x128x128xbf16>
    %174 = vector.shape_cast %173 : vector<1x1x128x128xbf16> to vector<128x128xbf16>
    %cst_218 = arith.constant dense<0.000000e+00> : vector<32x128xf32>
    %175 = tpu.matmul %172, %174, %cst_218 {dimension_numbers = #tpu.dot_dimension_numbers<[1], [0], [0], [1], [0, 0, 1, 1], [], []>} : vector<32x128xbf16>, vector<128x128xbf16>, vector<32x128xf32> -> vector<32x128xf32>
    %176 = arith.addf %170, %175 : vector<32x128xf32>
    %c0_219 = arith.constant 0 : index
    %c3_220 = arith.constant 3 : index
    %c0_221 = arith.constant 0 : index
    %177 = vector.load %arg10[%c0_219, %c3_220, %c0_221] : memref<2x20x128xbf16, #tpu.memory_space<vmem>>, vector<2x16x128xbf16>
    %178 = vector.shape_cast %177 : vector<2x16x128xbf16> to vector<32x128xbf16>
    %c2_222 = arith.constant 2 : index
    %c3_223 = arith.constant 3 : index
    %c0_224 = arith.constant 0 : index
    %c0_225 = arith.constant 0 : index
    %179 = vector.load %arg2[%c2_222, %c3_223, %c0_224, %c0_225] : memref<3x5x128x128xbf16, #tpu.memory_space<vmem>>, vector<1x1x128x128xbf16>
    %180 = vector.shape_cast %179 : vector<1x1x128x128xbf16> to vector<128x128xbf16>
    %cst_226 = arith.constant dense<0.000000e+00> : vector<32x128xf32>
    %181 = tpu.matmul %178, %180, %cst_226 {dimension_numbers = #tpu.dot_dimension_numbers<[1], [0], [0], [1], [0, 0, 1, 1], [], []>} : vector<32x128xbf16>, vector<128x128xbf16>, vector<32x128xf32> -> vector<32x128xf32>
    %182 = arith.addf %176, %181 : vector<32x128xf32>
    %c0_227 = arith.constant 0 : index
    %c4_228 = arith.constant 4 : index
    %c0_229 = arith.constant 0 : index
    %183 = vector.load %arg10[%c0_227, %c4_228, %c0_229] : memref<2x20x128xbf16, #tpu.memory_space<vmem>>, vector<2x16x128xbf16>
    %184 = vector.shape_cast %183 : vector<2x16x128xbf16> to vector<32x128xbf16>
    %c2_230 = arith.constant 2 : index
    %c4_231 = arith.constant 4 : index
    %c0_232 = arith.constant 0 : index
    %c0_233 = arith.constant 0 : index
    %185 = vector.load %arg2[%c2_230, %c4_231, %c0_232, %c0_233] : memref<3x5x128x128xbf16, #tpu.memory_space<vmem>>, vector<1x1x128x128xbf16>
    %186 = vector.shape_cast %185 : vector<1x1x128x128xbf16> to vector<128x128xbf16>
    %cst_234 = arith.constant dense<0.000000e+00> : vector<32x128xf32>
    %187 = tpu.matmul %184, %186, %cst_234 {dimension_numbers = #tpu.dot_dimension_numbers<[1], [0], [0], [1], [0, 0, 1, 1], [], []>} : vector<32x128xbf16>, vector<128x128xbf16>, vector<32x128xf32> -> vector<32x128xf32>
    %188 = arith.addf %182, %187 : vector<32x128xf32>
    %189 = vector.broadcast %159 : vector<1x128xf32> to vector<32x128xf32>
    %190 = arith.addf %188, %189 : vector<32x128xf32>
    %cst_235 = arith.constant 0.000000e+00 : f32
    %191 = vector.broadcast %cst_235 : f32 to vector<32x128xf32>
    %192 = arith.maximumf %190, %191 : vector<32x128xf32>
    %193 = vector.shape_cast %192 : vector<32x128xf32> to vector<2x16x128xf32>
    %194 = arith.truncf %193 : vector<2x16x128xf32> to vector<2x16x128xbf16>
    %c0_236 = arith.constant 0 : index
    %c2_237 = arith.constant 2 : index
    %c0_238 = arith.constant 0 : index
    %195 = vector.load %arg10[%c0_236, %c2_237, %c0_238] : memref<2x20x128xbf16, #tpu.memory_space<vmem>>, vector<2x16x128xbf16>
    tpu.vector_store %arg10[%c0_236, %c2_237, %c0_238], %194 {strides = array<i32>} : memref<2x20x128xbf16, #tpu.memory_space<vmem>>, vector<2x16x128xbf16>,
    %c2_239 = arith.constant 2 : index
    %c0_240 = arith.constant 0 : index
    %c0_241 = arith.constant 0 : index
    %196 = vector.load %arg5[%c2_239, %c0_240, %c0_241] : memref<3x1x128xf32, #tpu.memory_space<vmem>>, vector<1x1x128xf32>
    %197 = vector.shape_cast %196 : vector<1x1x128xf32> to vector<1x128xf32>
    %c0_242 = arith.constant 0 : index
    %c0_243 = arith.constant 0 : index
    %c0_244 = arith.constant 0 : index
    %198 = vector.load %arg10[%c0_242, %c0_243, %c0_244] : memref<2x20x128xbf16, #tpu.memory_space<vmem>>, vector<2x16x128xbf16>
    %199 = vector.shape_cast %198 : vector<2x16x128xbf16> to vector<32x128xbf16>
    %c2_245 = arith.constant 2 : index
    %c0_246 = arith.constant 0 : index
    %c0_247 = arith.constant 0 : index
    %c0_248 = arith.constant 0 : index
    %200 = vector.load %arg4[%c2_245, %c0_246, %c0_247, %c0_248] : memref<3x5x128x128xbf16, #tpu.memory_space<vmem>>, vector<1x1x128x128xbf16>
    %201 = vector.shape_cast %200 : vector<1x1x128x128xbf16> to vector<128x128xbf16>
    %cst_249 = arith.constant dense<0.000000e+00> : vector<32x128xf32>
    %202 = tpu.matmul %199, %201, %cst_249 {dimension_numbers = #tpu.dot_dimension_numbers<[1], [0], [0], [1], [0, 0, 1, 1], [], []>} : vector<32x128xbf16>, vector<128x128xbf16>, vector<32x128xf32> -> vector<32x128xf32>
    %c0_250 = arith.constant 0 : index
    %c1_251 = arith.constant 1 : index
    %c0_252 = arith.constant 0 : index
    %203 = vector.load %arg10[%c0_250, %c1_251, %c0_252] : memref<2x20x128xbf16, #tpu.memory_space<vmem>>, vector<2x16x128xbf16>
    %204 = vector.shape_cast %203 : vector<2x16x128xbf16> to vector<32x128xbf16>
    %c2_253 = arith.constant 2 : index
    %c1_254 = arith.constant 1 : index
    %c0_255 = arith.constant 0 : index
    %c0_256 = arith.constant 0 : index
    %205 = vector.load %arg4[%c2_253, %c1_254, %c0_255, %c0_256] : memref<3x5x128x128xbf16, #tpu.memory_space<vmem>>, vector<1x1x128x128xbf16>
    %206 = vector.shape_cast %205 : vector<1x1x128x128xbf16> to vector<128x128xbf16>
    %cst_257 = arith.constant dense<0.000000e+00> : vector<32x128xf32>
    %207 = tpu.matmul %204, %206, %cst_257 {dimension_numbers = #tpu.dot_dimension_numbers<[1], [0], [0], [1], [0, 0, 1, 1], [], []>} : vector<32x128xbf16>, vector<128x128xbf16>, vector<32x128xf32> -> vector<32x128xf32>
    %208 = arith.addf %202, %207 : vector<32x128xf32>
    %c0_258 = arith.constant 0 : index
    %c2_259 = arith.constant 2 : index
    %c0_260 = arith.constant 0 : index
    %209 = vector.load %arg10[%c0_258, %c2_259, %c0_260] : memref<2x20x128xbf16, #tpu.memory_space<vmem>>, vector<2x16x128xbf16>
    %210 = vector.shape_cast %209 : vector<2x16x128xbf16> to vector<32x128xbf16>
    %c2_261 = arith.constant 2 : index
    %c2_262 = arith.constant 2 : index
    %c0_263 = arith.constant 0 : index
    %c0_264 = arith.constant 0 : index
    %211 = vector.load %arg4[%c2_261, %c2_262, %c0_263, %c0_264] : memref<3x5x128x128xbf16, #tpu.memory_space<vmem>>, vector<1x1x128x128xbf16>
    %212 = vector.shape_cast %211 : vector<1x1x128x128xbf16> to vector<128x128xbf16>
    %cst_265 = arith.constant dense<0.000000e+00> : vector<32x128xf32>
    %213 = tpu.matmul %210, %212, %cst_265 {dimension_numbers = #tpu.dot_dimension_numbers<[1], [0], [0], [1], [0, 0, 1, 1], [], []>} : vector<32x128xbf16>, vector<128x128xbf16>, vector<32x128xf32> -> vector<32x128xf32>
    %214 = arith.addf %208, %213 : vector<32x128xf32>
    %c0_266 = arith.constant 0 : index
    %c3_267 = arith.constant 3 : index
    %c0_268 = arith.constant 0 : index
    %215 = vector.load %arg10[%c0_266, %c3_267, %c0_268] : memref<2x20x128xbf16, #tpu.memory_space<vmem>>, vector<2x16x128xbf16>
    %216 = vector.shape_cast %215 : vector<2x16x128xbf16> to vector<32x128xbf16>
    %c2_269 = arith.constant 2 : index
    %c3_270 = arith.constant 3 : index
    %c0_271 = arith.constant 0 : index
    %c0_272 = arith.constant 0 : index
    %217 = vector.load %arg4[%c2_269, %c3_270, %c0_271, %c0_272] : memref<3x5x128x128xbf16, #tpu.memory_space<vmem>>, vector<1x1x128x128xbf16>
    %218 = vector.shape_cast %217 : vector<1x1x128x128xbf16> to vector<128x128xbf16>
    %cst_273 = arith.constant dense<0.000000e+00> : vector<32x128xf32>
    %219 = tpu.matmul %216, %218, %cst_273 {dimension_numbers = #tpu.dot_dimension_numbers<[1], [0], [0], [1], [0, 0, 1, 1], [], []>} : vector<32x128xbf16>, vector<128x128xbf16>, vector<32x128xf32> -> vector<32x128xf32>
    %220 = arith.addf %214, %219 : vector<32x128xf32>
    %c0_274 = arith.constant 0 : index
    %c4_275 = arith.constant 4 : index
    %c0_276 = arith.constant 0 : index
    %221 = vector.load %arg10[%c0_274, %c4_275, %c0_276] : memref<2x20x128xbf16, #tpu.memory_space<vmem>>, vector<2x16x128xbf16>
    %222 = vector.shape_cast %221 : vector<2x16x128xbf16> to vector<32x128xbf16>
    %c2_277 = arith.constant 2 : index
    %c4_278 = arith.constant 4 : index
    %c0_279 = arith.constant 0 : index
    %c0_280 = arith.constant 0 : index
    %223 = vector.load %arg4[%c2_277, %c4_278, %c0_279, %c0_280] : memref<3x5x128x128xbf16, #tpu.memory_space<vmem>>, vector<1x1x128x128xbf16>
    %224 = vector.shape_cast %223 : vector<1x1x128x128xbf16> to vector<128x128xbf16>
    %cst_281 = arith.constant dense<0.000000e+00> : vector<32x128xf32>
    %225 = tpu.matmul %222, %224, %cst_281 {dimension_numbers = #tpu.dot_dimension_numbers<[1], [0], [0], [1], [0, 0, 1, 1], [], []>} : vector<32x128xbf16>, vector<128x128xbf16>, vector<32x128xf32> -> vector<32x128xf32>
    %226 = arith.addf %220, %225 : vector<32x128xf32>
    %227 = vector.broadcast %197 : vector<1x128xf32> to vector<32x128xf32>
    %228 = arith.addf %226, %227 : vector<32x128xf32>
    %229 = arith.addf %154, %228 : vector<32x128xf32>
    %230 = vector.shape_cast %229 : vector<32x128xf32> to vector<2x16x128xf32>
    %231 = arith.truncf %230 : vector<2x16x128xf32> to vector<2x16x128xbf16>
    %c0_282 = arith.constant 0 : index
    %c2_283 = arith.constant 2 : index
    %c0_284 = arith.constant 0 : index
    %232 = vector.load %arg10[%c0_282, %c2_283, %c0_284] : memref<2x20x128xbf16, #tpu.memory_space<vmem>>, vector<2x16x128xbf16>
    tpu.vector_store %arg10[%c0_282, %c2_283, %c0_284], %231 {strides = array<i32>} : memref<2x20x128xbf16, #tpu.memory_space<vmem>>, vector<2x16x128xbf16>,
    %c0_285 = arith.constant 0 : index
    %c1_286 = arith.constant 1 : index
    %c0_287 = arith.constant 0 : index
    %233 = vector.load %arg10[%c0_285, %c1_286, %c0_287] : memref<2x20x128xbf16, #tpu.memory_space<vmem>>, vector<2x16x128xbf16>
    %234 = vector.shape_cast %233 : vector<2x16x128xbf16> to vector<32x128xbf16>
    %c0_288 = arith.constant 0 : index
    %c0_289 = arith.constant 0 : index
    %235 = vector.load %arg6[%c0_288, %c0_289] : memref<128x128xbf16, #tpu.memory_space<vmem>>, vector<128x128xbf16>
    %cst_290 = arith.constant dense<0.000000e+00> : vector<32x128xf32>
    %236 = tpu.matmul %234, %235, %cst_290 {dimension_numbers = #tpu.dot_dimension_numbers<[1], [0], [0], [1], [0, 0, 1, 1], [], []>} : vector<32x128xbf16>, vector<128x128xbf16>, vector<32x128xf32> -> vector<32x128xf32>
    %c0_291 = arith.constant 0 : index
    %c2_292 = arith.constant 2 : index
    %c0_293 = arith.constant 0 : index
    %237 = vector.load %arg10[%c0_291, %c2_292, %c0_293] : memref<2x20x128xbf16, #tpu.memory_space<vmem>>, vector<2x16x128xbf16>
    %238 = vector.shape_cast %237 : vector<2x16x128xbf16> to vector<32x128xbf16>
    %c0_294 = arith.constant 0 : index
    %c0_295 = arith.constant 0 : index
    %c0_296 = arith.constant 0 : index
    %239 = vector.load %arg7[%c0_294, %c0_295, %c0_296] : memref<2x128x256xbf16, #tpu.memory_space<vmem>>, vector<1x128x256xbf16>
    %240 = vector.shape_cast %239 : vector<1x128x256xbf16> to vector<128x256xbf16>
    %cst_297 = arith.constant dense<0.000000e+00> : vector<32x256xf32>
    %241 = tpu.matmul %238, %240, %cst_297 {dimension_numbers = #tpu.dot_dimension_numbers<[1], [0], [0], [1], [0, 0, 1, 1], [], []>} : vector<32x128xbf16>, vector<128x256xbf16>, vector<32x256xf32> -> vector<32x256xf32>
    %c0_298 = arith.constant 0 : index
    %c3_299 = arith.constant 3 : index
    %c0_300 = arith.constant 0 : index
    %242 = vector.load %arg10[%c0_298, %c3_299, %c0_300] : memref<2x20x128xbf16, #tpu.memory_space<vmem>>, vector<2x16x128xbf16>
    %243 = vector.shape_cast %242 : vector<2x16x128xbf16> to vector<32x128xbf16>
    %c1_301 = arith.constant 1 : index
    %c0_302 = arith.constant 0 : index
    %c0_303 = arith.constant 0 : index
    %244 = vector.load %arg7[%c1_301, %c0_302, %c0_303] : memref<2x128x256xbf16, #tpu.memory_space<vmem>>, vector<1x128x256xbf16>
    %245 = vector.shape_cast %244 : vector<1x128x256xbf16> to vector<128x256xbf16>
    %cst_304 = arith.constant dense<0.000000e+00> : vector<32x256xf32>
    %246 = tpu.matmul %243, %245, %cst_304 {dimension_numbers = #tpu.dot_dimension_numbers<[1], [0], [0], [1], [0, 0, 1, 1], [], []>} : vector<32x128xbf16>, vector<128x256xbf16>, vector<32x256xf32> -> vector<32x256xf32>
    %247 = vector.extract_strided_slice %241 {offsets = [0, 0], sizes = [32, 128], strides = [1, 1]} : vector<32x256xf32> to vector<32x128xf32>
    %248 = arith.addf %236, %247 : vector<32x128xf32>
    %249 = vector.extract_strided_slice %246 {offsets = [0, 0], sizes = [32, 128], strides = [1, 1]} : vector<32x256xf32> to vector<32x128xf32>
    %250 = arith.addf %248, %249 : vector<32x128xf32>
    %251 = vector.extract_strided_slice %241 {offsets = [0, 128], sizes = [32, 128], strides = [1, 1]} : vector<32x256xf32> to vector<32x128xf32>
    %252 = vector.extract_strided_slice %246 {offsets = [0, 128], sizes = [32, 128], strides = [1, 1]} : vector<32x256xf32> to vector<32x128xf32>
    %253 = arith.addf %251, %252 : vector<32x128xf32>
    %c0_305 = arith.constant 0 : index
    %c0_306 = arith.constant 0 : index
    %254 = vector.load %arg8[%c0_305, %c0_306] : memref<1x128xf32, #tpu.memory_space<vmem>>, vector<1x128xf32>
    %255 = vector.broadcast %254 : vector<1x128xf32> to vector<32x128xf32>
    %256 = arith.addf %250, %255 : vector<32x128xf32>
    %cst_307 = arith.constant 0.000000e+00 : f32
    %257 = vector.broadcast %cst_307 : f32 to vector<32x128xf32>
    %258 = arith.maximumf %256, %257 : vector<32x128xf32>
    %259 = vector.shape_cast %258 : vector<32x128xf32> to vector<2x16x128xf32>
    %c0_308 = arith.constant 0 : index
    %c0_309 = arith.constant 0 : index
    %c0_310 = arith.constant 0 : index
    %c0_311 = arith.constant 0 : index
    %260 = vector.load %arg9[%c0_308, %c0_309, %c0_310, %c0_311] : memref<2x2x16x128xf32, #tpu.memory_space<vmem>>, vector<1x2x16x128xf32>
    %261 = vector.shape_cast %260 : vector<1x2x16x128xf32> to vector<2x16x128xf32>
    %262 = vector.shape_cast %259 : vector<2x16x128xf32> to vector<1x2x16x128xf32>
    tpu.vector_store %arg9[%c0_308, %c0_309, %c0_310, %c0_311], %262 {strides = array<i32>} : memref<2x2x16x128xf32, #tpu.memory_space<vmem>>, vector<1x2x16x128xf32>,
    %263 = vector.broadcast %254 : vector<1x128xf32> to vector<32x128xf32>
    %264 = arith.addf %253, %263 : vector<32x128xf32>
    %cst_312 = arith.constant 0.000000e+00 : f32
    %265 = vector.broadcast %cst_312 : f32 to vector<32x128xf32>
    %266 = arith.maximumf %264, %265 : vector<32x128xf32>
    %267 = vector.shape_cast %266 : vector<32x128xf32> to vector<2x16x128xf32>
    %c1_313 = arith.constant 1 : index
    %c0_314 = arith.constant 0 : index
    %c0_315 = arith.constant 0 : index
    %c0_316 = arith.constant 0 : index
    %268 = vector.load %arg9[%c1_313, %c0_314, %c0_315, %c0_316] : memref<2x2x16x128xf32, #tpu.memory_space<vmem>>, vector<1x2x16x128xf32>
    %269 = vector.shape_cast %268 : vector<1x2x16x128xf32> to vector<2x16x128xf32>
    %270 = vector.shape_cast %267 : vector<2x16x128xf32> to vector<1x2x16x128xf32>
    tpu.vector_store %arg9[%c1_313, %c0_314, %c0_315, %c0_316], %270 {strides = array<i32>} : memref<2x2x16x128xf32, #tpu.memory_space<vmem>>, vector<1x2x16x128xf32>,
    return
  }
  func.func @transform_0(%arg0: i32) -> (i32, i32, i32) {
    %c0_i32 = arith.constant 0 : i32
    %c0_i32_0 = arith.constant 0 : i32
    %c0_i32_1 = arith.constant 0 : i32
    return %arg0, %c0_i32, %c0_i32_0 : i32, i32, i32
  }
  func.func @transform_1(%arg0: i32) -> (i32, i32, i32, i32) {
    %c0_i32 = arith.constant 0 : i32
    %c0_i32_0 = arith.constant 0 : i32
    %c0_i32_1 = arith.constant 0 : i32
    %c0_i32_2 = arith.constant 0 : i32
    %c0_i32_3 = arith.constant 0 : i32
    return %c0_i32, %c0_i32_0, %c0_i32_1, %c0_i32_2 : i32, i32, i32, i32
  }
  func.func @transform_2(%arg0: i32) -> (i32, i32, i32) {
    %c0_i32 = arith.constant 0 : i32
    %c0_i32_0 = arith.constant 0 : i32
    %c0_i32_1 = arith.constant 0 : i32
    %c0_i32_2 = arith.constant 0 : i32
    return %c0_i32, %c0_i32_0, %c0_i32_1 : i32, i32, i32
  }
  func.func @transform_3(%arg0: i32) -> (i32, i32, i32, i32) {
    %c0_i32 = arith.constant 0 : i32
    %c0_i32_0 = arith.constant 0 : i32
    %c0_i32_1 = arith.constant 0 : i32
    %c0_i32_2 = arith.constant 0 : i32
    %c0_i32_3 = arith.constant 0 : i32
    return %c0_i32, %c0_i32_0, %c0_i32_1, %c0_i32_2 : i32, i32, i32, i32
  }
  func.func @transform_4(%arg0: i32) -> (i32, i32, i32) {
    %c0_i32 = arith.constant 0 : i32
    %c0_i32_0 = arith.constant 0 : i32
    %c0_i32_1 = arith.constant 0 : i32
    %c0_i32_2 = arith.constant 0 : i32
    return %c0_i32, %c0_i32_0, %c0_i32_1 : i32, i32, i32
  }
  func.func @transform_5(%arg0: i32) -> (i32, i32) {
    %c0_i32 = arith.constant 0 : i32
    %c0_i32_0 = arith.constant 0 : i32
    %c0_i32_1 = arith.constant 0 : i32
    return %c0_i32, %c0_i32_0 : i32, i32
  }
  func.func @transform_6(%arg0: i32) -> (i32, i32, i32) {
    %c0_i32 = arith.constant 0 : i32
    %c0_i32_0 = arith.constant 0 : i32
    %c0_i32_1 = arith.constant 0 : i32
    %c0_i32_2 = arith.constant 0 : i32
    return %c0_i32, %c0_i32_0, %c0_i32_1 : i32, i32, i32
  }
  func.func @transform_7(%arg0: i32) -> (i32, i32) {
    %c0_i32 = arith.constant 0 : i32
    %c0_i32_0 = arith.constant 0 : i32
    %c0_i32_1 = arith.constant 0 : i32
    return %c0_i32, %c0_i32_0 : i32, i32
  }
  func.func @transform_8(%arg0: i32) -> (i32, i32, i32, i32) {
    %c0_i32 = arith.constant 0 : i32
    %c0_i32_0 = arith.constant 0 : i32
    %c0_i32_1 = arith.constant 0 : i32
    %c0_i32_2 = arith.constant 0 : i32
    return %c0_i32, %arg0, %c0_i32_0, %c0_i32_1 : i32, i32, i32, i32
  }
}

</mosaic_0001>

<llo_original>
// kernel: _dblock_forward.1
$region0: #{_dblock_forward.1}
  #allocation0 [shape = 'u32[]', space=smem, size = 0x4, offset = 0x4, fixed_abs, tag = 'smem constant byte address 0x4 - core index']
  #allocation1 [shape = 'u32[144,128]{1,0:T(1,128)}', space=vmem, size = 0x12000, scoped, tag = 'internal scratch']
  #allocation2 [shape = 'bf16[2,20,128]{2,1,0:T(8,128)(2,1)}', space=vmem, size = 0x3000, scoped, tag = 'scratch operand']
  %s0 = inlined_call_operand.vmem [shape: f32[4,16,128], index: 0, kind: input, shape index: {}]
  %s1 = inlined_call_operand.vmem [shape: bf16[3,5,128,128], index: 1, kind: input, shape index: {}]
  %s2 = inlined_call_operand.vmem [shape: f32[3,1,128], index: 2, kind: input, shape index: {}]
  %s3 = inlined_call_operand.hbm [shape: bf16[3,5,128,128], index: 3, kind: input, shape index: {}]
  %s4 = inlined_call_operand.vmem [shape: f32[3,1,128], index: 4, kind: input, shape index: {}]
  %s5 = inlined_call_operand.vmem [shape: bf16[128,128], index: 5, kind: input, shape index: {}]
  %s6 = inlined_call_operand.vmem [shape: bf16[2,128,256], index: 6, kind: input, shape index: {}]
  %s7 = inlined_call_operand.vmem [shape: f32[1,128], index: 7, kind: input, shape index: {}]
  %s8 = inlined_call_operand.vmem [shape: f32[2,4,16,128], index: 8, kind: output, shape index: {}]
  %s9 = sld [smem:[#allocation0]]
  $region103: #{_dblock_forward.1} parent=0
    _
  %s11 = ssub.s32 1, %s9
  %s12 = scalar_select 0, %s11, %s9
  $region1: #{_dblock_forward.1} parent=0
    #allocation3 [shape = 'u8[491520]{0}', space=vmem, size = 0x78000, scoped, tag = 'input window, operand 3, single buffered']
    #allocation4 [shape = 's32[2]{0}', space=sflag, size = 0x8, scoped, tag = 'scoped memory for _dblock_forward.1']
    #allocation5 [shape = 'u8[65536]{0}', space=vmem, size = 0x10000, scoped, tag = 'output window, operand 0']
    %13 = vsyncpa [#allocation4], 0
    loop: start=0, step=1, limit=4
    $region2: #{_dblock_forward.1} parent=1 // loop_pre_header
      _
    $region3: #{_dblock_forward.1} parent=1 // loop_header
      %s15 = sphi 0, %s19
      %p16 = scmp.ge.s32.totalorder %s15, 4
      %s25 = sphi 0, %s27
      %s28 = sphi 0, %s25
      %s29 = sphi 0, %s28
      %s45 = sphi 0, %s29
      %s49 = sphi 0, %s49
      %s51 = sphi 0, %s49
      %s52 = sphi 0, %s51
      %s66 = sphi 0, %s52
      %s70 = sphi 0, %s70
      %s72 = sphi 0, %s70
      %s73 = sphi 0, %s72
      %s87 = sphi 0, %s73
      %s91 = sphi 0, %s91
      %s93 = sphi 0, %s91
      %s94 = sphi 0, %s93
      %s108 = sphi 0, %s94
      %s112 = sphi 0, %s112
      %s114 = sphi 0, %s112
      %s115 = sphi 0, %s114
      %s129 = sphi 0, %s115
      %s133 = sphi 0, %s133
      %s135 = sphi 0, %s133
      %s136 = sphi 0, %s135
      %s150 = sphi 0, %s136
      %s154 = sphi 0, %s154
      %s156 = sphi 0, %s154
      %s157 = sphi 0, %s156
      %s171 = sphi 0, %s157
      %s175 = sphi 0, %s175
      %s177 = sphi 0, %s175
      %s178 = sphi 0, %s177
      %s192 = sphi 0, %s178
      %s198 = sphi 0, %s200
      %s201 = sphi 0, %s198
      %s202 = sphi 0, %s201
      %s218 = sphi 0, %s202
    $region4: #{_dblock_forward.1} parent=1 // loop_header_branch
      %18 = sbr.rel (%p16) target = $region8
    $region5: #{_dblock_forward.1} parent=1 // loop_body
      %s20 = ssub.s32 %s15, 1
      %s21 = ssub.s32 %s15, 2
      %s22 = sadd.s32 %s15, 1
      %s23 = ssub.s32 %s15, %s22
      %p24 = scmp.eq.s32.totalorder %s23, 0
      %s26 = sadd.s32 %s25, 1
      %s27 = scalar_select %p24, %s25, %s26
      %p30 = pneg %p24
      %p31 = scmp.eq.s32.totalorder %s15, 1
      %p32 = por %p30, %p31
      %p33 = scmp.ne.s32.totalorder %s25, %s28
      %p34 = scmp.eq.s32.totalorder %s15, 0
      %p35 = por %p33, %p34
      %p36 = scmp.ne.s32.totalorder %s25, %s28
      %p37 = scmp.eq.s32.totalorder %s20, 1
      %p38 = por %p36, %p37
      %p39 = scmp.ne.s32.totalorder %s28, %s29
      %p40 = scmp.eq.s32.totalorder %s20, 0
      %p41 = por %p39, %p40
      %p42 = scmp.ne.s32.totalorder %s28, %s29
      %p43 = scmp.eq.s32.totalorder %s21, 1
      %p44 = por %p42, %p43
      %p46 = scmp.ne.s32.totalorder %s29, %s45
      %p47 = scmp.eq.s32.totalorder %s21, 0
      %p48 = por %p46, %p47
      %s50 = sadd.s32 %s49, 1
      %p53 = scmp.eq.s32.totalorder %s15, 1
      %p54 = scmp.ne.s32.totalorder %s49, %s51
      %p55 = scmp.eq.s32.totalorder %s15, 0
      %p56 = por %p54, %p55
      %p57 = scmp.ne.s32.totalorder %s49, %s51
      %p58 = scmp.eq.s32.totalorder %s20, 1
      %p59 = por %p57, %p58
      %p60 = scmp.ne.s32.totalorder %s51, %s52
      %p61 = scmp.eq.s32.totalorder %s20, 0
      %p62 = por %p60, %p61
      %p63 = scmp.ne.s32.totalorder %s51, %s52
      %p64 = scmp.eq.s32.totalorder %s21, 1
      %p65 = por %p63, %p64
      %p67 = scmp.ne.s32.totalorder %s52, %s66
      %p68 = scmp.eq.s32.totalorder %s21, 0
      %p69 = por %p67, %p68
      %s71 = sadd.s32 %s70, 1
      %p74 = scmp.eq.s32.totalorder %s15, 1
      %p75 = scmp.ne.s32.totalorder %s70, %s72
      %p76 = scmp.eq.s32.totalorder %s15, 0
      %p77 = por %p75, %p76
      %p78 = scmp.ne.s32.totalorder %s70, %s72
      %p79 = scmp.eq.s32.totalorder %s20, 1
      %p80 = por %p78, %p79
      %p81 = scmp.ne.s32.totalorder %s72, %s73
      %p82 = scmp.eq.s32.totalorder %s20, 0
      %p83 = por %p81, %p82
      %p84 = scmp.ne.s32.totalorder %s72, %s73
      %p85 = scmp.eq.s32.totalorder %s21, 1
      %p86 = por %p84, %p85
      %p88 = scmp.ne.s32.totalorder %s73, %s87
      %p89 = scmp.eq.s32.totalorder %s21, 0
      %p90 = por %p88, %p89
      %s92 = sadd.s32 %s91, 1
      %p95 = scmp.eq.s32.totalorder %s15, 1
      %p96 = scmp.ne.s32.totalorder %s91, %s93
      %p97 = scmp.eq.s32.totalorder %s15, 0
      %p98 = por %p96, %p97
      %p99 = scmp.ne.s32.totalorder %s91, %s93
      %p100 = scmp.eq.s32.totalorder %s20, 1
      %p101 = por %p99, %p100
      %p102 = scmp.ne.s32.totalorder %s93, %s94
      %p103 = scmp.eq.s32.totalorder %s20, 0
      %p104 = por %p102, %p103
      %p105 = scmp.ne.s32.totalorder %s93, %s94
      %p106 = scmp.eq.s32.totalorder %s21, 1
      %p107 = por %p105, %p106
      %p109 = scmp.ne.s32.totalorder %s94, %s108
      %p110 = scmp.eq.s32.totalorder %s21, 0
      %p111 = por %p109, %p110
      %s113 = sadd.s32 %s112, 1
      %p116 = scmp.eq.s32.totalorder %s15, 1
      %p117 = scmp.ne.s32.totalorder %s112, %s114
      %p118 = scmp.eq.s32.totalorder %s15, 0
      %p119 = por %p117, %p118
      %p120 = scmp.ne.s32.totalorder %s112, %s114
      %p121 = scmp.eq.s32.totalorder %s20, 1
      %p122 = por %p120, %p121
      %p123 = scmp.ne.s32.totalorder %s114, %s115
      %p124 = scmp.eq.s32.totalorder %s20, 0
      %p125 = por %p123, %p124
      %p126 = scmp.ne.s32.totalorder %s114, %s115
      %p127 = scmp.eq.s32.totalorder %s21, 1
      %p128 = por %p126, %p127
      %p130 = scmp.ne.s32.totalorder %s115, %s129
      %p131 = scmp.eq.s32.totalorder %s21, 0
      %p132 = por %p130, %p131
      %s134 = sadd.s32 %s133, 1
      %p137 = scmp.eq.s32.totalorder %s15, 1
      %p138 = scmp.ne.s32.totalorder %s133, %s135
      %p139 = scmp.eq.s32.totalorder %s15, 0
      %p140 = por %p138, %p139
      %p141 = scmp.ne.s32.totalorder %s133, %s135
      %p142 = scmp.eq.s32.totalorder %s20, 1
      %p143 = por %p141, %p142
      %p144 = scmp.ne.s32.totalorder %s135, %s136
      %p145 = scmp.eq.s32.totalorder %s20, 0
      %p146 = por %p144, %p145
      %p147 = scmp.ne.s32.totalorder %s135, %s136
      %p148 = scmp.eq.s32.totalorder %s21, 1
      %p149 = por %p147, %p148
      %p151 = scmp.ne.s32.totalorder %s136, %s150
      %p152 = scmp.eq.s32.totalorder %s21, 0
      %p153 = por %p151, %p152
      %s155 = sadd.s32 %s154, 1
      %p158 = scmp.eq.s32.totalorder %s15, 1
      %p159 = scmp.ne.s32.totalorder %s154, %s156
      %p160 = scmp.eq.s32.totalorder %s15, 0
      %p161 = por %p159, %p160
      %p162 = scmp.ne.s32.totalorder %s154, %s156
      %p163 = scmp.eq.s32.totalorder %s20, 1
      %p164 = por %p162, %p163
      %p165 = scmp.ne.s32.totalorder %s156, %s157
      %p166 = scmp.eq.s32.totalorder %s20, 0
      %p167 = por %p165, %p166
      %p168 = scmp.ne.s32.totalorder %s156, %s157
      %p169 = scmp.eq.s32.totalorder %s21, 1
      %p170 = por %p168, %p169
      %p172 = scmp.ne.s32.totalorder %s157, %s171
      %p173 = scmp.eq.s32.totalorder %s21, 0
      %p174 = por %p172, %p173
      %s176 = sadd.s32 %s175, 1
      %p179 = scmp.eq.s32.totalorder %s15, 1
      %p180 = scmp.ne.s32.totalorder %s175, %s177
      %p181 = scmp.eq.s32.totalorder %s15, 0
      %p182 = por %p180, %p181
      %p183 = scmp.ne.s32.totalorder %s175, %s177
      %p184 = scmp.eq.s32.totalorder %s20, 1
      %p185 = por %p183, %p184
      %p186 = scmp.ne.s32.totalorder %s177, %s178
      %p187 = scmp.eq.s32.totalorder %s20, 0
      %p188 = por %p186, %p187
      %p189 = scmp.ne.s32.totalorder %s177, %s178
      %p190 = scmp.eq.s32.totalorder %s21, 1
      %p191 = por %p189, %p190
      %p193 = scmp.ne.s32.totalorder %s178, %s192
      %p194 = scmp.eq.s32.totalorder %s21, 0
      %p195 = por %p193, %p194
      %s196 = ssub.s32 %s15, %s22
      %p197 = scmp.eq.s32.totalorder %s196, 0
      %s199 = sadd.s32 %s198, 1
      %s200 = scalar_select %p197, %s198, %s199
      %p203 = pneg %p197
      %p204 = scmp.eq.s32.totalorder %s15, 1
      %p205 = por %p203, %p204
      %p206 = scmp.ne.s32.totalorder %s198, %s201
      %p207 = scmp.eq.s32.totalorder %s15, 0
      %p208 = por %p206, %p207
      %p209 = scmp.ne.s32.totalorder %s198, %s201
      %p210 = scmp.eq.s32.totalorder %s20, 1
      %p211 = por %p209, %p210
      %p212 = scmp.ne.s32.totalorder %s201, %s202
      %p213 = scmp.eq.s32.totalorder %s20, 0
      %p214 = por %p212, %p213
      %p215 = scmp.ne.s32.totalorder %s201, %s202
      %p216 = scmp.eq.s32.totalorder %s21, 1
      %p217 = por %p215, %p216
      %p219 = scmp.ne.s32.totalorder %s202, %s218
      %p220 = scmp.eq.s32.totalorder %s21, 0
      %p221 = por %p219, %p220
      %p222 = scmp.le.s32.totalorder 1, %s15
      %p223 = scmp.lt.s32.totalorder %s15, 3
      %p224 = pnand %p222, %p223
      %p225 = pneg %p224
      // Predicated region
      $region9: #{_dblock_forward.1} parent=5 // pred_check
        _
      $region10: #{_dblock_forward.1} parent=5 // pred_check_branch
        %227 = sbr.rel (%p224) target = $region12
      $region11: #{_dblock_forward.1} parent=5 // pred_region
        %s228 = ssub.s32 %s15, 1
        // Predicated region
        $region13: #{_dblock_forward.1} parent=11 // pred_check
          %p229 = pneg %p62
        $region14: #{_dblock_forward.1} parent=11 // pred_check_branch
          %231 = sbr.rel (%p229) target = $region16
        $region15: #{_dblock_forward.1} parent=11 // pred_region
          _
        $region16: #{_dblock_forward.1} parent=11 // pred_fallthru
          _
        // Predicated region
        $region17: #{_dblock_forward.1} parent=11 // pred_check
          %p232 = pneg %p83
        $region18: #{_dblock_forward.1} parent=11 // pred_check_branch
          %234 = sbr.rel (%p232) target = $region20
        $region19: #{_dblock_forward.1} parent=11 // pred_region
          _
        $region20: #{_dblock_forward.1} parent=11 // pred_fallthru
          _
        // Predicated region
        $region21: #{_dblock_forward.1} parent=11 // pred_check
          %p235 = pneg %p104
        $region22: #{_dblock_forward.1} parent=11 // pred_check_branch
          %237 = sbr.rel (%p235) target = $region24
        $region23: #{_dblock_forward.1} parent=11 // pred_region
          %s239 = ssub.s32 15360, 15360
          %240 = vsyncadd [#allocation4], %s239
          %s241 = sshll.u32 [#allocation3], 4
          %s242 = int_to_ptr.vmem [resolvable:$true] %s241
          %247 = dma.hbm_to_vmem [thread:$0]  %s3, 15360, %s242, [#allocation4], 64, 64, 4
        $region24: #{_dblock_forward.1} parent=11 // pred_fallthru
          _
        // Predicated region
        $region25: #{_dblock_forward.1} parent=11 // pred_check
          %p248 = pneg %p125
        $region26: #{_dblock_forward.1} parent=11 // pred_check_branch
          %250 = sbr.rel (%p248) target = $region28
        $region27: #{_dblock_forward.1} parent=11 // pred_region
          _
        $region28: #{_dblock_forward.1} parent=11 // pred_fallthru
          _
        // Predicated region
        $region29: #{_dblock_forward.1} parent=11 // pred_check
          %p251 = pneg %p146
        $region30: #{_dblock_forward.1} parent=11 // pred_check_branch
          %253 = sbr.rel (%p251) target = $region32
        $region31: #{_dblock_forward.1} parent=11 // pred_region
          _
        $region32: #{_dblock_forward.1} parent=11 // pred_fallthru
          _
        // Predicated region
        $region33: #{_dblock_forward.1} parent=11 // pred_check
          %p254 = pneg %p167
        $region34: #{_dblock_forward.1} parent=11 // pred_check_branch
          %256 = sbr.rel (%p254) target = $region36
        $region35: #{_dblock_forward.1} parent=11 // pred_region
          _
        $region36: #{_dblock_forward.1} parent=11 // pred_fallthru
          _
        // Predicated region
        $region37: #{_dblock_forward.1} parent=11 // pred_check
          %p257 = pneg %p188
        $region38: #{_dblock_forward.1} parent=11 // pred_check_branch
          %259 = sbr.rel (%p257) target = $region40
        $region39: #{_dblock_forward.1} parent=11 // pred_region
          _
        $region40: #{_dblock_forward.1} parent=11 // pred_fallthru
          _
      $region12: #{_dblock_forward.1} parent=5 // pred_fallthru
        _
      %p260 = scmp.lt.s32.totalorder %s15, 2
      // Predicated region
      $region41: #{_dblock_forward.1} parent=5 // pred_check
        %p261 = pneg %p260
      $region42: #{_dblock_forward.1} parent=5 // pred_check_branch
        %263 = sbr.rel (%p261) target = $region44
      $region43: #{_dblock_forward.1} parent=5 // pred_region
        // Predicated region
        $region45: #{_dblock_forward.1} parent=43 // pred_check
          %p264 = pneg %p35
        $region46: #{_dblock_forward.1} parent=43 // pred_check_branch
          %266 = sbr.rel (%p264) target = $region48
        $region47: #{_dblock_forward.1} parent=43 // pred_region
          %s267 = smul.u32 2, %s15
          %p268 = scmp.lt.s32.totalorder %s267, 3
          %s269 = scalar_select %p268, %s267, 3
          %s270 = smul.addr %s269, 2
          %s271 = smul.addr %s270, 8
          %s272 = scalar_lea.vmem %s0, %s271
          %s273 = smul.u32 2, %s15
        $region48: #{_dblock_forward.1} parent=43 // pred_fallthru
          _
      $region44: #{_dblock_forward.1} parent=5 // pred_fallthru
        _
      %p274 = scmp.le.s32.totalorder 1, %s15
      %p275 = scmp.lt.s32.totalorder %s15, 3
      %p276 = pnand %p274, %p275
      %p277 = pneg %p276
      // Predicated region
      $region49: #{_dblock_forward.1} parent=5 // pred_check
        _
      $region50: #{_dblock_forward.1} parent=5 // pred_check_branch
        %279 = sbr.rel (%p276) target = $region52
      $region51: #{_dblock_forward.1} parent=5 // pred_region
        %s280 = ssub.s32 %s15, 1
        // Predicated region
        $region53: #{_dblock_forward.1} parent=51 // pred_check
          %p281 = pneg %p104
        $region54: #{_dblock_forward.1} parent=51 // pred_check_branch
          %283 = sbr.rel (%p281) target = $region56
        $region55: #{_dblock_forward.1} parent=51 // pred_region
          %284 = dma.done [#allocation4], 15360
        $region56: #{_dblock_forward.1} parent=51 // pred_fallthru
          _
        %s285 = smul.u32 2, %s20
        %p286 = scmp.lt.s32.totalorder %s285, 3
        %s287 = scalar_select %p286, %s285, 3
        %s288 = smul.addr %s287, 2
        %s289 = smul.addr %s288, 8
        %s290 = scalar_lea.vmem %s0, %s289
        %p291 = pneg %p41
        %p292 = pneg %p38
        %p293 = pneg %p62
        %p294 = pneg %p59
        %p295 = pneg %p83
        %p296 = pneg %p80
        %p297 = pneg %p104
        %p298 = pneg %p101
        %p299 = pneg %p125
        %p300 = pneg %p122
        %p301 = pneg %p146
        %p302 = pneg %p143
        %p303 = pneg %p167
        %p304 = pneg %p164
        %p305 = pneg %p188
        %p306 = pneg %p185
        %p307 = pneg %p214
        %p308 = pneg %p211
        %s309 = sand.u32 %s201, 1
        %s310 = sand.u32 %s201, 1
        %s311 = smul.addr %s310, 64
        %s312 = scalar_lea.vmem [#allocation5], %s311
        %s313 = smul.u32 2, %s20
        %p314 = scmp.lt.s32.totalorder %s313, 3
        %s315 = scalar_select %p314, %s313, 3
        %s316 = smul.addr %s315, 2
        %s317 = smul.addr %s316, 8
        %s318 = scalar_lea.vmem %s0, %s317
        %s319 = smul.u32 2, %s20
        %s320 = smul.u32 2, %s20
        %322 = vst [vmem:[#allocation2] sm:$0x1] 0
        %323 = vst [vmem:[#allocation2 + $0xc] sm:$0x1] 0
        %324 = vst [vmem:[#allocation2 + $0x8] sm:$0x2] 0
        %325 = vst [vmem:[#allocation2 + $0x14] sm:$0x2] 0
        %v326 = vld [vmem:[%s318] sm:$0xff]
        %v327 = vld [vmem:[%s318 + $0x8] sm:$0xff]
        %v328 = vld [vmem:[%s318 + $0x10] sm:$0xff]
        %v329 = vld [vmem:[%s318 + $0x18] sm:$0xff]
        %v330 = vpack.c.bf16 %v327, %v326
        %v331 = vpack.c.bf16 %v329, %v328
        %v334 = vunpack.c.l.b16 %v330
        %v335 = vunpack.c.h.b16 %v330
        %v336 = vunpack.c.l.b16 %v331
        %v337 = vunpack.c.h.b16 %v331
        %v338 = vpack.c.b16 %v334, %v334
        %v339 = vpack.c.b16 %v335, %v335
        %v340 = vpack.c.b16 %v336, %v336
        %v341 = vpack.c.b16 %v337, %v337
        %vm342 = vcmask 1040384
        %vm343 = vcmask 1044484
        %vm344 = vmor %vm342, %vm343
        %v345 = vrot.slane %v338, 7
        %v346 = vrot.slane %v345, 4
        %v347 = vrot.slane %v339, 7
        %v348 = vsel %vm344, %v346, %v347
        %v349 = vrot.slane %v347, 4
        %v350 = vrot.slane %v340, 7
        %v351 = vrot.slane %v350, 4
        %v352 = vrot.slane %v341, 7
        %v353 = vsel %vm344, %v351, %v352
        %v354 = vrot.slane %v352, 4
        %361 = vst [vmem:[#allocation2] sm:$0xe] %v345
        %362 = vst [vmem:[#allocation2 + $0x4] sm:$0xf] %v348
        %363 = vst [vmem:[#allocation2 + $0x8] sm:$0x1] %v349
        %364 = vst [vmem:[#allocation2 + $0xc] sm:$0xe] %v350
        %365 = vst [vmem:[#allocation2 + $0x10] sm:$0xf] %v353
        %366 = vst [vmem:[#allocation2 + $0x14] sm:$0x1] %v354
        %v367 = vld [vmem:[%s2] sm:$0x1]
        %v368 = vld [vmem:[#allocation2] sm:$0xf]
        %v369 = vld [vmem:[#allocation2 + $0x4] sm:$0xf]
        %v370 = vld [vmem:[#allocation2 + $0xc] sm:$0xf]
        %v371 = vld [vmem:[#allocation2 + $0x10] sm:$0xf]
        %v372 = vld [vmem:[%s1] sm:$0xf]
        %v373 = vld [vmem:[%s1 + $0x4] sm:$0xf]
        %v374 = vld [vmem:[%s1 + $0x8] sm:$0xf]
        %v375 = vld [vmem:[%s1 + $0xc] sm:$0xf]
        %v376 = vld [vmem:[%s1 + $0x10] sm:$0xf]
        %v377 = vld [vmem:[%s1 + $0x14] sm:$0xf]
        %v378 = vld [vmem:[%s1 + $0x18] sm:$0xf]
        %v379 = vld [vmem:[%s1 + $0x1c] sm:$0xf]
        %v380 = vld [vmem:[%s1 + $0x20] sm:$0xf]
        %v381 = vld [vmem:[%s1 + $0x24] sm:$0xf]
        %v382 = vld [vmem:[%s1 + $0x28] sm:$0xf]
        %v383 = vld [vmem:[%s1 + $0x2c] sm:$0xf]
        %v384 = vld [vmem:[%s1 + $0x30] sm:$0xf]
        %v385 = vld [vmem:[%s1 + $0x34] sm:$0xf]
        %v386 = vld [vmem:[%s1 + $0x38] sm:$0xf]
        %v387 = vld [vmem:[%s1 + $0x3c] sm:$0xf]
        %v388 = vld [vmem:[#allocation2 + $0x8] sm:$0x1]
        %v389 = vld [vmem:[#allocation2 + $0x14] sm:$0x1]
        %vm390 = vsmask.f32 3328
        %vm391 = vsmask.f32 7440
        %vm392 = vmor %vm390, %vm391
        %v394 = vshrl.u32 %v368, 16
        %v396 = vrot.slane %v394, 4
        %v397 = vshll.u32 %v368, 16
        %v399 = vrot.slane %v397, 5
        %v400 = vor.u32 %v396, %v399
        %v401 = vrot.slane %v400, 4
        %v403 = vshll.u32 %v369, 16
        %v405 = vrot.slane %v403, 5
        %v406 = vsel %vm392, %v401, %v405
        %v407 = vshrl.u32 %v369, 16
        %v409 = vrot.slane %v407, 4
        %v410 = vor.u32 %v409, %v405
        %v411 = vrot.slane %v410, 4
        %v413 = vshll.u32 %v388, 16
        %v415 = vrot.slane %v413, 5
        %v416 = vsel %vm392, %v411, %v415
        %v418 = vshrl.u32 %v370, 16
        %v420 = vrot.slane %v418, 4
        %v421 = vshll.u32 %v370, 16
        %v423 = vrot.slane %v421, 5
        %v424 = vor.u32 %v420, %v423
        %v425 = vrot.slane %v424, 4
        %v427 = vshll.u32 %v371, 16
        %v429 = vrot.slane %v427, 5
        %v430 = vsel %vm392, %v425, %v429
        %v431 = vshrl.u32 %v371, 16
        %v433 = vrot.slane %v431, 4
        %v434 = vor.u32 %v433, %v429
        %v435 = vrot.slane %v434, 4
        %v437 = vshll.u32 %v389, 16
        %v439 = vrot.slane %v437, 5
        %v440 = vsel %vm392, %v435, %v439
        %s441 = scalar_lea.vmem %s1, 64
        %v442 = vld [vmem:[%s441] sm:$0xf]
        %v443 = vld [vmem:[%s441 + $0x4] sm:$0xf]
        %v444 = vld [vmem:[%s441 + $0x8] sm:$0xf]
        %v445 = vld [vmem:[%s441 + $0xc] sm:$0xf]
        %v446 = vld [vmem:[%s441 + $0x10] sm:$0xf]
        %v447 = vld [vmem:[%s441 + $0x14] sm:$0xf]
        %v448 = vld [vmem:[%s441 + $0x18] sm:$0xf]
        %v449 = vld [vmem:[%s441 + $0x1c] sm:$0xf]
        %v450 = vld [vmem:[%s441 + $0x20] sm:$0xf]
        %v451 = vld [vmem:[%s441 + $0x24] sm:$0xf]
        %v452 = vld [vmem:[%s441 + $0x28] sm:$0xf]
        %v453 = vld [vmem:[%s441 + $0x2c] sm:$0xf]
        %v454 = vld [vmem:[%s441 + $0x30] sm:$0xf]
        %v455 = vld [vmem:[%s441 + $0x34] sm:$0xf]
        %v456 = vld [vmem:[%s441 + $0x38] sm:$0xf]
        %v457 = vld [vmem:[%s441 + $0x3c] sm:$0xf]
        %v458 = vunpack.c.l.b16 %v406
        %v459 = vunpack.c.l.b16 %v416
        %v460 = vunpack.c.l.b16 %v430
        %v461 = vunpack.c.l.b16 %v440
        %v462 = vpack.c.b16 %v459, %v458
        %v463 = vpack.c.b16 %v461, %v460
        %v482 = vunpack.c.l.b16 %v442
        %v483 = vunpack.c.l.b16 %v443
        %v484 = vunpack.c.l.b16 %v444
        %v485 = vunpack.c.l.b16 %v445
        %v486 = vunpack.c.l.b16 %v446
        %v487 = vunpack.c.l.b16 %v447
        %v488 = vunpack.c.l.b16 %v448
        %v489 = vunpack.c.l.b16 %v449
        %v490 = vunpack.c.l.b16 %v450
        %v491 = vunpack.c.l.b16 %v451
        %v492 = vunpack.c.l.b16 %v452
        %v493 = vunpack.c.l.b16 %v453
        %v494 = vunpack.c.l.b16 %v454
        %v495 = vunpack.c.l.b16 %v455
        %v496 = vunpack.c.l.b16 %v456
        %v497 = vunpack.c.l.b16 %v457
        %v498 = vpack.c.b16 %v483, %v482
        %v499 = vpack.c.b16 %v485, %v484
        %v500 = vpack.c.b16 %v487, %v486
        %v501 = vpack.c.b16 %v489, %v488
        %v502 = vpack.c.b16 %v491, %v490
        %v503 = vpack.c.b16 %v493, %v492
        %v504 = vpack.c.b16 %v495, %v494
        %v505 = vpack.c.b16 %v497, %v496
        %514 = vmatprep.subr.bf16.mxu0 0
        %515 = vmatpush1.bf16.msra.mxu0 %v505
        %516 = vmatprep.subr.bf16.mxu0 0
        %517 = vmatpush1.bf16.msra.mxu0 %v504
        %518 = vmatprep.subr.bf16.mxu0 0
        %519 = vmatpush1.bf16.msra.mxu0 %v503
        %520 = vmatprep.subr.bf16.mxu0 0
        %521 = vmatpush1.bf16.msra.mxu0 %v502
        %522 = vmatprep.subr.bf16.mxu0 0
        %523 = vmatpush1.bf16.msra.mxu0 %v501
        %524 = vmatprep.subr.bf16.mxu0 0
        %525 = vmatpush1.bf16.msra.mxu0 %v500
        %526 = vmatprep.subr.bf16.mxu0 0
        %527 = vmatpush1.bf16.msra.mxu0 %v499
        %528 = vmatprep.subr.bf16.mxu0 0
        %529 = vmatpush1.bf16.msra.mxu0 %v498
        %530 = vmatprep.subr.bf16.mxu0 0
        %531 = vmatpush2.bf16.msra.mxu0 0
        %532 = vmatprep.subr.bf16.mxu0 0
        %533 = vmatpush2.bf16.msra.mxu0 0
        %534 = vmatprep.subr.bf16.mxu0 0
        %535 = vmatpush2.bf16.msra.mxu0 0
        %536 = vmatprep.subr.bf16.mxu0 0
        %537 = vmatpush2.bf16.msra.mxu0 0
        %538 = vmatprep.subr.bf16.mxu0 0
        %539 = vmatpush2.bf16.msra.mxu0 0
        %540 = vmatprep.subr.bf16.mxu0 0
        %541 = vmatpush2.bf16.msra.mxu0 0
        %542 = vmatprep.subr.bf16.mxu0 0
        %543 = vmatpush2.bf16.msra.mxu0 0
        %544 = vmatprep.subr.bf16.mxu0 0
        %545 = vmatpush2.bf16.msra.mxu0 0
        %546 = vmatprep.mubr.bf16.mxu0 0
        %547 = vmatmul.mubr.bf16.gmra.mxu0 %v462
        %v548 = vpop.f32.mrf.mxu0
        %v549 = vadd.f32 0.0, %v548
        %v550 = vpop.f32.mrf.mxu0
        %v551 = vpop.f32.mrf.mxu0
        %v552 = vadd.f32 0.0, %v551
        %v553 = vpop.f32.mrf.mxu0
        %554 = vmatprep.mubr.bf16.mxu0 0
        %555 = vmatmul.mubr.bf16.gmra.mxu0 %v463
        %v556 = vpop.f32.mrf.mxu0
        %v557 = vadd.f32 0.0, %v556
        %v558 = vpop.f32.mrf.mxu0
        %v559 = vpop.f32.mrf.mxu0
        %v560 = vadd.f32 0.0, %v559
        %v561 = vpop.f32.mrf.mxu0
        %562 = vdwg.mxu0
        %v567 = vunpack.c.l.b16 %v368
        %v568 = vunpack.c.l.b16 %v369
        %v569 = vunpack.c.l.b16 %v370
        %v570 = vunpack.c.l.b16 %v371
        %v571 = vpack.c.b16 %v568, %v567
        %v572 = vpack.c.b16 %v570, %v569
        %v591 = vunpack.c.l.b16 %v372
        %v592 = vunpack.c.l.b16 %v373
        %v593 = vunpack.c.l.b16 %v374
        %v594 = vunpack.c.l.b16 %v375
        %v595 = vunpack.c.l.b16 %v376
        %v596 = vunpack.c.l.b16 %v377
        %v597 = vunpack.c.l.b16 %v378
        %v598 = vunpack.c.l.b16 %v379
        %v599 = vunpack.c.l.b16 %v380
        %v600 = vunpack.c.l.b16 %v381
        %v601 = vunpack.c.l.b16 %v382
        %v602 = vunpack.c.l.b16 %v383
        %v603 = vunpack.c.l.b16 %v384
        %v604 = vunpack.c.l.b16 %v385
        %v605 = vunpack.c.l.b16 %v386
        %v606 = vunpack.c.l.b16 %v387
        %v607 = vpack.c.b16 %v592, %v591
        %v608 = vpack.c.b16 %v594, %v593
        %v609 = vpack.c.b16 %v596, %v595
        %v610 = vpack.c.b16 %v598, %v597
        %v611 = vpack.c.b16 %v600, %v599
        %v612 = vpack.c.b16 %v602, %v601
        %v613 = vpack.c.b16 %v604, %v603
        %v614 = vpack.c.b16 %v606, %v605
        %623 = vmatprep.subr.bf16.mxu0 0
        %624 = vmatpush1.bf16.msra.mxu0 %v614
        %625 = vmatprep.subr.bf16.mxu0 0
        %626 = vmatpush1.bf16.msra.mxu0 %v613
        %627 = vmatprep.subr.bf16.mxu0 0
        %628 = vmatpush1.bf16.msra.mxu0 %v612
        %629 = vmatprep.subr.bf16.mxu0 0
        %630 = vmatpush1.bf16.msra.mxu0 %v611
        %631 = vmatprep.subr.bf16.mxu0 0
        %632 = vmatpush1.bf16.msra.mxu0 %v610
        %633 = vmatprep.subr.bf16.mxu0 0
        %634 = vmatpush1.bf16.msra.mxu0 %v609
        %635 = vmatprep.subr.bf16.mxu0 0
        %636 = vmatpush1.bf16.msra.mxu0 %v608
        %637 = vmatprep.subr.bf16.mxu0 0
        %638 = vmatpush1.bf16.msra.mxu0 %v607
        %639 = vmatprep.subr.bf16.mxu0 0
        %640 = vmatpush2.bf16.msra.mxu0 0
        %641 = vmatprep.subr.bf16.mxu0 0
        %642 = vmatpush2.bf16.msra.mxu0 0
        %643 = vmatprep.subr.bf16.mxu0 0
        %644 = vmatpush2.bf16.msra.mxu0 0
        %645 = vmatprep.subr.bf16.mxu0 0
        %646 = vmatpush2.bf16.msra.mxu0 0
        %647 = vmatprep.subr.bf16.mxu0 0
        %648 = vmatpush2.bf16.msra.mxu0 0
        %649 = vmatprep.subr.bf16.mxu0 0
        %650 = vmatpush2.bf16.msra.mxu0 0
        %651 = vmatprep.subr.bf16.mxu0 0
        %652 = vmatpush2.bf16.msra.mxu0 0
        %653 = vmatprep.subr.bf16.mxu0 0
        %654 = vmatpush2.bf16.msra.mxu0 0
        %655 = vmatprep.mubr.bf16.mxu0 0
        %656 = vmatmul.mubr.bf16.gmra.mxu0 %v571
        %v657 = vpop.f32.mrf.mxu0
        %v658 = vadd.f32 %v549, %v657
        %v659 = vpop.f32.mrf.mxu0
        %v660 = vpop.f32.mrf.mxu0
        %v661 = vadd.f32 %v552, %v660
        %v662 = vpop.f32.mrf.mxu0
        %663 = vmatprep.mubr.bf16.mxu0 0
        %664 = vmatmul.mubr.bf16.gmra.mxu0 %v572
        %v665 = vpop.f32.mrf.mxu0
        %v666 = vadd.f32 %v557, %v665
        %v667 = vpop.f32.mrf.mxu0
        %v668 = vpop.f32.mrf.mxu0
        %v669 = vadd.f32 %v560, %v668
        %v670 = vpop.f32.mrf.mxu0
        %671 = vdwg.mxu0
        %v672 = vld [vmem:[#allocation2] sm:$0xe]
        %v673 = vld [vmem:[#allocation2 + $0xc] sm:$0xe]
        %vm678 = vcmask 1042432
        %vm679 = vcmask 1046532
        %vm680 = vmor %vm678, %vm679
        %v681 = vrot.slane %v672, 5
        %v682 = vrot.slane %v681, 4
        %v683 = vrot.slane %v369, 5
        %v684 = vsel %vm680, %v682, %v683
        %v685 = vrot.slane %v683, 4
        %v686 = vrot.slane %v388, 5
        %v687 = vsel %vm680, %v685, %v686
        %v688 = vrot.slane %v673, 5
        %v689 = vrot.slane %v688, 4
        %v690 = vrot.slane %v371, 5
        %v691 = vsel %vm680, %v689, %v690
        %v692 = vrot.slane %v690, 4
        %v693 = vrot.slane %v389, 5
        %v694 = vsel %vm680, %v692, %v693
        %s695 = scalar_lea.vmem %s1, 128
        %v696 = vld [vmem:[%s695] sm:$0xf]
        %v697 = vld [vmem:[%s695 + $0x4] sm:$0xf]
        %v698 = vld [vmem:[%s695 + $0x8] sm:$0xf]
        %v699 = vld [vmem:[%s695 + $0xc] sm:$0xf]
        %v700 = vld [vmem:[%s695 + $0x10] sm:$0xf]
        %v701 = vld [vmem:[%s695 + $0x14] sm:$0xf]
        %v702 = vld [vmem:[%s695 + $0x18] sm:$0xf]
        %v703 = vld [vmem:[%s695 + $0x1c] sm:$0xf]
        %v704 = vld [vmem:[%s695 + $0x20] sm:$0xf]
        %v705 = vld [vmem:[%s695 + $0x24] sm:$0xf]
        %v706 = vld [vmem:[%s695 + $0x28] sm:$0xf]
        %v707 = vld [vmem:[%s695 + $0x2c] sm:$0xf]
        %v708 = vld [vmem:[%s695 + $0x30] sm:$0xf]
        %v709 = vld [vmem:[%s695 + $0x34] sm:$0xf]
        %v710 = vld [vmem:[%s695 + $0x38] sm:$0xf]
        %v711 = vld [vmem:[%s695 + $0x3c] sm:$0xf]
        %v712 = vunpack.c.l.b16 %v684
        %v713 = vunpack.c.l.b16 %v687
        %v714 = vunpack.c.l.b16 %v691
        %v715 = vunpack.c.l.b16 %v694
        %v716 = vpack.c.b16 %v713, %v712
        %v717 = vpack.c.b16 %v715, %v714
        %v736 = vunpack.c.l.b16 %v696
        %v737 = vunpack.c.l.b16 %v697
        %v738 = vunpack.c.l.b16 %v698
        %v739 = vunpack.c.l.b16 %v699
        %v740 = vunpack.c.l.b16 %v700
        %v741 = vunpack.c.l.b16 %v701
        %v742 = vunpack.c.l.b16 %v702
        %v743 = vunpack.c.l.b16 %v703
        %v744 = vunpack.c.l.b16 %v704
        %v745 = vunpack.c.l.b16 %v705
        %v746 = vunpack.c.l.b16 %v706
        %v747 = vunpack.c.l.b16 %v707
        %v748 = vunpack.c.l.b16 %v708
        %v749 = vunpack.c.l.b16 %v709
        %v750 = vunpack.c.l.b16 %v710
        %v751 = vunpack.c.l.b16 %v711
        %v752 = vpack.c.b16 %v737, %v736
        %v753 = vpack.c.b16 %v739, %v738
        %v754 = vpack.c.b16 %v741, %v740
        %v755 = vpack.c.b16 %v743, %v742
        %v756 = vpack.c.b16 %v745, %v744
        %v757 = vpack.c.b16 %v747, %v746
        %v758 = vpack.c.b16 %v749, %v748
        %v759 = vpack.c.b16 %v751, %v750
        %768 = vmatprep.subr.bf16.mxu0 0
        %769 = vmatpush1.bf16.msra.mxu0 %v759
        %770 = vmatprep.subr.bf16.mxu0 0
        %771 = vmatpush1.bf16.msra.mxu0 %v758
        %772 = vmatprep.subr.bf16.mxu0 0
        %773 = vmatpush1.bf16.msra.mxu0 %v757
        %774 = vmatprep.subr.bf16.mxu0 0
        %775 = vmatpush1.bf16.msra.mxu0 %v756
        %776 = vmatprep.subr.bf16.mxu0 0
        %777 = vmatpush1.bf16.msra.mxu0 %v755
        %778 = vmatprep.subr.bf16.mxu0 0
        %779 = vmatpush1.bf16.msra.mxu0 %v754
        %780 = vmatprep.subr.bf16.mxu0 0
        %781 = vmatpush1.bf16.msra.mxu0 %v753
        %782 = vmatprep.subr.bf16.mxu0 0
        %783 = vmatpush1.bf16.msra.mxu0 %v752
        %784 = vmatprep.subr.bf16.mxu0 0
        %785 = vmatpush2.bf16.msra.mxu0 0
        %786 = vmatprep.subr.bf16.mxu0 0
        %787 = vmatpush2.bf16.msra.mxu0 0
        %788 = vmatprep.subr.bf16.mxu0 0
        %789 = vmatpush2.bf16.msra.mxu0 0
        %790 = vmatprep.subr.bf16.mxu0 0
        %791 = vmatpush2.bf16.msra.mxu0 0
        %792 = vmatprep.subr.bf16.mxu0 0
        %793 = vmatpush2.bf16.msra.mxu0 0
        %794 = vmatprep.subr.bf16.mxu0 0
        %795 = vmatpush2.bf16.msra.mxu0 0
        %796 = vmatprep.subr.bf16.mxu0 0
        %797 = vmatpush2.bf16.msra.mxu0 0
        %798 = vmatprep.subr.bf16.mxu0 0
        %799 = vmatpush2.bf16.msra.mxu0 0
        %800 = vmatprep.mubr.bf16.mxu0 0
        %801 = vmatmul.mubr.bf16.gmra.mxu0 %v716
        %v802 = vpop.f32.mrf.mxu0
        %v803 = vadd.f32 0.0, %v802
        %v804 = vpop.f32.mrf.mxu0
        %v805 = vpop.f32.mrf.mxu0
        %v806 = vadd.f32 0.0, %v805
        %v807 = vpop.f32.mrf.mxu0
        %808 = vmatprep.mubr.bf16.mxu0 0
        %809 = vmatmul.mubr.bf16.gmra.mxu0 %v717
        %v810 = vpop.f32.mrf.mxu0
        %v811 = vadd.f32 0.0, %v810
        %v812 = vpop.f32.mrf.mxu0
        %v813 = vpop.f32.mrf.mxu0
        %v814 = vadd.f32 0.0, %v813
        %v815 = vpop.f32.mrf.mxu0
        %816 = vdwg.mxu0
        %v817 = vadd.f32 %v658, %v803
        %v818 = vadd.f32 %v661, %v806
        %v819 = vadd.f32 %v666, %v811
        %v820 = vadd.f32 %v669, %v814
        %v821 = vld [vmem:[#allocation2 + $0x8] sm:$0x3]
        %v822 = vld [vmem:[#allocation2 + $0x14] sm:$0x3]
        %vm823 = vsmask.f32 2304
        %vm824 = vsmask.f32 6416
        %vm825 = vmor %vm823, %vm824
        %v827 = vshrl.u32 %v672, 16
        %v829 = vrot.slane %v827, 5
        %v830 = vshll.u32 %v672, 16
        %v832 = vrot.slane %v830, 6
        %v833 = vor.u32 %v829, %v832
        %v834 = vrot.slane %v833, 4
        %v835 = vrot.slane %v407, 5
        %v836 = vrot.slane %v403, 6
        %v837 = vor.u32 %v835, %v836
        %v838 = vsel %vm825, %v834, %v837
        %v839 = vrot.slane %v837, 4
        %v841 = vshrl.u32 %v821, 16
        %v843 = vrot.slane %v841, 5
        %v844 = vshll.u32 %v821, 16
        %v846 = vrot.slane %v844, 6
        %v847 = vor.u32 %v843, %v846
        %v848 = vsel %vm825, %v839, %v847
        %v850 = vshrl.u32 %v673, 16
        %v852 = vrot.slane %v850, 5
        %v853 = vshll.u32 %v673, 16
        %v855 = vrot.slane %v853, 6
        %v856 = vor.u32 %v852, %v855
        %v857 = vrot.slane %v856, 4
        %v858 = vrot.slane %v431, 5
        %v859 = vrot.slane %v427, 6
        %v860 = vor.u32 %v858, %v859
        %v861 = vsel %vm825, %v857, %v860
        %v862 = vrot.slane %v860, 4
        %v864 = vshrl.u32 %v822, 16
        %v866 = vrot.slane %v864, 5
        %v867 = vshll.u32 %v822, 16
        %v869 = vrot.slane %v867, 6
        %v870 = vor.u32 %v866, %v869
        %v871 = vsel %vm825, %v862, %v870
        %s872 = scalar_lea.vmem %s1, 192
        %v873 = vld [vmem:[%s872] sm:$0xf]
        %v874 = vld [vmem:[%s872 + $0x4] sm:$0xf]
        %v875 = vld [vmem:[%s872 + $0x8] sm:$0xf]
        %v876 = vld [vmem:[%s872 + $0xc] sm:$0xf]
        %v877 = vld [vmem:[%s872 + $0x10] sm:$0xf]
        %v878 = vld [vmem:[%s872 + $0x14] sm:$0xf]
        %v879 = vld [vmem:[%s872 + $0x18] sm:$0xf]
        %v880 = vld [vmem:[%s872 + $0x1c] sm:$0xf]
        %v881 = vld [vmem:[%s872 + $0x20] sm:$0xf]
        %v882 = vld [vmem:[%s872 + $0x24] sm:$0xf]
        %v883 = vld [vmem:[%s872 + $0x28] sm:$0xf]
        %v884 = vld [vmem:[%s872 + $0x2c] sm:$0xf]
        %v885 = vld [vmem:[%s872 + $0x30] sm:$0xf]
        %v886 = vld [vmem:[%s872 + $0x34] sm:$0xf]
        %v887 = vld [vmem:[%s872 + $0x38] sm:$0xf]
        %v888 = vld [vmem:[%s872 + $0x3c] sm:$0xf]
        %v889 = vunpack.c.l.b16 %v838
        %v890 = vunpack.c.l.b16 %v848
        %v891 = vunpack.c.l.b16 %v861
        %v892 = vunpack.c.l.b16 %v871
        %v893 = vpack.c.b16 %v890, %v889
        %v894 = vpack.c.b16 %v892, %v891
        %v913 = vunpack.c.l.b16 %v873
        %v914 = vunpack.c.l.b16 %v874
        %v915 = vunpack.c.l.b16 %v875
        %v916 = vunpack.c.l.b16 %v876
        %v917 = vunpack.c.l.b16 %v877
        %v918 = vunpack.c.l.b16 %v878
        %v919 = vunpack.c.l.b16 %v879
        %v920 = vunpack.c.l.b16 %v880
        %v921 = vunpack.c.l.b16 %v881
        %v922 = vunpack.c.l.b16 %v882
        %v923 = vunpack.c.l.b16 %v883
        %v924 = vunpack.c.l.b16 %v884
        %v925 = vunpack.c.l.b16 %v885
        %v926 = vunpack.c.l.b16 %v886
        %v927 = vunpack.c.l.b16 %v887
        %v928 = vunpack.c.l.b16 %v888
        %v929 = vpack.c.b16 %v914, %v913
        %v930 = vpack.c.b16 %v916, %v915
        %v931 = vpack.c.b16 %v918, %v917
        %v932 = vpack.c.b16 %v920, %v919
        %v933 = vpack.c.b16 %v922, %v921
        %v934 = vpack.c.b16 %v924, %v923
        %v935 = vpack.c.b16 %v926, %v925
        %v936 = vpack.c.b16 %v928, %v927
        %945 = vmatprep.subr.bf16.mxu0 0
        %946 = vmatpush1.bf16.msra.mxu0 %v936
        %947 = vmatprep.subr.bf16.mxu0 0
        %948 = vmatpush1.bf16.msra.mxu0 %v935
        %949 = vmatprep.subr.bf16.mxu0 0
        %950 = vmatpush1.bf16.msra.mxu0 %v934
        %951 = vmatprep.subr.bf16.mxu0 0
        %952 = vmatpush1.bf16.msra.mxu0 %v933
        %953 = vmatprep.subr.bf16.mxu0 0
        %954 = vmatpush1.bf16.msra.mxu0 %v932
        %955 = vmatprep.subr.bf16.mxu0 0
        %956 = vmatpush1.bf16.msra.mxu0 %v931
        %957 = vmatprep.subr.bf16.mxu0 0
        %958 = vmatpush1.bf16.msra.mxu0 %v930
        %959 = vmatprep.subr.bf16.mxu0 0
        %960 = vmatpush1.bf16.msra.mxu0 %v929
        %961 = vmatprep.subr.bf16.mxu0 0
        %962 = vmatpush2.bf16.msra.mxu0 0
        %963 = vmatprep.subr.bf16.mxu0 0
        %964 = vmatpush2.bf16.msra.mxu0 0
        %965 = vmatprep.subr.bf16.mxu0 0
        %966 = vmatpush2.bf16.msra.mxu0 0
        %967 = vmatprep.subr.bf16.mxu0 0
        %968 = vmatpush2.bf16.msra.mxu0 0
        %969 = vmatprep.subr.bf16.mxu0 0
        %970 = vmatpush2.bf16.msra.mxu0 0
        %971 = vmatprep.subr.bf16.mxu0 0
        %972 = vmatpush2.bf16.msra.mxu0 0
        %973 = vmatprep.subr.bf16.mxu0 0
        %974 = vmatpush2.bf16.msra.mxu0 0
        %975 = vmatprep.subr.bf16.mxu0 0
        %976 = vmatpush2.bf16.msra.mxu0 0
        %977 = vmatprep.mubr.bf16.mxu0 0
        %978 = vmatmul.mubr.bf16.gmra.mxu0 %v893
        %v979 = vpop.f32.mrf.mxu0
        %v980 = vadd.f32 0.0, %v979
        %v981 = vpop.f32.mrf.mxu0
        %v982 = vpop.f32.mrf.mxu0
        %v983 = vadd.f32 0.0, %v982
        %v984 = vpop.f32.mrf.mxu0
        %985 = vmatprep.mubr.bf16.mxu0 0
        %986 = vmatmul.mubr.bf16.gmra.mxu0 %v894
        %v987 = vpop.f32.mrf.mxu0
        %v988 = vadd.f32 0.0, %v987
        %v989 = vpop.f32.mrf.mxu0
        %v990 = vpop.f32.mrf.mxu0
        %v991 = vadd.f32 0.0, %v990
        %v992 = vpop.f32.mrf.mxu0
        %993 = vdwg.mxu0
        %v994 = vadd.f32 %v817, %v980
        %v995 = vadd.f32 %v818, %v983
        %v996 = vadd.f32 %v819, %v988
        %v997 = vadd.f32 %v820, %v991
        %v998 = vld [vmem:[#allocation2] sm:$0xc]
        %v999 = vld [vmem:[#allocation2 + $0xc] sm:$0xc]
        %vm1004 = vcmask 1041408
        %vm1005 = vcmask 1045508
        %vm1006 = vmor %vm1004, %vm1005
        %v1007 = vrot.slane %v998, 6
        %v1008 = vrot.slane %v1007, 4
        %v1009 = vrot.slane %v369, 6
        %v1010 = vsel %vm1006, %v1008, %v1009
        %v1011 = vrot.slane %v1009, 4
        %v1012 = vrot.slane %v821, 6
        %v1013 = vsel %vm1006, %v1011, %v1012
        %v1014 = vrot.slane %v999, 6
        %v1015 = vrot.slane %v1014, 4
        %v1016 = vrot.slane %v371, 6
        %v1017 = vsel %vm1006, %v1015, %v1016
        %v1018 = vrot.slane %v1016, 4
        %v1019 = vrot.slane %v822, 6
        %v1020 = vsel %vm1006, %v1018, %v1019
        %s1021 = scalar_lea.vmem %s1, 256
        %v1022 = vld [vmem:[%s1021] sm:$0xf]
        %v1023 = vld [vmem:[%s1021 + $0x4] sm:$0xf]
        %v1024 = vld [vmem:[%s1021 + $0x8] sm:$0xf]
        %v1025 = vld [vmem:[%s1021 + $0xc] sm:$0xf]
        %v1026 = vld [vmem:[%s1021 + $0x10] sm:$0xf]
        %v1027 = vld [vmem:[%s1021 + $0x14] sm:$0xf]
        %v1028 = vld [vmem:[%s1021 + $0x18] sm:$0xf]
        %v1029 = vld [vmem:[%s1021 + $0x1c] sm:$0xf]
        %v1030 = vld [vmem:[%s1021 + $0x20] sm:$0xf]
        %v1031 = vld [vmem:[%s1021 + $0x24] sm:$0xf]
        %v1032 = vld [vmem:[%s1021 + $0x28] sm:$0xf]
        %v1033 = vld [vmem:[%s1021 + $0x2c] sm:$0xf]
        %v1034 = vld [vmem:[%s1021 + $0x30] sm:$0xf]
        %v1035 = vld [vmem:[%s1021 + $0x34] sm:$0xf]
        %v1036 = vld [vmem:[%s1021 + $0x38] sm:$0xf]
        %v1037 = vld [vmem:[%s1021 + $0x3c] sm:$0xf]
        %v1038 = vunpack.c.l.b16 %v1010
        %v1039 = vunpack.c.l.b16 %v1013
        %v1040 = vunpack.c.l.b16 %v1017
        %v1041 = vunpack.c.l.b16 %v1020
        %v1042 = vpack.c.b16 %v1039, %v1038
        %v1043 = vpack.c.b16 %v1041, %v1040
        %v1062 = vunpack.c.l.b16 %v1022
        %v1063 = vunpack.c.l.b16 %v1023
        %v1064 = vunpack.c.l.b16 %v1024
        %v1065 = vunpack.c.l.b16 %v1025
        %v1066 = vunpack.c.l.b16 %v1026
        %v1067 = vunpack.c.l.b16 %v1027
        %v1068 = vunpack.c.l.b16 %v1028
        %v1069 = vunpack.c.l.b16 %v1029
        %v1070 = vunpack.c.l.b16 %v1030
        %v1071 = vunpack.c.l.b16 %v1031
        %v1072 = vunpack.c.l.b16 %v1032
        %v1073 = vunpack.c.l.b16 %v1033
        %v1074 = vunpack.c.l.b16 %v1034
        %v1075 = vunpack.c.l.b16 %v1035
        %v1076 = vunpack.c.l.b16 %v1036
        %v1077 = vunpack.c.l.b16 %v1037
        %v1078 = vpack.c.b16 %v1063, %v1062
        %v1079 = vpack.c.b16 %v1065, %v1064
        %v1080 = vpack.c.b16 %v1067, %v1066
        %v1081 = vpack.c.b16 %v1069, %v1068
        %v1082 = vpack.c.b16 %v1071, %v1070
        %v1083 = vpack.c.b16 %v1073, %v1072
        %v1084 = vpack.c.b16 %v1075, %v1074
        %v1085 = vpack.c.b16 %v1077, %v1076
        %1094 = vmatprep.subr.bf16.mxu0 0
        %1095 = vmatpush1.bf16.msra.mxu0 %v1085
        %1096 = vmatprep.subr.bf16.mxu0 0
        %1097 = vmatpush1.bf16.msra.mxu0 %v1084
        %1098 = vmatprep.subr.bf16.mxu0 0
        %1099 = vmatpush1.bf16.msra.mxu0 %v1083
        %1100 = vmatprep.subr.bf16.mxu0 0
        %1101 = vmatpush1.bf16.msra.mxu0 %v1082
        %1102 = vmatprep.subr.bf16.mxu0 0
        %1103 = vmatpush1.bf16.msra.mxu0 %v1081
        %1104 = vmatprep.subr.bf16.mxu0 0
        %1105 = vmatpush1.bf16.msra.mxu0 %v1080
        %1106 = vmatprep.subr.bf16.mxu0 0
        %1107 = vmatpush1.bf16.msra.mxu0 %v1079
        %1108 = vmatprep.subr.bf16.mxu0 0
        %1109 = vmatpush1.bf16.msra.mxu0 %v1078
        %1110 = vmatprep.subr.bf16.mxu0 0
        %1111 = vmatpush2.bf16.msra.mxu0 0
        %1112 = vmatprep.subr.bf16.mxu0 0
        %1113 = vmatpush2.bf16.msra.mxu0 0
        %1114 = vmatprep.subr.bf16.mxu0 0
        %1115 = vmatpush2.bf16.msra.mxu0 0
        %1116 = vmatprep.subr.bf16.mxu0 0
        %1117 = vmatpush2.bf16.msra.mxu0 0
        %1118 = vmatprep.subr.bf16.mxu0 0
        %1119 = vmatpush2.bf16.msra.mxu0 0
        %1120 = vmatprep.subr.bf16.mxu0 0
        %1121 = vmatpush2.bf16.msra.mxu0 0
        %1122 = vmatprep.subr.bf16.mxu0 0
        %1123 = vmatpush2.bf16.msra.mxu0 0
        %1124 = vmatprep.subr.bf16.mxu0 0
        %1125 = vmatpush2.bf16.msra.mxu0 0
        %1126 = vmatprep.mubr.bf16.mxu0 0
        %1127 = vmatmul.mubr.bf16.gmra.mxu0 %v1042
        %v1128 = vpop.f32.mrf.mxu0
        %v1129 = vadd.f32 0.0, %v1128
        %v1130 = vpop.f32.mrf.mxu0
        %v1131 = vpop.f32.mrf.mxu0
        %v1132 = vadd.f32 0.0, %v1131
        %v1133 = vpop.f32.mrf.mxu0
        %1134 = vmatprep.mubr.bf16.mxu0 0
        %1135 = vmatmul.mubr.bf16.gmra.mxu0 %v1043
        %v1136 = vpop.f32.mrf.mxu0
        %v1137 = vadd.f32 0.0, %v1136
        %v1138 = vpop.f32.mrf.mxu0
        %v1139 = vpop.f32.mrf.mxu0
        %v1140 = vadd.f32 0.0, %v1139
        %v1141 = vpop.f32.mrf.mxu0
        %1142 = vdwg.mxu0
        %v1143 = vadd.f32 %v994, %v1129
        %v1144 = vadd.f32 %v995, %v1132
        %v1145 = vadd.f32 %v996, %v1137
        %v1146 = vadd.f32 %v997, %v1140
        %v1148 = vlaneseq
        %v1149 = vshrl.u32 %v1148, 7
        %v1150 = vsub.s32 0, %v1149
        %v1151 = vrot.slane %v367, %v1150
        %v1153 = vadd.f32 %v1143, %v1151
        %v1154 = vadd.f32 %v1144, %v1151
        %v1155 = vadd.f32 %v1145, %v1151
        %v1156 = vadd.f32 %v1146, %v1151
        %v1157 = vmax.f32 %v1153, 0.0
        %v1158 = vmax.f32 %v1154, 0.0
        %v1159 = vmax.f32 %v1155, 0.0
        %v1160 = vmax.f32 %v1156, 0.0
        %v1161 = vpack.c.bf16 %v1158, %v1157
        %v1162 = vpack.c.bf16 %v1160, %v1159
        %v1165 = vunpack.c.l.b16 %v1161
        %v1166 = vunpack.c.h.b16 %v1161
        %v1167 = vunpack.c.l.b16 %v1162
        %v1168 = vunpack.c.h.b16 %v1162
        %v1169 = vpack.c.b16 %v1165, %v1165
        %v1170 = vpack.c.b16 %v1166, %v1166
        %v1171 = vpack.c.b16 %v1167, %v1167
        %v1172 = vpack.c.b16 %v1168, %v1168
        %v1173 = vrot.slane %v1169, 7
        %v1174 = vrot.slane %v1173, 4
        %v1175 = vrot.slane %v1170, 7
        %v1176 = vsel %vm344, %v1174, %v1175
        %v1177 = vrot.slane %v1175, 4
        %v1178 = vrot.slane %v1171, 7
        %v1179 = vrot.slane %v1178, 4
        %v1180 = vrot.slane %v1172, 7
        %v1181 = vsel %vm344, %v1179, %v1180
        %v1182 = vrot.slane %v1180, 4
        %1189 = vst [vmem:[#allocation2] sm:$0xe] %v1173
        %1190 = vst [vmem:[#allocation2 + $0x4] sm:$0xf] %v1176
        %1191 = vst [vmem:[#allocation2 + $0x8] sm:$0x1] %v1177
        %1192 = vst [vmem:[#allocation2 + $0xc] sm:$0xe] %v1178
        %1193 = vst [vmem:[#allocation2 + $0x10] sm:$0xf] %v1181
        %1194 = vst [vmem:[#allocation2 + $0x14] sm:$0x1] %v1182
        %v1195 = vld [vmem:[%s4] sm:$0x1]
        %v1196 = vld [vmem:[#allocation2] sm:$0xf]
        %v1197 = vld [vmem:[#allocation2 + $0x4] sm:$0xf]
        %v1198 = vld [vmem:[#allocation2 + $0xc] sm:$0xf]
        %v1199 = vld [vmem:[#allocation2 + $0x10] sm:$0xf]
        %v1200 = vld [vmem:[#allocation3] sm:$0xf]
        %v1201 = vld [vmem:[#allocation3 + $0x4] sm:$0xf]
        %v1202 = vld [vmem:[#allocation3 + $0x8] sm:$0xf]
        %v1203 = vld [vmem:[#allocation3 + $0xc] sm:$0xf]
        %v1204 = vld [vmem:[#allocation3 + $0x10] sm:$0xf]
        %v1205 = vld [vmem:[#allocation3 + $0x14] sm:$0xf]
        %v1206 = vld [vmem:[#allocation3 + $0x18] sm:$0xf]
        %v1207 = vld [vmem:[#allocation3 + $0x1c] sm:$0xf]
        %v1208 = vld [vmem:[#allocation3 + $0x20] sm:$0xf]
        %v1209 = vld [vmem:[#allocation3 + $0x24] sm:$0xf]
        %v1210 = vld [vmem:[#allocation3 + $0x28] sm:$0xf]
        %v1211 = vld [vmem:[#allocation3 + $0x2c] sm:$0xf]
        %v1212 = vld [vmem:[#allocation3 + $0x30] sm:$0xf]
        %v1213 = vld [vmem:[#allocation3 + $0x34] sm:$0xf]
        %v1214 = vld [vmem:[#allocation3 + $0x38] sm:$0xf]
        %v1215 = vld [vmem:[#allocation3 + $0x3c] sm:$0xf]
        %v1216 = vld [vmem:[#allocation2 + $0x8] sm:$0x1]
        %v1217 = vld [vmem:[#allocation2 + $0x14] sm:$0x1]
        %v1219 = vshrl.u32 %v1196, 16
        %v1221 = vrot.slane %v1219, 4
        %v1222 = vshll.u32 %v1196, 16
        %v1224 = vrot.slane %v1222, 5
        %v1225 = vor.u32 %v1221, %v1224
        %v1226 = vrot.slane %v1225, 4
        %v1228 = vshll.u32 %v1197, 16
        %v1230 = vrot.slane %v1228, 5
        %v1231 = vsel %vm392, %v1226, %v1230
        %v1232 = vshrl.u32 %v1197, 16
        %v1234 = vrot.slane %v1232, 4
        %v1235 = vor.u32 %v1234, %v1230
        %v1236 = vrot.slane %v1235, 4
        %v1238 = vshll.u32 %v1216, 16
        %v1240 = vrot.slane %v1238, 5
        %v1241 = vsel %vm392, %v1236, %v1240
        %v1243 = vshrl.u32 %v1198, 16
        %v1245 = vrot.slane %v1243, 4
        %v1246 = vshll.u32 %v1198, 16
        %v1248 = vrot.slane %v1246, 5
        %v1249 = vor.u32 %v1245, %v1248
        %v1250 = vrot.slane %v1249, 4
        %v1252 = vshll.u32 %v1199, 16
        %v1254 = vrot.slane %v1252, 5
        %v1255 = vsel %vm392, %v1250, %v1254
        %v1256 = vshrl.u32 %v1199, 16
        %v1258 = vrot.slane %v1256, 4
        %v1259 = vor.u32 %v1258, %v1254
        %v1260 = vrot.slane %v1259, 4
        %v1262 = vshll.u32 %v1217, 16
        %v1264 = vrot.slane %v1262, 5
        %v1265 = vsel %vm392, %v1260, %v1264
        %s1266 = scalar_lea.vmem [#allocation3], 64
        %v1267 = vld [vmem:[%s1266] sm:$0xf]
        %v1268 = vld [vmem:[%s1266 + $0x4] sm:$0xf]
        %v1269 = vld [vmem:[%s1266 + $0x8] sm:$0xf]
        %v1270 = vld [vmem:[%s1266 + $0xc] sm:$0xf]
        %v1271 = vld [vmem:[%s1266 + $0x10] sm:$0xf]
        %v1272 = vld [vmem:[%s1266 + $0x14] sm:$0xf]
        %v1273 = vld [vmem:[%s1266 + $0x18] sm:$0xf]
        %v1274 = vld [vmem:[%s1266 + $0x1c] sm:$0xf]
        %v1275 = vld [vmem:[%s1266 + $0x20] sm:$0xf]
        %v1276 = vld [vmem:[%s1266 + $0x24] sm:$0xf]
        %v1277 = vld [vmem:[%s1266 + $0x28] sm:$0xf]
        %v1278 = vld [vmem:[%s1266 + $0x2c] sm:$0xf]
        %v1279 = vld [vmem:[%s1266 + $0x30] sm:$0xf]
        %v1280 = vld [vmem:[%s1266 + $0x34] sm:$0xf]
        %v1281 = vld [vmem:[%s1266 + $0x38] sm:$0xf]
        %v1282 = vld [vmem:[%s1266 + $0x3c] sm:$0xf]
        %v1283 = vunpack.c.l.b16 %v1231
        %v1284 = vunpack.c.l.b16 %v1241
        %v1285 = vunpack.c.l.b16 %v1255
        %v1286 = vunpack.c.l.b16 %v1265
        %v1287 = vpack.c.b16 %v1284, %v1283
        %v1288 = vpack.c.b16 %v1286, %v1285
        %v1307 = vunpack.c.l.b16 %v1267
        %v1308 = vunpack.c.l.b16 %v1268
        %v1309 = vunpack.c.l.b16 %v1269
        %v1310 = vunpack.c.l.b16 %v1270
        %v1311 = vunpack.c.l.b16 %v1271
        %v1312 = vunpack.c.l.b16 %v1272
        %v1313 = vunpack.c.l.b16 %v1273
        %v1314 = vunpack.c.l.b16 %v1274
        %v1315 = vunpack.c.l.b16 %v1275
        %v1316 = vunpack.c.l.b16 %v1276
        %v1317 = vunpack.c.l.b16 %v1277
        %v1318 = vunpack.c.l.b16 %v1278
        %v1319 = vunpack.c.l.b16 %v1279
        %v1320 = vunpack.c.l.b16 %v1280
        %v1321 = vunpack.c.l.b16 %v1281
        %v1322 = vunpack.c.l.b16 %v1282
        %v1323 = vpack.c.b16 %v1308, %v1307
        %v1324 = vpack.c.b16 %v1310, %v1309
        %v1325 = vpack.c.b16 %v1312, %v1311
        %v1326 = vpack.c.b16 %v1314, %v1313
        %v1327 = vpack.c.b16 %v1316, %v1315
        %v1328 = vpack.c.b16 %v1318, %v1317
        %v1329 = vpack.c.b16 %v1320, %v1319
        %v1330 = vpack.c.b16 %v1322, %v1321
        %1339 = vmatprep.subr.bf16.mxu0 0
        %1340 = vmatpush1.bf16.msra.mxu0 %v1330
        %1341 = vmatprep.subr.bf16.mxu0 0
        %1342 = vmatpush1.bf16.msra.mxu0 %v1329
        %1343 = vmatprep.subr.bf16.mxu0 0
        %1344 = vmatpush1.bf16.msra.mxu0 %v1328
        %1345 = vmatprep.subr.bf16.mxu0 0
        %1346 = vmatpush1.bf16.msra.mxu0 %v1327
        %1347 = vmatprep.subr.bf16.mxu0 0
        %1348 = vmatpush1.bf16.msra.mxu0 %v1326
        %1349 = vmatprep.subr.bf16.mxu0 0
        %1350 = vmatpush1.bf16.msra.mxu0 %v1325
        %1351 = vmatprep.subr.bf16.mxu0 0
        %1352 = vmatpush1.bf16.msra.mxu0 %v1324
        %1353 = vmatprep.subr.bf16.mxu0 0
        %1354 = vmatpush1.bf16.msra.mxu0 %v1323
        %1355 = vmatprep.subr.bf16.mxu0 0
        %1356 = vmatpush2.bf16.msra.mxu0 0
        %1357 = vmatprep.subr.bf16.mxu0 0
        %1358 = vmatpush2.bf16.msra.mxu0 0
        %1359 = vmatprep.subr.bf16.mxu0 0
        %1360 = vmatpush2.bf16.msra.mxu0 0
        %1361 = vmatprep.subr.bf16.mxu0 0
        %1362 = vmatpush2.bf16.msra.mxu0 0
        %1363 = vmatprep.subr.bf16.mxu0 0
        %1364 = vmatpush2.bf16.msra.mxu0 0
        %1365 = vmatprep.subr.bf16.mxu0 0
        %1366 = vmatpush2.bf16.msra.mxu0 0
        %1367 = vmatprep.subr.bf16.mxu0 0
        %1368 = vmatpush2.bf16.msra.mxu0 0
        %1369 = vmatprep.subr.bf16.mxu0 0
        %1370 = vmatpush2.bf16.msra.mxu0 0
        %1371 = vmatprep.mubr.bf16.mxu0 0
        %1372 = vmatmul.mubr.bf16.gmra.mxu0 %v1287
        %v1373 = vpop.f32.mrf.mxu0
        %v1374 = vadd.f32 0.0, %v1373
        %v1375 = vpop.f32.mrf.mxu0
        %v1376 = vpop.f32.mrf.mxu0
        %v1377 = vadd.f32 0.0, %v1376
        %v1378 = vpop.f32.mrf.mxu0
        %1379 = vmatprep.mubr.bf16.mxu0 0
        %1380 = vmatmul.mubr.bf16.gmra.mxu0 %v1288
        %v1381 = vpop.f32.mrf.mxu0
        %v1382 = vadd.f32 0.0, %v1381
        %v1383 = vpop.f32.mrf.mxu0
        %v1384 = vpop.f32.mrf.mxu0
        %v1385 = vadd.f32 0.0, %v1384
        %v1386 = vpop.f32.mrf.mxu0
        %1387 = vdwg.mxu0
        %v1392 = vunpack.c.l.b16 %v1196
        %v1393 = vunpack.c.l.b16 %v1197
        %v1394 = vunpack.c.l.b16 %v1198
        %v1395 = vunpack.c.l.b16 %v1199
        %v1396 = vpack.c.b16 %v1393, %v1392
        %v1397 = vpack.c.b16 %v1395, %v1394
        %v1416 = vunpack.c.l.b16 %v1200
        %v1417 = vunpack.c.l.b16 %v1201
        %v1418 = vunpack.c.l.b16 %v1202
        %v1419 = vunpack.c.l.b16 %v1203
        %v1420 = vunpack.c.l.b16 %v1204
        %v1421 = vunpack.c.l.b16 %v1205
        %v1422 = vunpack.c.l.b16 %v1206
        %v1423 = vunpack.c.l.b16 %v1207
        %v1424 = vunpack.c.l.b16 %v1208
        %v1425 = vunpack.c.l.b16 %v1209
        %v1426 = vunpack.c.l.b16 %v1210
        %v1427 = vunpack.c.l.b16 %v1211
        %v1428 = vunpack.c.l.b16 %v1212
        %v1429 = vunpack.c.l.b16 %v1213
        %v1430 = vunpack.c.l.b16 %v1214
        %v1431 = vunpack.c.l.b16 %v1215
        %v1432 = vpack.c.b16 %v1417, %v1416
        %v1433 = vpack.c.b16 %v1419, %v1418
        %v1434 = vpack.c.b16 %v1421, %v1420
        %v1435 = vpack.c.b16 %v1423, %v1422
        %v1436 = vpack.c.b16 %v1425, %v1424
        %v1437 = vpack.c.b16 %v1427, %v1426
        %v1438 = vpack.c.b16 %v1429, %v1428
        %v1439 = vpack.c.b16 %v1431, %v1430
        %1448 = vmatprep.subr.bf16.mxu0 0
        %1449 = vmatpush1.bf16.msra.mxu0 %v1439
        %1450 = vmatprep.subr.bf16.mxu0 0
        %1451 = vmatpush1.bf16.msra.mxu0 %v1438
        %1452 = vmatprep.subr.bf16.mxu0 0
        %1453 = vmatpush1.bf16.msra.mxu0 %v1437
        %1454 = vmatprep.subr.bf16.mxu0 0
        %1455 = vmatpush1.bf16.msra.mxu0 %v1436
        %1456 = vmatprep.subr.bf16.mxu0 0
        %1457 = vmatpush1.bf16.msra.mxu0 %v1435
        %1458 = vmatprep.subr.bf16.mxu0 0
        %1459 = vmatpush1.bf16.msra.mxu0 %v1434
        %1460 = vmatprep.subr.bf16.mxu0 0
        %1461 = vmatpush1.bf16.msra.mxu0 %v1433
        %1462 = vmatprep.subr.bf16.mxu0 0
        %1463 = vmatpush1.bf16.msra.mxu0 %v1432
        %1464 = vmatprep.subr.bf16.mxu0 0
        %1465 = vmatpush2.bf16.msra.mxu0 0
        %1466 = vmatprep.subr.bf16.mxu0 0
        %1467 = vmatpush2.bf16.msra.mxu0 0
        %1468 = vmatprep.subr.bf16.mxu0 0
        %1469 = vmatpush2.bf16.msra.mxu0 0
        %1470 = vmatprep.subr.bf16.mxu0 0
        %1471 = vmatpush2.bf16.msra.mxu0 0
        %1472 = vmatprep.subr.bf16.mxu0 0
        %1473 = vmatpush2.bf16.msra.mxu0 0
        %1474 = vmatprep.subr.bf16.mxu0 0
        %1475 = vmatpush2.bf16.msra.mxu0 0
        %1476 = vmatprep.subr.bf16.mxu0 0
        %1477 = vmatpush2.bf16.msra.mxu0 0
        %1478 = vmatprep.subr.bf16.mxu0 0
        %1479 = vmatpush2.bf16.msra.mxu0 0
        %1480 = vmatprep.mubr.bf16.mxu0 0
        %1481 = vmatmul.mubr.bf16.gmra.mxu0 %v1396
        %v1482 = vpop.f32.mrf.mxu0
        %v1483 = vadd.f32 %v1374, %v1482
        %v1484 = vpop.f32.mrf.mxu0
        %v1485 = vpop.f32.mrf.mxu0
        %v1486 = vadd.f32 %v1377, %v1485
        %v1487 = vpop.f32.mrf.mxu0
        %1488 = vmatprep.mubr.bf16.mxu0 0
        %1489 = vmatmul.mubr.bf16.gmra.mxu0 %v1397
        %v1490 = vpop.f32.mrf.mxu0
        %v1491 = vadd.f32 %v1382, %v1490
        %v1492 = vpop.f32.mrf.mxu0
        %v1493 = vpop.f32.mrf.mxu0
        %v1494 = vadd.f32 %v1385, %v1493
        %v1495 = vpop.f32.mrf.mxu0
        %1496 = vdwg.mxu0
        %v1497 = vld [vmem:[#allocation2] sm:$0xe]
        %v1498 = vld [vmem:[#allocation2 + $0xc] sm:$0xe]
        %v1503 = vrot.slane %v1497, 5
        %v1504 = vrot.slane %v1503, 4
        %v1505 = vrot.slane %v1197, 5
        %v1506 = vsel %vm680, %v1504, %v1505
        %v1507 = vrot.slane %v1505, 4
        %v1508 = vrot.slane %v1216, 5
        %v1509 = vsel %vm680, %v1507, %v1508
        %v1510 = vrot.slane %v1498, 5
        %v1511 = vrot.slane %v1510, 4
        %v1512 = vrot.slane %v1199, 5
        %v1513 = vsel %vm680, %v1511, %v1512
        %v1514 = vrot.slane %v1512, 4
        %v1515 = vrot.slane %v1217, 5
        %v1516 = vsel %vm680, %v1514, %v1515
        %s1517 = scalar_lea.vmem [#allocation3], 128
        %v1518 = vld [vmem:[%s1517] sm:$0xf]
        %v1519 = vld [vmem:[%s1517 + $0x4] sm:$0xf]
        %v1520 = vld [vmem:[%s1517 + $0x8] sm:$0xf]
        %v1521 = vld [vmem:[%s1517 + $0xc] sm:$0xf]
        %v1522 = vld [vmem:[%s1517 + $0x10] sm:$0xf]
        %v1523 = vld [vmem:[%s1517 + $0x14] sm:$0xf]
        %v1524 = vld [vmem:[%s1517 + $0x18] sm:$0xf]
        %v1525 = vld [vmem:[%s1517 + $0x1c] sm:$0xf]
        %v1526 = vld [vmem:[%s1517 + $0x20] sm:$0xf]
        %v1527 = vld [vmem:[%s1517 + $0x24] sm:$0xf]
        %v1528 = vld [vmem:[%s1517 + $0x28] sm:$0xf]
        %v1529 = vld [vmem:[%s1517 + $0x2c] sm:$0xf]
        %v1530 = vld [vmem:[%s1517 + $0x30] sm:$0xf]
        %v1531 = vld [vmem:[%s1517 + $0x34] sm:$0xf]
        %v1532 = vld [vmem:[%s1517 + $0x38] sm:$0xf]
        %v1533 = vld [vmem:[%s1517 + $0x3c] sm:$0xf]
        %v1534 = vunpack.c.l.b16 %v1506
        %v1535 = vunpack.c.l.b16 %v1509
        %v1536 = vunpack.c.l.b16 %v1513
        %v1537 = vunpack.c.l.b16 %v1516
        %v1538 = vpack.c.b16 %v1535, %v1534
        %v1539 = vpack.c.b16 %v1537, %v1536
        %v1558 = vunpack.c.l.b16 %v1518
        %v1559 = vunpack.c.l.b16 %v1519
        %v1560 = vunpack.c.l.b16 %v1520
        %v1561 = vunpack.c.l.b16 %v1521
        %v1562 = vunpack.c.l.b16 %v1522
        %v1563 = vunpack.c.l.b16 %v1523
        %v1564 = vunpack.c.l.b16 %v1524
        %v1565 = vunpack.c.l.b16 %v1525
        %v1566 = vunpack.c.l.b16 %v1526
        %v1567 = vunpack.c.l.b16 %v1527
        %v1568 = vunpack.c.l.b16 %v1528
        %v1569 = vunpack.c.l.b16 %v1529
        %v1570 = vunpack.c.l.b16 %v1530
        %v1571 = vunpack.c.l.b16 %v1531
        %v1572 = vunpack.c.l.b16 %v1532
        %v1573 = vunpack.c.l.b16 %v1533
        %v1574 = vpack.c.b16 %v1559, %v1558
        %v1575 = vpack.c.b16 %v1561, %v1560
        %v1576 = vpack.c.b16 %v1563, %v1562
        %v1577 = vpack.c.b16 %v1565, %v1564
        %v1578 = vpack.c.b16 %v1567, %v1566
        %v1579 = vpack.c.b16 %v1569, %v1568
        %v1580 = vpack.c.b16 %v1571, %v1570
        %v1581 = vpack.c.b16 %v1573, %v1572
        %1590 = vmatprep.subr.bf16.mxu0 0
        %1591 = vmatpush1.bf16.msra.mxu0 %v1581
        %1592 = vmatprep.subr.bf16.mxu0 0
        %1593 = vmatpush1.bf16.msra.mxu0 %v1580
        %1594 = vmatprep.subr.bf16.mxu0 0
        %1595 = vmatpush1.bf16.msra.mxu0 %v1579
        %1596 = vmatprep.subr.bf16.mxu0 0
        %1597 = vmatpush1.bf16.msra.mxu0 %v1578
        %1598 = vmatprep.subr.bf16.mxu0 0
        %1599 = vmatpush1.bf16.msra.mxu0 %v1577
        %1600 = vmatprep.subr.bf16.mxu0 0
        %1601 = vmatpush1.bf16.msra.mxu0 %v1576
        %1602 = vmatprep.subr.bf16.mxu0 0
        %1603 = vmatpush1.bf16.msra.mxu0 %v1575
        %1604 = vmatprep.subr.bf16.mxu0 0
        %1605 = vmatpush1.bf16.msra.mxu0 %v1574
        %1606 = vmatprep.subr.bf16.mxu0 0
        %1607 = vmatpush2.bf16.msra.mxu0 0
        %1608 = vmatprep.subr.bf16.mxu0 0
        %1609 = vmatpush2.bf16.msra.mxu0 0
        %1610 = vmatprep.subr.bf16.mxu0 0
        %1611 = vmatpush2.bf16.msra.mxu0 0
        %1612 = vmatprep.subr.bf16.mxu0 0
        %1613 = vmatpush2.bf16.msra.mxu0 0
        %1614 = vmatprep.subr.bf16.mxu0 0
        %1615 = vmatpush2.bf16.msra.mxu0 0
        %1616 = vmatprep.subr.bf16.mxu0 0
        %1617 = vmatpush2.bf16.msra.mxu0 0
        %1618 = vmatprep.subr.bf16.mxu0 0
        %1619 = vmatpush2.bf16.msra.mxu0 0
        %1620 = vmatprep.subr.bf16.mxu0 0
        %1621 = vmatpush2.bf16.msra.mxu0 0
        %1622 = vmatprep.mubr.bf16.mxu0 0
        %1623 = vmatmul.mubr.bf16.gmra.mxu0 %v1538
        %v1624 = vpop.f32.mrf.mxu0
        %v1625 = vadd.f32 0.0, %v1624
        %v1626 = vpop.f32.mrf.mxu0
        %v1627 = vpop.f32.mrf.mxu0
        %v1628 = vadd.f32 0.0, %v1627
        %v1629 = vpop.f32.mrf.mxu0
        %1630 = vmatprep.mubr.bf16.mxu0 0
        %1631 = vmatmul.mubr.bf16.gmra.mxu0 %v1539
        %v1632 = vpop.f32.mrf.mxu0
        %v1633 = vadd.f32 0.0, %v1632
        %v1634 = vpop.f32.mrf.mxu0
        %v1635 = vpop.f32.mrf.mxu0
        %v1636 = vadd.f32 0.0, %v1635
        %v1637 = vpop.f32.mrf.mxu0
        %1638 = vdwg.mxu0
        %v1639 = vadd.f32 %v1483, %v1625
        %v1640 = vadd.f32 %v1486, %v1628
        %v1641 = vadd.f32 %v1491, %v1633
        %v1642 = vadd.f32 %v1494, %v1636
        %v1643 = vld [vmem:[#allocation2 + $0x8] sm:$0x3]
        %v1644 = vld [vmem:[#allocation2 + $0x14] sm:$0x3]
        %v1646 = vshrl.u32 %v1497, 16
        %v1648 = vrot.slane %v1646, 5
        %v1649 = vshll.u32 %v1497, 16
        %v1651 = vrot.slane %v1649, 6
        %v1652 = vor.u32 %v1648, %v1651
        %v1653 = vrot.slane %v1652, 4
        %v1654 = vrot.slane %v1232, 5
        %v1655 = vrot.slane %v1228, 6
        %v1656 = vor.u32 %v1654, %v1655
        %v1657 = vsel %vm825, %v1653, %v1656
        %v1658 = vrot.slane %v1656, 4
        %v1660 = vshrl.u32 %v1643, 16
        %v1662 = vrot.slane %v1660, 5
        %v1663 = vshll.u32 %v1643, 16
        %v1665 = vrot.slane %v1663, 6
        %v1666 = vor.u32 %v1662, %v1665
        %v1667 = vsel %vm825, %v1658, %v1666
        %v1669 = vshrl.u32 %v1498, 16
        %v1671 = vrot.slane %v1669, 5
        %v1672 = vshll.u32 %v1498, 16
        %v1674 = vrot.slane %v1672, 6
        %v1675 = vor.u32 %v1671, %v1674
        %v1676 = vrot.slane %v1675, 4
        %v1677 = vrot.slane %v1256, 5
        %v1678 = vrot.slane %v1252, 6
        %v1679 = vor.u32 %v1677, %v1678
        %v1680 = vsel %vm825, %v1676, %v1679
        %v1681 = vrot.slane %v1679, 4
        %v1683 = vshrl.u32 %v1644, 16
        %v1685 = vrot.slane %v1683, 5
        %v1686 = vshll.u32 %v1644, 16
        %v1688 = vrot.slane %v1686, 6
        %v1689 = vor.u32 %v1685, %v1688
        %v1690 = vsel %vm825, %v1681, %v1689
        %s1691 = scalar_lea.vmem [#allocation3], 192
        %v1692 = vld [vmem:[%s1691] sm:$0xf]
        %v1693 = vld [vmem:[%s1691 + $0x4] sm:$0xf]
        %v1694 = vld [vmem:[%s1691 + $0x8] sm:$0xf]
        %v1695 = vld [vmem:[%s1691 + $0xc] sm:$0xf]
        %v1696 = vld [vmem:[%s1691 + $0x10] sm:$0xf]
        %v1697 = vld [vmem:[%s1691 + $0x14] sm:$0xf]
        %v1698 = vld [vmem:[%s1691 + $0x18] sm:$0xf]
        %v1699 = vld [vmem:[%s1691 + $0x1c] sm:$0xf]
        %v1700 = vld [vmem:[%s1691 + $0x20] sm:$0xf]
        %v1701 = vld [vmem:[%s1691 + $0x24] sm:$0xf]
        %v1702 = vld [vmem:[%s1691 + $0x28] sm:$0xf]
        %v1703 = vld [vmem:[%s1691 + $0x2c] sm:$0xf]
        %v1704 = vld [vmem:[%s1691 + $0x30] sm:$0xf]
        %v1705 = vld [vmem:[%s1691 + $0x34] sm:$0xf]
        %v1706 = vld [vmem:[%s1691 + $0x38] sm:$0xf]
        %v1707 = vld [vmem:[%s1691 + $0x3c] sm:$0xf]
        %v1708 = vunpack.c.l.b16 %v1657
        %v1709 = vunpack.c.l.b16 %v1667
        %v1710 = vunpack.c.l.b16 %v1680
        %v1711 = vunpack.c.l.b16 %v1690
        %v1712 = vpack.c.b16 %v1709, %v1708
        %v1713 = vpack.c.b16 %v1711, %v1710
        %v1732 = vunpack.c.l.b16 %v1692
        %v1733 = vunpack.c.l.b16 %v1693
        %v1734 = vunpack.c.l.b16 %v1694
        %v1735 = vunpack.c.l.b16 %v1695
        %v1736 = vunpack.c.l.b16 %v1696
        %v1737 = vunpack.c.l.b16 %v1697
        %v1738 = vunpack.c.l.b16 %v1698
        %v1739 = vunpack.c.l.b16 %v1699
        %v1740 = vunpack.c.l.b16 %v1700
        %v1741 = vunpack.c.l.b16 %v1701
        %v1742 = vunpack.c.l.b16 %v1702
        %v1743 = vunpack.c.l.b16 %v1703
        %v1744 = vunpack.c.l.b16 %v1704
        %v1745 = vunpack.c.l.b16 %v1705
        %v1746 = vunpack.c.l.b16 %v1706
        %v1747 = vunpack.c.l.b16 %v1707
        %v1748 = vpack.c.b16 %v1733, %v1732
        %v1749 = vpack.c.b16 %v1735, %v1734
        %v1750 = vpack.c.b16 %v1737, %v1736
        %v1751 = vpack.c.b16 %v1739, %v1738
        %v1752 = vpack.c.b16 %v1741, %v1740
        %v1753 = vpack.c.b16 %v1743, %v1742
        %v1754 = vpack.c.b16 %v1745, %v1744
        %v1755 = vpack.c.b16 %v1747, %v1746
        %1764 = vmatprep.subr.bf16.mxu0 0
        %1765 = vmatpush1.bf16.msra.mxu0 %v1755
        %1766 = vmatprep.subr.bf16.mxu0 0
        %1767 = vmatpush1.bf16.msra.mxu0 %v1754
        %1768 = vmatprep.subr.bf16.mxu0 0
        %1769 = vmatpush1.bf16.msra.mxu0 %v1753
        %1770 = vmatprep.subr.bf16.mxu0 0
        %1771 = vmatpush1.bf16.msra.mxu0 %v1752
        %1772 = vmatprep.subr.bf16.mxu0 0
        %1773 = vmatpush1.bf16.msra.mxu0 %v1751
        %1774 = vmatprep.subr.bf16.mxu0 0
        %1775 = vmatpush1.bf16.msra.mxu0 %v1750
        %1776 = vmatprep.subr.bf16.mxu0 0
        %1777 = vmatpush1.bf16.msra.mxu0 %v1749
        %1778 = vmatprep.subr.bf16.mxu0 0
        %1779 = vmatpush1.bf16.msra.mxu0 %v1748
        %1780 = vmatprep.subr.bf16.mxu0 0
        %1781 = vmatpush2.bf16.msra.mxu0 0
        %1782 = vmatprep.subr.bf16.mxu0 0
        %1783 = vmatpush2.bf16.msra.mxu0 0
        %1784 = vmatprep.subr.bf16.mxu0 0
        %1785 = vmatpush2.bf16.msra.mxu0 0
        %1786 = vmatprep.subr.bf16.mxu0 0
        %1787 = vmatpush2.bf16.msra.mxu0 0
        %1788 = vmatprep.subr.bf16.mxu0 0
        %1789 = vmatpush2.bf16.msra.mxu0 0
        %1790 = vmatprep.subr.bf16.mxu0 0
        %1791 = vmatpush2.bf16.msra.mxu0 0
        %1792 = vmatprep.subr.bf16.mxu0 0
        %1793 = vmatpush2.bf16.msra.mxu0 0
        %1794 = vmatprep.subr.bf16.mxu0 0
        %1795 = vmatpush2.bf16.msra.mxu0 0
        %1796 = vmatprep.mubr.bf16.mxu0 0
        %1797 = vmatmul.mubr.bf16.gmra.mxu0 %v1712
        %v1798 = vpop.f32.mrf.mxu0
        %v1799 = vadd.f32 0.0, %v1798
        %v1800 = vpop.f32.mrf.mxu0
        %v1801 = vpop.f32.mrf.mxu0
        %v1802 = vadd.f32 0.0, %v1801
        %v1803 = vpop.f32.mrf.mxu0
        %1804 = vmatprep.mubr.bf16.mxu0 0
        %1805 = vmatmul.mubr.bf16.gmra.mxu0 %v1713
        %v1806 = vpop.f32.mrf.mxu0
        %v1807 = vadd.f32 0.0, %v1806
        %v1808 = vpop.f32.mrf.mxu0
        %v1809 = vpop.f32.mrf.mxu0
        %v1810 = vadd.f32 0.0, %v1809
        %v1811 = vpop.f32.mrf.mxu0
        %1812 = vdwg.mxu0
        %v1813 = vadd.f32 %v1639, %v1799
        %v1814 = vadd.f32 %v1640, %v1802
        %v1815 = vadd.f32 %v1641, %v1807
        %v1816 = vadd.f32 %v1642, %v1810
        %v1817 = vld [vmem:[#allocation2] sm:$0xc]
        %v1818 = vld [vmem:[#allocation2 + $0xc] sm:$0xc]
        %v1823 = vrot.slane %v1817, 6
        %v1824 = vrot.slane %v1823, 4
        %v1825 = vrot.slane %v1197, 6
        %v1826 = vsel %vm1006, %v1824, %v1825
        %v1827 = vrot.slane %v1825, 4
        %v1828 = vrot.slane %v1643, 6
        %v1829 = vsel %vm1006, %v1827, %v1828
        %v1830 = vrot.slane %v1818, 6
        %v1831 = vrot.slane %v1830, 4
        %v1832 = vrot.slane %v1199, 6
        %v1833 = vsel %vm1006, %v1831, %v1832
        %v1834 = vrot.slane %v1832, 4
        %v1835 = vrot.slane %v1644, 6
        %v1836 = vsel %vm1006, %v1834, %v1835
        %s1837 = scalar_lea.vmem [#allocation3], 256
        %v1838 = vld [vmem:[%s1837] sm:$0xf]
        %v1839 = vld [vmem:[%s1837 + $0x4] sm:$0xf]
        %v1840 = vld [vmem:[%s1837 + $0x8] sm:$0xf]
        %v1841 = vld [vmem:[%s1837 + $0xc] sm:$0xf]
        %v1842 = vld [vmem:[%s1837 + $0x10] sm:$0xf]
        %v1843 = vld [vmem:[%s1837 + $0x14] sm:$0xf]
        %v1844 = vld [vmem:[%s1837 + $0x18] sm:$0xf]
        %v1845 = vld [vmem:[%s1837 + $0x1c] sm:$0xf]
        %v1846 = vld [vmem:[%s1837 + $0x20] sm:$0xf]
        %v1847 = vld [vmem:[%s1837 + $0x24] sm:$0xf]
        %v1848 = vld [vmem:[%s1837 + $0x28] sm:$0xf]
        %v1849 = vld [vmem:[%s1837 + $0x2c] sm:$0xf]
        %v1850 = vld [vmem:[%s1837 + $0x30] sm:$0xf]
        %v1851 = vld [vmem:[%s1837 + $0x34] sm:$0xf]
        %v1852 = vld [vmem:[%s1837 + $0x38] sm:$0xf]
        %v1853 = vld [vmem:[%s1837 + $0x3c] sm:$0xf]
        %v1854 = vunpack.c.l.b16 %v1826
        %v1855 = vunpack.c.l.b16 %v1829
        %v1856 = vunpack.c.l.b16 %v1833
        %v1857 = vunpack.c.l.b16 %v1836
        %v1858 = vpack.c.b16 %v1855, %v1854
        %v1859 = vpack.c.b16 %v1857, %v1856
        %v1878 = vunpack.c.l.b16 %v1838
        %v1879 = vunpack.c.l.b16 %v1839
        %v1880 = vunpack.c.l.b16 %v1840
        %v1881 = vunpack.c.l.b16 %v1841
        %v1882 = vunpack.c.l.b16 %v1842
        %v1883 = vunpack.c.l.b16 %v1843
        %v1884 = vunpack.c.l.b16 %v1844
        %v1885 = vunpack.c.l.b16 %v1845
        %v1886 = vunpack.c.l.b16 %v1846
        %v1887 = vunpack.c.l.b16 %v1847
        %v1888 = vunpack.c.l.b16 %v1848
        %v1889 = vunpack.c.l.b16 %v1849
        %v1890 = vunpack.c.l.b16 %v1850
        %v1891 = vunpack.c.l.b16 %v1851
        %v1892 = vunpack.c.l.b16 %v1852
        %v1893 = vunpack.c.l.b16 %v1853
        %v1894 = vpack.c.b16 %v1879, %v1878
        %v1895 = vpack.c.b16 %v1881, %v1880
        %v1896 = vpack.c.b16 %v1883, %v1882
        %v1897 = vpack.c.b16 %v1885, %v1884
        %v1898 = vpack.c.b16 %v1887, %v1886
        %v1899 = vpack.c.b16 %v1889, %v1888
        %v1900 = vpack.c.b16 %v1891, %v1890
        %v1901 = vpack.c.b16 %v1893, %v1892
        %1910 = vmatprep.subr.bf16.mxu0 0
        %1911 = vmatpush1.bf16.msra.mxu0 %v1901
        %1912 = vmatprep.subr.bf16.mxu0 0
        %1913 = vmatpush1.bf16.msra.mxu0 %v1900
        %1914 = vmatprep.subr.bf16.mxu0 0
        %1915 = vmatpush1.bf16.msra.mxu0 %v1899
        %1916 = vmatprep.subr.bf16.mxu0 0
        %1917 = vmatpush1.bf16.msra.mxu0 %v1898
        %1918 = vmatprep.subr.bf16.mxu0 0
        %1919 = vmatpush1.bf16.msra.mxu0 %v1897
        %1920 = vmatprep.subr.bf16.mxu0 0
        %1921 = vmatpush1.bf16.msra.mxu0 %v1896
        %1922 = vmatprep.subr.bf16.mxu0 0
        %1923 = vmatpush1.bf16.msra.mxu0 %v1895
        %1924 = vmatprep.subr.bf16.mxu0 0
        %1925 = vmatpush1.bf16.msra.mxu0 %v1894
        %1926 = vmatprep.subr.bf16.mxu0 0
        %1927 = vmatpush2.bf16.msra.mxu0 0
        %1928 = vmatprep.subr.bf16.mxu0 0
        %1929 = vmatpush2.bf16.msra.mxu0 0
        %1930 = vmatprep.subr.bf16.mxu0 0
        %1931 = vmatpush2.bf16.msra.mxu0 0
        %1932 = vmatprep.subr.bf16.mxu0 0
        %1933 = vmatpush2.bf16.msra.mxu0 0
        %1934 = vmatprep.subr.bf16.mxu0 0
        %1935 = vmatpush2.bf16.msra.mxu0 0
        %1936 = vmatprep.subr.bf16.mxu0 0
        %1937 = vmatpush2.bf16.msra.mxu0 0
        %1938 = vmatprep.subr.bf16.mxu0 0
        %1939 = vmatpush2.bf16.msra.mxu0 0
        %1940 = vmatprep.subr.bf16.mxu0 0
        %1941 = vmatpush2.bf16.msra.mxu0 0
        %1942 = vmatprep.mubr.bf16.mxu0 0
        %1943 = vmatmul.mubr.bf16.gmra.mxu0 %v1858
        %v1944 = vpop.f32.mrf.mxu0
        %v1945 = vadd.f32 0.0, %v1944
        %v1946 = vpop.f32.mrf.mxu0
        %v1947 = vpop.f32.mrf.mxu0
        %v1948 = vadd.f32 0.0, %v1947
        %v1949 = vpop.f32.mrf.mxu0
        %1950 = vmatprep.mubr.bf16.mxu0 0
        %1951 = vmatmul.mubr.bf16.gmra.mxu0 %v1859
        %v1952 = vpop.f32.mrf.mxu0
        %v1953 = vadd.f32 0.0, %v1952
        %v1954 = vpop.f32.mrf.mxu0
        %v1955 = vpop.f32.mrf.mxu0
        %v1956 = vadd.f32 0.0, %v1955
        %v1957 = vpop.f32.mrf.mxu0
        %1958 = vdwg.mxu0
        %v1959 = vadd.f32 %v1813, %v1945
        %v1960 = vadd.f32 %v1814, %v1948
        %v1961 = vadd.f32 %v1815, %v1953
        %v1962 = vadd.f32 %v1816, %v1956
        %v1964 = vlaneseq
        %v1965 = vshrl.u32 %v1964, 7
        %v1966 = vsub.s32 0, %v1965
        %v1967 = vrot.slane %v1195, %v1966
        %v1969 = vadd.f32 %v1959, %v1967
        %v1970 = vadd.f32 %v1960, %v1967
        %v1971 = vadd.f32 %v1961, %v1967
        %v1972 = vadd.f32 %v1962, %v1967
        %v1973 = vadd.f32 %v326, %v1969
        %v1974 = vadd.f32 %v327, %v1970
        %v1975 = vadd.f32 %v328, %v1971
        %v1976 = vadd.f32 %v329, %v1972
        %v1977 = vpack.c.bf16 %v1974, %v1973
        %v1978 = vpack.c.bf16 %v1976, %v1975
        %v1981 = vunpack.c.l.b16 %v1977
        %v1982 = vunpack.c.h.b16 %v1977
        %v1983 = vunpack.c.l.b16 %v1978
        %v1984 = vunpack.c.h.b16 %v1978
        %v1985 = vpack.c.b16 %v1981, %v1981
        %v1986 = vpack.c.b16 %v1982, %v1982
        %v1987 = vpack.c.b16 %v1983, %v1983
        %v1988 = vpack.c.b16 %v1984, %v1984
        %v1989 = vrot.slane %v1985, 7
        %v1990 = vrot.slane %v1989, 4
        %v1991 = vrot.slane %v1986, 7
        %v1992 = vsel %vm344, %v1990, %v1991
        %v1993 = vrot.slane %v1991, 4
        %v1994 = vrot.slane %v1987, 7
        %v1995 = vrot.slane %v1994, 4
        %v1996 = vrot.slane %v1988, 7
        %v1997 = vsel %vm344, %v1995, %v1996
        %v1998 = vrot.slane %v1996, 4
        %2005 = vst [vmem:[#allocation2] sm:$0xe] %v1989
        %2006 = vst [vmem:[#allocation2 + $0x4] sm:$0xf] %v1992
        %2007 = vst [vmem:[#allocation2 + $0x8] sm:$0x1] %v1993
        %2008 = vst [vmem:[#allocation2 + $0xc] sm:$0xe] %v1994
        %2009 = vst [vmem:[#allocation2 + $0x10] sm:$0xf] %v1997
        %2010 = vst [vmem:[#allocation2 + $0x14] sm:$0x1] %v1998
        %s2011 = scalar_lea.vmem %s2, 1
        %v2012 = vld [vmem:[%s2011] sm:$0x1]
        %v2013 = vld [vmem:[#allocation2] sm:$0xf]
        %v2014 = vld [vmem:[#allocation2 + $0x4] sm:$0xf]
        %v2015 = vld [vmem:[#allocation2 + $0xc] sm:$0xf]
        %v2016 = vld [vmem:[#allocation2 + $0x10] sm:$0xf]
        %s2017 = scalar_lea.vmem %s1, 320
        %v2018 = vld [vmem:[%s2017] sm:$0xf]
        %v2019 = vld [vmem:[%s2017 + $0x4] sm:$0xf]
        %v2020 = vld [vmem:[%s2017 + $0x8] sm:$0xf]
        %v2021 = vld [vmem:[%s2017 + $0xc] sm:$0xf]
        %v2022 = vld [vmem:[%s2017 + $0x10] sm:$0xf]
        %v2023 = vld [vmem:[%s2017 + $0x14] sm:$0xf]
        %v2024 = vld [vmem:[%s2017 + $0x18] sm:$0xf]
        %v2025 = vld [vmem:[%s2017 + $0x1c] sm:$0xf]
        %v2026 = vld [vmem:[%s2017 + $0x20] sm:$0xf]
        %v2027 = vld [vmem:[%s2017 + $0x24] sm:$0xf]
        %v2028 = vld [vmem:[%s2017 + $0x28] sm:$0xf]
        %v2029 = vld [vmem:[%s2017 + $0x2c] sm:$0xf]
        %v2030 = vld [vmem:[%s2017 + $0x30] sm:$0xf]
        %v2031 = vld [vmem:[%s2017 + $0x34] sm:$0xf]
        %v2032 = vld [vmem:[%s2017 + $0x38] sm:$0xf]
        %v2033 = vld [vmem:[%s2017 + $0x3c] sm:$0xf]
        %v2034 = vld [vmem:[#allocation2 + $0x8] sm:$0x1]
        %v2035 = vld [vmem:[#allocation2 + $0x14] sm:$0x1]
        %v2037 = vshrl.u32 %v2013, 16
        %v2039 = vrot.slane %v2037, 4
        %v2040 = vshll.u32 %v2013, 16
        %v2042 = vrot.slane %v2040, 5
        %v2043 = vor.u32 %v2039, %v2042
        %v2044 = vrot.slane %v2043, 4
        %v2046 = vshll.u32 %v2014, 16
        %v2048 = vrot.slane %v2046, 5
        %v2049 = vsel %vm392, %v2044, %v2048
        %v2050 = vshrl.u32 %v2014, 16
        %v2052 = vrot.slane %v2050, 4
        %v2053 = vor.u32 %v2052, %v2048
        %v2054 = vrot.slane %v2053, 4
        %v2056 = vshll.u32 %v2034, 16
        %v2058 = vrot.slane %v2056, 5
        %v2059 = vsel %vm392, %v2054, %v2058
        %v2061 = vshrl.u32 %v2015, 16
        %v2063 = vrot.slane %v2061, 4
        %v2064 = vshll.u32 %v2015, 16
        %v2066 = vrot.slane %v2064, 5
        %v2067 = vor.u32 %v2063, %v2066
        %v2068 = vrot.slane %v2067, 4
        %v2070 = vshll.u32 %v2016, 16
        %v2072 = vrot.slane %v2070, 5
        %v2073 = vsel %vm392, %v2068, %v2072
        %v2074 = vshrl.u32 %v2016, 16
        %v2076 = vrot.slane %v2074, 4
        %v2077 = vor.u32 %v2076, %v2072
        %v2078 = vrot.slane %v2077, 4
        %v2080 = vshll.u32 %v2035, 16
        %v2082 = vrot.slane %v2080, 5
        %v2083 = vsel %vm392, %v2078, %v2082
        %s2084 = scalar_lea.vmem %s1, 384
        %v2085 = vld [vmem:[%s2084] sm:$0xf]
        %v2086 = vld [vmem:[%s2084 + $0x4] sm:$0xf]
        %v2087 = vld [vmem:[%s2084 + $0x8] sm:$0xf]
        %v2088 = vld [vmem:[%s2084 + $0xc] sm:$0xf]
        %v2089 = vld [vmem:[%s2084 + $0x10] sm:$0xf]
        %v2090 = vld [vmem:[%s2084 + $0x14] sm:$0xf]
        %v2091 = vld [vmem:[%s2084 + $0x18] sm:$0xf]
        %v2092 = vld [vmem:[%s2084 + $0x1c] sm:$0xf]
        %v2093 = vld [vmem:[%s2084 + $0x20] sm:$0xf]
        %v2094 = vld [vmem:[%s2084 + $0x24] sm:$0xf]
        %v2095 = vld [vmem:[%s2084 + $0x28] sm:$0xf]
        %v2096 = vld [vmem:[%s2084 + $0x2c] sm:$0xf]
        %v2097 = vld [vmem:[%s2084 + $0x30] sm:$0xf]
        %v2098 = vld [vmem:[%s2084 + $0x34] sm:$0xf]
        %v2099 = vld [vmem:[%s2084 + $0x38] sm:$0xf]
        %v2100 = vld [vmem:[%s2084 + $0x3c] sm:$0xf]
        %v2101 = vunpack.c.l.b16 %v2049
        %v2102 = vunpack.c.l.b16 %v2059
        %v2103 = vunpack.c.l.b16 %v2073
        %v2104 = vunpack.c.l.b16 %v2083
        %v2105 = vpack.c.b16 %v2102, %v2101
        %v2106 = vpack.c.b16 %v2104, %v2103
        %v2125 = vunpack.c.l.b16 %v2085
        %v2126 = vunpack.c.l.b16 %v2086
        %v2127 = vunpack.c.l.b16 %v2087
        %v2128 = vunpack.c.l.b16 %v2088
        %v2129 = vunpack.c.l.b16 %v2089
        %v2130 = vunpack.c.l.b16 %v2090
        %v2131 = vunpack.c.l.b16 %v2091
        %v2132 = vunpack.c.l.b16 %v2092
        %v2133 = vunpack.c.l.b16 %v2093
        %v2134 = vunpack.c.l.b16 %v2094
        %v2135 = vunpack.c.l.b16 %v2095
        %v2136 = vunpack.c.l.b16 %v2096
        %v2137 = vunpack.c.l.b16 %v2097
        %v2138 = vunpack.c.l.b16 %v2098
        %v2139 = vunpack.c.l.b16 %v2099
        %v2140 = vunpack.c.l.b16 %v2100
        %v2141 = vpack.c.b16 %v2126, %v2125
        %v2142 = vpack.c.b16 %v2128, %v2127
        %v2143 = vpack.c.b16 %v2130, %v2129
        %v2144 = vpack.c.b16 %v2132, %v2131
        %v2145 = vpack.c.b16 %v2134, %v2133
        %v2146 = vpack.c.b16 %v2136, %v2135
        %v2147 = vpack.c.b16 %v2138, %v2137
        %v2148 = vpack.c.b16 %v2140, %v2139
        %2157 = vmatprep.subr.bf16.mxu0 0
        %2158 = vmatpush1.bf16.msra.mxu0 %v2148
        %2159 = vmatprep.subr.bf16.mxu0 0
        %2160 = vmatpush1.bf16.msra.mxu0 %v2147
        %2161 = vmatprep.subr.bf16.mxu0 0
        %2162 = vmatpush1.bf16.msra.mxu0 %v2146
        %2163 = vmatprep.subr.bf16.mxu0 0
        %2164 = vmatpush1.bf16.msra.mxu0 %v2145
        %2165 = vmatprep.subr.bf16.mxu0 0
        %2166 = vmatpush1.bf16.msra.mxu0 %v2144
        %2167 = vmatprep.subr.bf16.mxu0 0
        %2168 = vmatpush1.bf16.msra.mxu0 %v2143
        %2169 = vmatprep.subr.bf16.mxu0 0
        %2170 = vmatpush1.bf16.msra.mxu0 %v2142
        %2171 = vmatprep.subr.bf16.mxu0 0
        %2172 = vmatpush1.bf16.msra.mxu0 %v2141
        %2173 = vmatprep.subr.bf16.mxu0 0
        %2174 = vmatpush2.bf16.msra.mxu0 0
        %2175 = vmatprep.subr.bf16.mxu0 0
        %2176 = vmatpush2.bf16.msra.mxu0 0
        %2177 = vmatprep.subr.bf16.mxu0 0
        %2178 = vmatpush2.bf16.msra.mxu0 0
        %2179 = vmatprep.subr.bf16.mxu0 0
        %2180 = vmatpush2.bf16.msra.mxu0 0
        %2181 = vmatprep.subr.bf16.mxu0 0
        %2182 = vmatpush2.bf16.msra.mxu0 0
        %2183 = vmatprep.subr.bf16.mxu0 0
        %2184 = vmatpush2.bf16.msra.mxu0 0
        %2185 = vmatprep.subr.bf16.mxu0 0
        %2186 = vmatpush2.bf16.msra.mxu0 0
        %2187 = vmatprep.subr.bf16.mxu0 0
        %2188 = vmatpush2.bf16.msra.mxu0 0
        %2189 = vmatprep.mubr.bf16.mxu0 0
        %2190 = vmatmul.mubr.bf16.gmra.mxu0 %v2105
        %v2191 = vpop.f32.mrf.mxu0
        %v2192 = vadd.f32 0.0, %v2191
        %v2193 = vpop.f32.mrf.mxu0
        %v2194 = vpop.f32.mrf.mxu0
        %v2195 = vadd.f32 0.0, %v2194
        %v2196 = vpop.f32.mrf.mxu0
        %2197 = vmatprep.mubr.bf16.mxu0 0
        %2198 = vmatmul.mubr.bf16.gmra.mxu0 %v2106
        %v2199 = vpop.f32.mrf.mxu0
        %v2200 = vadd.f32 0.0, %v2199
        %v2201 = vpop.f32.mrf.mxu0
        %v2202 = vpop.f32.mrf.mxu0
        %v2203 = vadd.f32 0.0, %v2202
        %v2204 = vpop.f32.mrf.mxu0
        %2205 = vdwg.mxu0
        %v2210 = vunpack.c.l.b16 %v2013
        %v2211 = vunpack.c.l.b16 %v2014
        %v2212 = vunpack.c.l.b16 %v2015
        %v2213 = vunpack.c.l.b16 %v2016
        %v2214 = vpack.c.b16 %v2211, %v2210
        %v2215 = vpack.c.b16 %v2213, %v2212
        %v2234 = vunpack.c.l.b16 %v2018
        %v2235 = vunpack.c.l.b16 %v2019
        %v2236 = vunpack.c.l.b16 %v2020
        %v2237 = vunpack.c.l.b16 %v2021
        %v2238 = vunpack.c.l.b16 %v2022
        %v2239 = vunpack.c.l.b16 %v2023
        %v2240 = vunpack.c.l.b16 %v2024
        %v2241 = vunpack.c.l.b16 %v2025
        %v2242 = vunpack.c.l.b16 %v2026
        %v2243 = vunpack.c.l.b16 %v2027
        %v2244 = vunpack.c.l.b16 %v2028
        %v2245 = vunpack.c.l.b16 %v2029
        %v2246 = vunpack.c.l.b16 %v2030
        %v2247 = vunpack.c.l.b16 %v2031
        %v2248 = vunpack.c.l.b16 %v2032
        %v2249 = vunpack.c.l.b16 %v2033
        %v2250 = vpack.c.b16 %v2235, %v2234
        %v2251 = vpack.c.b16 %v2237, %v2236
        %v2252 = vpack.c.b16 %v2239, %v2238
        %v2253 = vpack.c.b16 %v2241, %v2240
        %v2254 = vpack.c.b16 %v2243, %v2242
        %v2255 = vpack.c.b16 %v2245, %v2244
        %v2256 = vpack.c.b16 %v2247, %v2246
        %v2257 = vpack.c.b16 %v2249, %v2248
        %2266 = vmatprep.subr.bf16.mxu0 0
        %2267 = vmatpush1.bf16.msra.mxu0 %v2257
        %2268 = vmatprep.subr.bf16.mxu0 0
        %2269 = vmatpush1.bf16.msra.mxu0 %v2256
        %2270 = vmatprep.subr.bf16.mxu0 0
        %2271 = vmatpush1.bf16.msra.mxu0 %v2255
        %2272 = vmatprep.subr.bf16.mxu0 0
        %2273 = vmatpush1.bf16.msra.mxu0 %v2254
        %2274 = vmatprep.subr.bf16.mxu0 0
        %2275 = vmatpush1.bf16.msra.mxu0 %v2253
        %2276 = vmatprep.subr.bf16.mxu0 0
        %2277 = vmatpush1.bf16.msra.mxu0 %v2252
        %2278 = vmatprep.subr.bf16.mxu0 0
        %2279 = vmatpush1.bf16.msra.mxu0 %v2251
        %2280 = vmatprep.subr.bf16.mxu0 0
        %2281 = vmatpush1.bf16.msra.mxu0 %v2250
        %2282 = vmatprep.subr.bf16.mxu0 0
        %2283 = vmatpush2.bf16.msra.mxu0 0
        %2284 = vmatprep.subr.bf16.mxu0 0
        %2285 = vmatpush2.bf16.msra.mxu0 0
        %2286 = vmatprep.subr.bf16.mxu0 0
        %2287 = vmatpush2.bf16.msra.mxu0 0
        %2288 = vmatprep.subr.bf16.mxu0 0
        %2289 = vmatpush2.bf16.msra.mxu0 0
        %2290 = vmatprep.subr.bf16.mxu0 0
        %2291 = vmatpush2.bf16.msra.mxu0 0
        %2292 = vmatprep.subr.bf16.mxu0 0
        %2293 = vmatpush2.bf16.msra.mxu0 0
        %2294 = vmatprep.subr.bf16.mxu0 0
        %2295 = vmatpush2.bf16.msra.mxu0 0
        %2296 = vmatprep.subr.bf16.mxu0 0
        %2297 = vmatpush2.bf16.msra.mxu0 0
        %2298 = vmatprep.mubr.bf16.mxu0 0
        %2299 = vmatmul.mubr.bf16.gmra.mxu0 %v2214
        %v2300 = vpop.f32.mrf.mxu0
        %v2301 = vadd.f32 %v2192, %v2300
        %v2302 = vpop.f32.mrf.mxu0
        %v2303 = vpop.f32.mrf.mxu0
        %v2304 = vadd.f32 %v2195, %v2303
        %v2305 = vpop.f32.mrf.mxu0
        %2306 = vmatprep.mubr.bf16.mxu0 0
        %2307 = vmatmul.mubr.bf16.gmra.mxu0 %v2215
        %v2308 = vpop.f32.mrf.mxu0
        %v2309 = vadd.f32 %v2200, %v2308
        %v2310 = vpop.f32.mrf.mxu0
        %v2311 = vpop.f32.mrf.mxu0
        %v2312 = vadd.f32 %v2203, %v2311
        %v2313 = vpop.f32.mrf.mxu0
        %2314 = vdwg.mxu0
        %v2315 = vld [vmem:[#allocation2] sm:$0xe]
        %v2316 = vld [vmem:[#allocation2 + $0xc] sm:$0xe]
        %v2321 = vrot.slane %v2315, 5
        %v2322 = vrot.slane %v2321, 4
        %v2323 = vrot.slane %v2014, 5
        %v2324 = vsel %vm680, %v2322, %v2323
        %v2325 = vrot.slane %v2323, 4
        %v2326 = vrot.slane %v2034, 5
        %v2327 = vsel %vm680, %v2325, %v2326
        %v2328 = vrot.slane %v2316, 5
        %v2329 = vrot.slane %v2328, 4
        %v2330 = vrot.slane %v2016, 5
        %v2331 = vsel %vm680, %v2329, %v2330
        %v2332 = vrot.slane %v2330, 4
        %v2333 = vrot.slane %v2035, 5
        %v2334 = vsel %vm680, %v2332, %v2333
        %s2335 = scalar_lea.vmem %s1, 448
        %v2336 = vld [vmem:[%s2335] sm:$0xf]
        %v2337 = vld [vmem:[%s2335 + $0x4] sm:$0xf]
        %v2338 = vld [vmem:[%s2335 + $0x8] sm:$0xf]
        %v2339 = vld [vmem:[%s2335 + $0xc] sm:$0xf]
        %v2340 = vld [vmem:[%s2335 + $0x10] sm:$0xf]
        %v2341 = vld [vmem:[%s2335 + $0x14] sm:$0xf]
        %v2342 = vld [vmem:[%s2335 + $0x18] sm:$0xf]
        %v2343 = vld [vmem:[%s2335 + $0x1c] sm:$0xf]
        %v2344 = vld [vmem:[%s2335 + $0x20] sm:$0xf]
        %v2345 = vld [vmem:[%s2335 + $0x24] sm:$0xf]
        %v2346 = vld [vmem:[%s2335 + $0x28] sm:$0xf]
        %v2347 = vld [vmem:[%s2335 + $0x2c] sm:$0xf]
        %v2348 = vld [vmem:[%s2335 + $0x30] sm:$0xf]
        %v2349 = vld [vmem:[%s2335 + $0x34] sm:$0xf]
        %v2350 = vld [vmem:[%s2335 + $0x38] sm:$0xf]
        %v2351 = vld [vmem:[%s2335 + $0x3c] sm:$0xf]
        %v2352 = vunpack.c.l.b16 %v2324
        %v2353 = vunpack.c.l.b16 %v2327
        %v2354 = vunpack.c.l.b16 %v2331
        %v2355 = vunpack.c.l.b16 %v2334
        %v2356 = vpack.c.b16 %v2353, %v2352
        %v2357 = vpack.c.b16 %v2355, %v2354
        %v2376 = vunpack.c.l.b16 %v2336
        %v2377 = vunpack.c.l.b16 %v2337
        %v2378 = vunpack.c.l.b16 %v2338
        %v2379 = vunpack.c.l.b16 %v2339
        %v2380 = vunpack.c.l.b16 %v2340
        %v2381 = vunpack.c.l.b16 %v2341
        %v2382 = vunpack.c.l.b16 %v2342
        %v2383 = vunpack.c.l.b16 %v2343
        %v2384 = vunpack.c.l.b16 %v2344
        %v2385 = vunpack.c.l.b16 %v2345
        %v2386 = vunpack.c.l.b16 %v2346
        %v2387 = vunpack.c.l.b16 %v2347
        %v2388 = vunpack.c.l.b16 %v2348
        %v2389 = vunpack.c.l.b16 %v2349
        %v2390 = vunpack.c.l.b16 %v2350
        %v2391 = vunpack.c.l.b16 %v2351
        %v2392 = vpack.c.b16 %v2377, %v2376
        %v2393 = vpack.c.b16 %v2379, %v2378
        %v2394 = vpack.c.b16 %v2381, %v2380
        %v2395 = vpack.c.b16 %v2383, %v2382
        %v2396 = vpack.c.b16 %v2385, %v2384
        %v2397 = vpack.c.b16 %v2387, %v2386
        %v2398 = vpack.c.b16 %v2389, %v2388
        %v2399 = vpack.c.b16 %v2391, %v2390
        %2408 = vmatprep.subr.bf16.mxu0 0
        %2409 = vmatpush1.bf16.msra.mxu0 %v2399
        %2410 = vmatprep.subr.bf16.mxu0 0
        %2411 = vmatpush1.bf16.msra.mxu0 %v2398
        %2412 = vmatprep.subr.bf16.mxu0 0
        %2413 = vmatpush1.bf16.msra.mxu0 %v2397
        %2414 = vmatprep.subr.bf16.mxu0 0
        %2415 = vmatpush1.bf16.msra.mxu0 %v2396
        %2416 = vmatprep.subr.bf16.mxu0 0
        %2417 = vmatpush1.bf16.msra.mxu0 %v2395
        %2418 = vmatprep.subr.bf16.mxu0 0
        %2419 = vmatpush1.bf16.msra.mxu0 %v2394
        %2420 = vmatprep.subr.bf16.mxu0 0
        %2421 = vmatpush1.bf16.msra.mxu0 %v2393
        %2422 = vmatprep.subr.bf16.mxu0 0
        %2423 = vmatpush1.bf16.msra.mxu0 %v2392
        %2424 = vmatprep.subr.bf16.mxu0 0
        %2425 = vmatpush2.bf16.msra.mxu0 0
        %2426 = vmatprep.subr.bf16.mxu0 0
        %2427 = vmatpush2.bf16.msra.mxu0 0
        %2428 = vmatprep.subr.bf16.mxu0 0
        %2429 = vmatpush2.bf16.msra.mxu0 0
        %2430 = vmatprep.subr.bf16.mxu0 0
        %2431 = vmatpush2.bf16.msra.mxu0 0
        %2432 = vmatprep.subr.bf16.mxu0 0
        %2433 = vmatpush2.bf16.msra.mxu0 0
        %2434 = vmatprep.subr.bf16.mxu0 0
        %2435 = vmatpush2.bf16.msra.mxu0 0
        %2436 = vmatprep.subr.bf16.mxu0 0
        %2437 = vmatpush2.bf16.msra.mxu0 0
        %2438 = vmatprep.subr.bf16.mxu0 0
        %2439 = vmatpush2.bf16.msra.mxu0 0
        %2440 = vmatprep.mubr.bf16.mxu0 0
        %2441 = vmatmul.mubr.bf16.gmra.mxu0 %v2356
        %v2442 = vpop.f32.mrf.mxu0
        %v2443 = vadd.f32 0.0, %v2442
        %v2444 = vpop.f32.mrf.mxu0
        %v2445 = vpop.f32.mrf.mxu0
        %v2446 = vadd.f32 0.0, %v2445
        %v2447 = vpop.f32.mrf.mxu0
        %2448 = vmatprep.mubr.bf16.mxu0 0
        %2449 = vmatmul.mubr.bf16.gmra.mxu0 %v2357
        %v2450 = vpop.f32.mrf.mxu0
        %v2451 = vadd.f32 0.0, %v2450
        %v2452 = vpop.f32.mrf.mxu0
        %v2453 = vpop.f32.mrf.mxu0
        %v2454 = vadd.f32 0.0, %v2453
        %v2455 = vpop.f32.mrf.mxu0
        %2456 = vdwg.mxu0
        %v2457 = vadd.f32 %v2301, %v2443
        %v2458 = vadd.f32 %v2304, %v2446
        %v2459 = vadd.f32 %v2309, %v2451
        %v2460 = vadd.f32 %v2312, %v2454
        %v2461 = vld [vmem:[#allocation2 + $0x8] sm:$0x3]
        %v2462 = vld [vmem:[#allocation2 + $0x14] sm:$0x3]
        %v2464 = vshrl.u32 %v2315, 16
        %v2466 = vrot.slane %v2464, 5
        %v2467 = vshll.u32 %v2315, 16
        %v2469 = vrot.slane %v2467, 6
        %v2470 = vor.u32 %v2466, %v2469
        %v2471 = vrot.slane %v2470, 4
        %v2472 = vrot.slane %v2050, 5
        %v2473 = vrot.slane %v2046, 6
        %v2474 = vor.u32 %v2472, %v2473
        %v2475 = vsel %vm825, %v2471, %v2474
        %v2476 = vrot.slane %v2474, 4
        %v2478 = vshrl.u32 %v2461, 16
        %v2480 = vrot.slane %v2478, 5
        %v2481 = vshll.u32 %v2461, 16
        %v2483 = vrot.slane %v2481, 6
        %v2484 = vor.u32 %v2480, %v2483
        %v2485 = vsel %vm825, %v2476, %v2484
        %v2487 = vshrl.u32 %v2316, 16
        %v2489 = vrot.slane %v2487, 5
        %v2490 = vshll.u32 %v2316, 16
        %v2492 = vrot.slane %v2490, 6
        %v2493 = vor.u32 %v2489, %v2492
        %v2494 = vrot.slane %v2493, 4
        %v2495 = vrot.slane %v2074, 5
        %v2496 = vrot.slane %v2070, 6
        %v2497 = vor.u32 %v2495, %v2496
        %v2498 = vsel %vm825, %v2494, %v2497
        %v2499 = vrot.slane %v2497, 4
        %v2501 = vshrl.u32 %v2462, 16
        %v2503 = vrot.slane %v2501, 5
        %v2504 = vshll.u32 %v2462, 16
        %v2506 = vrot.slane %v2504, 6
        %v2507 = vor.u32 %v2503, %v2506
        %v2508 = vsel %vm825, %v2499, %v2507
        %s2509 = scalar_lea.vmem %s1, 512
        %v2510 = vld [vmem:[%s2509] sm:$0xf]
        %v2511 = vld [vmem:[%s2509 + $0x4] sm:$0xf]
        %v2512 = vld [vmem:[%s2509 + $0x8] sm:$0xf]
        %v2513 = vld [vmem:[%s2509 + $0xc] sm:$0xf]
        %v2514 = vld [vmem:[%s2509 + $0x10] sm:$0xf]
        %v2515 = vld [vmem:[%s2509 + $0x14] sm:$0xf]
        %v2516 = vld [vmem:[%s2509 + $0x18] sm:$0xf]
        %v2517 = vld [vmem:[%s2509 + $0x1c] sm:$0xf]
        %v2518 = vld [vmem:[%s2509 + $0x20] sm:$0xf]
        %v2519 = vld [vmem:[%s2509 + $0x24] sm:$0xf]
        %v2520 = vld [vmem:[%s2509 + $0x28] sm:$0xf]
        %v2521 = vld [vmem:[%s2509 + $0x2c] sm:$0xf]
        %v2522 = vld [vmem:[%s2509 + $0x30] sm:$0xf]
        %v2523 = vld [vmem:[%s2509 + $0x34] sm:$0xf]
        %v2524 = vld [vmem:[%s2509 + $0x38] sm:$0xf]
        %v2525 = vld [vmem:[%s2509 + $0x3c] sm:$0xf]
        %v2526 = vunpack.c.l.b16 %v2475
        %v2527 = vunpack.c.l.b16 %v2485
        %v2528 = vunpack.c.l.b16 %v2498
        %v2529 = vunpack.c.l.b16 %v2508
        %v2530 = vpack.c.b16 %v2527, %v2526
        %v2531 = vpack.c.b16 %v2529, %v2528
        %v2550 = vunpack.c.l.b16 %v2510
        %v2551 = vunpack.c.l.b16 %v2511
        %v2552 = vunpack.c.l.b16 %v2512
        %v2553 = vunpack.c.l.b16 %v2513
        %v2554 = vunpack.c.l.b16 %v2514
        %v2555 = vunpack.c.l.b16 %v2515
        %v2556 = vunpack.c.l.b16 %v2516
        %v2557 = vunpack.c.l.b16 %v2517
        %v2558 = vunpack.c.l.b16 %v2518
        %v2559 = vunpack.c.l.b16 %v2519
        %v2560 = vunpack.c.l.b16 %v2520
        %v2561 = vunpack.c.l.b16 %v2521
        %v2562 = vunpack.c.l.b16 %v2522
        %v2563 = vunpack.c.l.b16 %v2523
        %v2564 = vunpack.c.l.b16 %v2524
        %v2565 = vunpack.c.l.b16 %v2525
        %v2566 = vpack.c.b16 %v2551, %v2550
        %v2567 = vpack.c.b16 %v2553, %v2552
        %v2568 = vpack.c.b16 %v2555, %v2554
        %v2569 = vpack.c.b16 %v2557, %v2556
        %v2570 = vpack.c.b16 %v2559, %v2558
        %v2571 = vpack.c.b16 %v2561, %v2560
        %v2572 = vpack.c.b16 %v2563, %v2562
        %v2573 = vpack.c.b16 %v2565, %v2564
        %2582 = vmatprep.subr.bf16.mxu0 0
        %2583 = vmatpush1.bf16.msra.mxu0 %v2573
        %2584 = vmatprep.subr.bf16.mxu0 0
        %2585 = vmatpush1.bf16.msra.mxu0 %v2572
        %2586 = vmatprep.subr.bf16.mxu0 0
        %2587 = vmatpush1.bf16.msra.mxu0 %v2571
        %2588 = vmatprep.subr.bf16.mxu0 0
        %2589 = vmatpush1.bf16.msra.mxu0 %v2570
        %2590 = vmatprep.subr.bf16.mxu0 0
        %2591 = vmatpush1.bf16.msra.mxu0 %v2569
        %2592 = vmatprep.subr.bf16.mxu0 0
        %2593 = vmatpush1.bf16.msra.mxu0 %v2568
        %2594 = vmatprep.subr.bf16.mxu0 0
        %2595 = vmatpush1.bf16.msra.mxu0 %v2567
        %2596 = vmatprep.subr.bf16.mxu0 0
        %2597 = vmatpush1.bf16.msra.mxu0 %v2566
        %2598 = vmatprep.subr.bf16.mxu0 0
        %2599 = vmatpush2.bf16.msra.mxu0 0
        %2600 = vmatprep.subr.bf16.mxu0 0
        %2601 = vmatpush2.bf16.msra.mxu0 0
        %2602 = vmatprep.subr.bf16.mxu0 0
        %2603 = vmatpush2.bf16.msra.mxu0 0
        %2604 = vmatprep.subr.bf16.mxu0 0
        %2605 = vmatpush2.bf16.msra.mxu0 0
        %2606 = vmatprep.subr.bf16.mxu0 0
        %2607 = vmatpush2.bf16.msra.mxu0 0
        %2608 = vmatprep.subr.bf16.mxu0 0
        %2609 = vmatpush2.bf16.msra.mxu0 0
        %2610 = vmatprep.subr.bf16.mxu0 0
        %2611 = vmatpush2.bf16.msra.mxu0 0
        %2612 = vmatprep.subr.bf16.mxu0 0
        %2613 = vmatpush2.bf16.msra.mxu0 0
        %2614 = vmatprep.mubr.bf16.mxu0 0
        %2615 = vmatmul.mubr.bf16.gmra.mxu0 %v2530
        %v2616 = vpop.f32.mrf.mxu0
        %v2617 = vadd.f32 0.0, %v2616
        %v2618 = vpop.f32.mrf.mxu0
        %v2619 = vpop.f32.mrf.mxu0
        %v2620 = vadd.f32 0.0, %v2619
        %v2621 = vpop.f32.mrf.mxu0
        %2622 = vmatprep.mubr.bf16.mxu0 0
        %2623 = vmatmul.mubr.bf16.gmra.mxu0 %v2531
        %v2624 = vpop.f32.mrf.mxu0
        %v2625 = vadd.f32 0.0, %v2624
        %v2626 = vpop.f32.mrf.mxu0
        %v2627 = vpop.f32.mrf.mxu0
        %v2628 = vadd.f32 0.0, %v2627
        %v2629 = vpop.f32.mrf.mxu0
        %2630 = vdwg.mxu0
        %v2631 = vadd.f32 %v2457, %v2617
        %v2632 = vadd.f32 %v2458, %v2620
        %v2633 = vadd.f32 %v2459, %v2625
        %v2634 = vadd.f32 %v2460, %v2628
        %v2635 = vld [vmem:[#allocation2] sm:$0xc]
        %v2636 = vld [vmem:[#allocation2 + $0xc] sm:$0xc]
        %v2641 = vrot.slane %v2635, 6
        %v2642 = vrot.slane %v2641, 4
        %v2643 = vrot.slane %v2014, 6
        %v2644 = vsel %vm1006, %v2642, %v2643
        %v2645 = vrot.slane %v2643, 4
        %v2646 = vrot.slane %v2461, 6
        %v2647 = vsel %vm1006, %v2645, %v2646
        %v2648 = vrot.slane %v2636, 6
        %v2649 = vrot.slane %v2648, 4
        %v2650 = vrot.slane %v2016, 6
        %v2651 = vsel %vm1006, %v2649, %v2650
        %v2652 = vrot.slane %v2650, 4
        %v2653 = vrot.slane %v2462, 6
        %v2654 = vsel %vm1006, %v2652, %v2653
        %s2655 = scalar_lea.vmem %s1, 576
        %v2656 = vld [vmem:[%s2655] sm:$0xf]
        %v2657 = vld [vmem:[%s2655 + $0x4] sm:$0xf]
        %v2658 = vld [vmem:[%s2655 + $0x8] sm:$0xf]
        %v2659 = vld [vmem:[%s2655 + $0xc] sm:$0xf]
        %v2660 = vld [vmem:[%s2655 + $0x10] sm:$0xf]
        %v2661 = vld [vmem:[%s2655 + $0x14] sm:$0xf]
        %v2662 = vld [vmem:[%s2655 + $0x18] sm:$0xf]
        %v2663 = vld [vmem:[%s2655 + $0x1c] sm:$0xf]
        %v2664 = vld [vmem:[%s2655 + $0x20] sm:$0xf]
        %v2665 = vld [vmem:[%s2655 + $0x24] sm:$0xf]
        %v2666 = vld [vmem:[%s2655 + $0x28] sm:$0xf]
        %v2667 = vld [vmem:[%s2655 + $0x2c] sm:$0xf]
        %v2668 = vld [vmem:[%s2655 + $0x30] sm:$0xf]
        %v2669 = vld [vmem:[%s2655 + $0x34] sm:$0xf]
        %v2670 = vld [vmem:[%s2655 + $0x38] sm:$0xf]
        %v2671 = vld [vmem:[%s2655 + $0x3c] sm:$0xf]
        %v2672 = vunpack.c.l.b16 %v2644
        %v2673 = vunpack.c.l.b16 %v2647
        %v2674 = vunpack.c.l.b16 %v2651
        %v2675 = vunpack.c.l.b16 %v2654
        %v2676 = vpack.c.b16 %v2673, %v2672
        %v2677 = vpack.c.b16 %v2675, %v2674
        %v2696 = vunpack.c.l.b16 %v2656
        %v2697 = vunpack.c.l.b16 %v2657
        %v2698 = vunpack.c.l.b16 %v2658
        %v2699 = vunpack.c.l.b16 %v2659
        %v2700 = vunpack.c.l.b16 %v2660
        %v2701 = vunpack.c.l.b16 %v2661
        %v2702 = vunpack.c.l.b16 %v2662
        %v2703 = vunpack.c.l.b16 %v2663
        %v2704 = vunpack.c.l.b16 %v2664
        %v2705 = vunpack.c.l.b16 %v2665
        %v2706 = vunpack.c.l.b16 %v2666
        %v2707 = vunpack.c.l.b16 %v2667
        %v2708 = vunpack.c.l.b16 %v2668
        %v2709 = vunpack.c.l.b16 %v2669
        %v2710 = vunpack.c.l.b16 %v2670
        %v2711 = vunpack.c.l.b16 %v2671
        %v2712 = vpack.c.b16 %v2697, %v2696
        %v2713 = vpack.c.b16 %v2699, %v2698
        %v2714 = vpack.c.b16 %v2701, %v2700
        %v2715 = vpack.c.b16 %v2703, %v2702
        %v2716 = vpack.c.b16 %v2705, %v2704
        %v2717 = vpack.c.b16 %v2707, %v2706
        %v2718 = vpack.c.b16 %v2709, %v2708
        %v2719 = vpack.c.b16 %v2711, %v2710
        %2728 = vmatprep.subr.bf16.mxu0 0
        %2729 = vmatpush1.bf16.msra.mxu0 %v2719
        %2730 = vmatprep.subr.bf16.mxu0 0
        %2731 = vmatpush1.bf16.msra.mxu0 %v2718
        %2732 = vmatprep.subr.bf16.mxu0 0
        %2733 = vmatpush1.bf16.msra.mxu0 %v2717
        %2734 = vmatprep.subr.bf16.mxu0 0
        %2735 = vmatpush1.bf16.msra.mxu0 %v2716
        %2736 = vmatprep.subr.bf16.mxu0 0
        %2737 = vmatpush1.bf16.msra.mxu0 %v2715
        %2738 = vmatprep.subr.bf16.mxu0 0
        %2739 = vmatpush1.bf16.msra.mxu0 %v2714
        %2740 = vmatprep.subr.bf16.mxu0 0
        %2741 = vmatpush1.bf16.msra.mxu0 %v2713
        %2742 = vmatprep.subr.bf16.mxu0 0
        %2743 = vmatpush1.bf16.msra.mxu0 %v2712
        %2744 = vmatprep.subr.bf16.mxu0 0
        %2745 = vmatpush2.bf16.msra.mxu0 0
        %2746 = vmatprep.subr.bf16.mxu0 0
        %2747 = vmatpush2.bf16.msra.mxu0 0
        %2748 = vmatprep.subr.bf16.mxu0 0
        %2749 = vmatpush2.bf16.msra.mxu0 0
        %2750 = vmatprep.subr.bf16.mxu0 0
        %2751 = vmatpush2.bf16.msra.mxu0 0
        %2752 = vmatprep.subr.bf16.mxu0 0
        %2753 = vmatpush2.bf16.msra.mxu0 0
        %2754 = vmatprep.subr.bf16.mxu0 0
        %2755 = vmatpush2.bf16.msra.mxu0 0
        %2756 = vmatprep.subr.bf16.mxu0 0
        %2757 = vmatpush2.bf16.msra.mxu0 0
        %2758 = vmatprep.subr.bf16.mxu0 0
        %2759 = vmatpush2.bf16.msra.mxu0 0
        %2760 = vmatprep.mubr.bf16.mxu0 0
        %2761 = vmatmul.mubr.bf16.gmra.mxu0 %v2676
        %v2762 = vpop.f32.mrf.mxu0
        %v2763 = vadd.f32 0.0, %v2762
        %v2764 = vpop.f32.mrf.mxu0
        %v2765 = vpop.f32.mrf.mxu0
        %v2766 = vadd.f32 0.0, %v2765
        %v2767 = vpop.f32.mrf.mxu0
        %2768 = vmatprep.mubr.bf16.mxu0 0
        %2769 = vmatmul.mubr.bf16.gmra.mxu0 %v2677
        %v2770 = vpop.f32.mrf.mxu0
        %v2771 = vadd.f32 0.0, %v2770
        %v2772 = vpop.f32.mrf.mxu0
        %v2773 = vpop.f32.mrf.mxu0
        %v2774 = vadd.f32 0.0, %v2773
        %v2775 = vpop.f32.mrf.mxu0
        %2776 = vdwg.mxu0
        %v2777 = vadd.f32 %v2631, %v2763
        %v2778 = vadd.f32 %v2632, %v2766
        %v2779 = vadd.f32 %v2633, %v2771
        %v2780 = vadd.f32 %v2634, %v2774
        %v2782 = vlaneseq
        %v2783 = vshrl.u32 %v2782, 7
        %v2784 = vsub.s32 0, %v2783
        %v2785 = vrot.slane %v2012, %v2784
        %v2787 = vadd.f32 %v2777, %v2785
        %v2788 = vadd.f32 %v2778, %v2785
        %v2789 = vadd.f32 %v2779, %v2785
        %v2790 = vadd.f32 %v2780, %v2785
        %v2791 = vmax.f32 %v2787, 0.0
        %v2792 = vmax.f32 %v2788, 0.0
        %v2793 = vmax.f32 %v2789, 0.0
        %v2794 = vmax.f32 %v2790, 0.0
        %v2795 = vpack.c.bf16 %v2792, %v2791
        %v2796 = vpack.c.bf16 %v2794, %v2793
        %v2799 = vunpack.c.l.b16 %v2795
        %v2800 = vunpack.c.h.b16 %v2795
        %v2801 = vunpack.c.l.b16 %v2796
        %v2802 = vunpack.c.h.b16 %v2796
        %v2803 = vpack.c.b16 %v2799, %v2799
        %v2804 = vpack.c.b16 %v2800, %v2800
        %v2805 = vpack.c.b16 %v2801, %v2801
        %v2806 = vpack.c.b16 %v2802, %v2802
        %v2807 = vrot.slane %v2803, 7
        %v2808 = vrot.slane %v2807, 4
        %v2809 = vrot.slane %v2804, 7
        %v2810 = vsel %vm344, %v2808, %v2809
        %v2811 = vrot.slane %v2809, 4
        %v2812 = vrot.slane %v2805, 7
        %v2813 = vrot.slane %v2812, 4
        %v2814 = vrot.slane %v2806, 7
        %v2815 = vsel %vm344, %v2813, %v2814
        %v2816 = vrot.slane %v2814, 4
        %2823 = vst [vmem:[#allocation2] sm:$0xe] %v2807
        %2824 = vst [vmem:[#allocation2 + $0x4] sm:$0xf] %v2810
        %2825 = vst [vmem:[#allocation2 + $0x8] sm:$0x1] %v2811
        %2826 = vst [vmem:[#allocation2 + $0xc] sm:$0xe] %v2812
        %2827 = vst [vmem:[#allocation2 + $0x10] sm:$0xf] %v2815
        %2828 = vst [vmem:[#allocation2 + $0x14] sm:$0x1] %v2816
        %s2829 = scalar_lea.vmem %s4, 1
        %v2830 = vld [vmem:[%s2829] sm:$0x1]
        %v2831 = vld [vmem:[#allocation2] sm:$0xf]
        %v2832 = vld [vmem:[#allocation2 + $0x4] sm:$0xf]
        %v2833 = vld [vmem:[#allocation2 + $0xc] sm:$0xf]
        %v2834 = vld [vmem:[#allocation2 + $0x10] sm:$0xf]
        %s2835 = scalar_lea.vmem [#allocation3], 320
        %v2836 = vld [vmem:[%s2835] sm:$0xf]
        %v2837 = vld [vmem:[%s2835 + $0x4] sm:$0xf]
        %v2838 = vld [vmem:[%s2835 + $0x8] sm:$0xf]
        %v2839 = vld [vmem:[%s2835 + $0xc] sm:$0xf]
        %v2840 = vld [vmem:[%s2835 + $0x10] sm:$0xf]
        %v2841 = vld [vmem:[%s2835 + $0x14] sm:$0xf]
        %v2842 = vld [vmem:[%s2835 + $0x18] sm:$0xf]
        %v2843 = vld [vmem:[%s2835 + $0x1c] sm:$0xf]
        %v2844 = vld [vmem:[%s2835 + $0x20] sm:$0xf]
        %v2845 = vld [vmem:[%s2835 + $0x24] sm:$0xf]
        %v2846 = vld [vmem:[%s2835 + $0x28] sm:$0xf]
        %v2847 = vld [vmem:[%s2835 + $0x2c] sm:$0xf]
        %v2848 = vld [vmem:[%s2835 + $0x30] sm:$0xf]
        %v2849 = vld [vmem:[%s2835 + $0x34] sm:$0xf]
        %v2850 = vld [vmem:[%s2835 + $0x38] sm:$0xf]
        %v2851 = vld [vmem:[%s2835 + $0x3c] sm:$0xf]
        %v2852 = vld [vmem:[#allocation2 + $0x8] sm:$0x1]
        %v2853 = vld [vmem:[#allocation2 + $0x14] sm:$0x1]
        %v2855 = vshrl.u32 %v2831, 16
        %v2857 = vrot.slane %v2855, 4
        %v2858 = vshll.u32 %v2831, 16
        %v2860 = vrot.slane %v2858, 5
        %v2861 = vor.u32 %v2857, %v2860
        %v2862 = vrot.slane %v2861, 4
        %v2864 = vshll.u32 %v2832, 16
        %v2866 = vrot.slane %v2864, 5
        %v2867 = vsel %vm392, %v2862, %v2866
        %v2868 = vshrl.u32 %v2832, 16
        %v2870 = vrot.slane %v2868, 4
        %v2871 = vor.u32 %v2870, %v2866
        %v2872 = vrot.slane %v2871, 4
        %v2874 = vshll.u32 %v2852, 16
        %v2876 = vrot.slane %v2874, 5
        %v2877 = vsel %vm392, %v2872, %v2876
        %v2879 = vshrl.u32 %v2833, 16
        %v2881 = vrot.slane %v2879, 4
        %v2882 = vshll.u32 %v2833, 16
        %v2884 = vrot.slane %v2882, 5
        %v2885 = vor.u32 %v2881, %v2884
        %v2886 = vrot.slane %v2885, 4
        %v2888 = vshll.u32 %v2834, 16
        %v2890 = vrot.slane %v2888, 5
        %v2891 = vsel %vm392, %v2886, %v2890
        %v2892 = vshrl.u32 %v2834, 16
        %v2894 = vrot.slane %v2892, 4
        %v2895 = vor.u32 %v2894, %v2890
        %v2896 = vrot.slane %v2895, 4
        %v2898 = vshll.u32 %v2853, 16
        %v2900 = vrot.slane %v2898, 5
        %v2901 = vsel %vm392, %v2896, %v2900
        %s2902 = scalar_lea.vmem [#allocation3], 384
        %v2903 = vld [vmem:[%s2902] sm:$0xf]
        %v2904 = vld [vmem:[%s2902 + $0x4] sm:$0xf]
        %v2905 = vld [vmem:[%s2902 + $0x8] sm:$0xf]
        %v2906 = vld [vmem:[%s2902 + $0xc] sm:$0xf]
        %v2907 = vld [vmem:[%s2902 + $0x10] sm:$0xf]
        %v2908 = vld [vmem:[%s2902 + $0x14] sm:$0xf]
        %v2909 = vld [vmem:[%s2902 + $0x18] sm:$0xf]
        %v2910 = vld [vmem:[%s2902 + $0x1c] sm:$0xf]
        %v2911 = vld [vmem:[%s2902 + $0x20] sm:$0xf]
        %v2912 = vld [vmem:[%s2902 + $0x24] sm:$0xf]
        %v2913 = vld [vmem:[%s2902 + $0x28] sm:$0xf]
        %v2914 = vld [vmem:[%s2902 + $0x2c] sm:$0xf]
        %v2915 = vld [vmem:[%s2902 + $0x30] sm:$0xf]
        %v2916 = vld [vmem:[%s2902 + $0x34] sm:$0xf]
        %v2917 = vld [vmem:[%s2902 + $0x38] sm:$0xf]
        %v2918 = vld [vmem:[%s2902 + $0x3c] sm:$0xf]
        %v2919 = vunpack.c.l.b16 %v2867
        %v2920 = vunpack.c.l.b16 %v2877
        %v2921 = vunpack.c.l.b16 %v2891
        %v2922 = vunpack.c.l.b16 %v2901
        %v2923 = vpack.c.b16 %v2920, %v2919
        %v2924 = vpack.c.b16 %v2922, %v2921
        %v2943 = vunpack.c.l.b16 %v2903
        %v2944 = vunpack.c.l.b16 %v2904
        %v2945 = vunpack.c.l.b16 %v2905
        %v2946 = vunpack.c.l.b16 %v2906
        %v2947 = vunpack.c.l.b16 %v2907
        %v2948 = vunpack.c.l.b16 %v2908
        %v2949 = vunpack.c.l.b16 %v2909
        %v2950 = vunpack.c.l.b16 %v2910
        %v2951 = vunpack.c.l.b16 %v2911
        %v2952 = vunpack.c.l.b16 %v2912
        %v2953 = vunpack.c.l.b16 %v2913
        %v2954 = vunpack.c.l.b16 %v2914
        %v2955 = vunpack.c.l.b16 %v2915
        %v2956 = vunpack.c.l.b16 %v2916
        %v2957 = vunpack.c.l.b16 %v2917
        %v2958 = vunpack.c.l.b16 %v2918
        %v2959 = vpack.c.b16 %v2944, %v2943
        %v2960 = vpack.c.b16 %v2946, %v2945
        %v2961 = vpack.c.b16 %v2948, %v2947
        %v2962 = vpack.c.b16 %v2950, %v2949
        %v2963 = vpack.c.b16 %v2952, %v2951
        %v2964 = vpack.c.b16 %v2954, %v2953
        %v2965 = vpack.c.b16 %v2956, %v2955
        %v2966 = vpack.c.b16 %v2958, %v2957
        %2975 = vmatprep.subr.bf16.mxu0 0
        %2976 = vmatpush1.bf16.msra.mxu0 %v2966
        %2977 = vmatprep.subr.bf16.mxu0 0
        %2978 = vmatpush1.bf16.msra.mxu0 %v2965
        %2979 = vmatprep.subr.bf16.mxu0 0
        %2980 = vmatpush1.bf16.msra.mxu0 %v2964
        %2981 = vmatprep.subr.bf16.mxu0 0
        %2982 = vmatpush1.bf16.msra.mxu0 %v2963
        %2983 = vmatprep.subr.bf16.mxu0 0
        %2984 = vmatpush1.bf16.msra.mxu0 %v2962
        %2985 = vmatprep.subr.bf16.mxu0 0
        %2986 = vmatpush1.bf16.msra.mxu0 %v2961
        %2987 = vmatprep.subr.bf16.mxu0 0
        %2988 = vmatpush1.bf16.msra.mxu0 %v2960
        %2989 = vmatprep.subr.bf16.mxu0 0
        %2990 = vmatpush1.bf16.msra.mxu0 %v2959
        %2991 = vmatprep.subr.bf16.mxu0 0
        %2992 = vmatpush2.bf16.msra.mxu0 0
        %2993 = vmatprep.subr.bf16.mxu0 0
        %2994 = vmatpush2.bf16.msra.mxu0 0
        %2995 = vmatprep.subr.bf16.mxu0 0
        %2996 = vmatpush2.bf16.msra.mxu0 0
        %2997 = vmatprep.subr.bf16.mxu0 0
        %2998 = vmatpush2.bf16.msra.mxu0 0
        %2999 = vmatprep.subr.bf16.mxu0 0
        %3000 = vmatpush2.bf16.msra.mxu0 0
        %3001 = vmatprep.subr.bf16.mxu0 0
        %3002 = vmatpush2.bf16.msra.mxu0 0
        %3003 = vmatprep.subr.bf16.mxu0 0
        %3004 = vmatpush2.bf16.msra.mxu0 0
        %3005 = vmatprep.subr.bf16.mxu0 0
        %3006 = vmatpush2.bf16.msra.mxu0 0
        %3007 = vmatprep.mubr.bf16.mxu0 0
        %3008 = vmatmul.mubr.bf16.gmra.mxu0 %v2923
        %v3009 = vpop.f32.mrf.mxu0
        %v3010 = vadd.f32 0.0, %v3009
        %v3011 = vpop.f32.mrf.mxu0
        %v3012 = vpop.f32.mrf.mxu0
        %v3013 = vadd.f32 0.0, %v3012
        %v3014 = vpop.f32.mrf.mxu0
        %3015 = vmatprep.mubr.bf16.mxu0 0
        %3016 = vmatmul.mubr.bf16.gmra.mxu0 %v2924
        %v3017 = vpop.f32.mrf.mxu0
        %v3018 = vadd.f32 0.0, %v3017
        %v3019 = vpop.f32.mrf.mxu0
        %v3020 = vpop.f32.mrf.mxu0
        %v3021 = vadd.f32 0.0, %v3020
        %v3022 = vpop.f32.mrf.mxu0
        %3023 = vdwg.mxu0
        %v3028 = vunpack.c.l.b16 %v2831
        %v3029 = vunpack.c.l.b16 %v2832
        %v3030 = vunpack.c.l.b16 %v2833
        %v3031 = vunpack.c.l.b16 %v2834
        %v3032 = vpack.c.b16 %v3029, %v3028
        %v3033 = vpack.c.b16 %v3031, %v3030
        %v3052 = vunpack.c.l.b16 %v2836
        %v3053 = vunpack.c.l.b16 %v2837
        %v3054 = vunpack.c.l.b16 %v2838
        %v3055 = vunpack.c.l.b16 %v2839
        %v3056 = vunpack.c.l.b16 %v2840
        %v3057 = vunpack.c.l.b16 %v2841
        %v3058 = vunpack.c.l.b16 %v2842
        %v3059 = vunpack.c.l.b16 %v2843
        %v3060 = vunpack.c.l.b16 %v2844
        %v3061 = vunpack.c.l.b16 %v2845
        %v3062 = vunpack.c.l.b16 %v2846
        %v3063 = vunpack.c.l.b16 %v2847
        %v3064 = vunpack.c.l.b16 %v2848
        %v3065 = vunpack.c.l.b16 %v2849
        %v3066 = vunpack.c.l.b16 %v2850
        %v3067 = vunpack.c.l.b16 %v2851
        %v3068 = vpack.c.b16 %v3053, %v3052
        %v3069 = vpack.c.b16 %v3055, %v3054
        %v3070 = vpack.c.b16 %v3057, %v3056
        %v3071 = vpack.c.b16 %v3059, %v3058
        %v3072 = vpack.c.b16 %v3061, %v3060
        %v3073 = vpack.c.b16 %v3063, %v3062
        %v3074 = vpack.c.b16 %v3065, %v3064
        %v3075 = vpack.c.b16 %v3067, %v3066
        %3084 = vmatprep.subr.bf16.mxu0 0
        %3085 = vmatpush1.bf16.msra.mxu0 %v3075
        %3086 = vmatprep.subr.bf16.mxu0 0
        %3087 = vmatpush1.bf16.msra.mxu0 %v3074
        %3088 = vmatprep.subr.bf16.mxu0 0
        %3089 = vmatpush1.bf16.msra.mxu0 %v3073
        %3090 = vmatprep.subr.bf16.mxu0 0
        %3091 = vmatpush1.bf16.msra.mxu0 %v3072
        %3092 = vmatprep.subr.bf16.mxu0 0
        %3093 = vmatpush1.bf16.msra.mxu0 %v3071
        %3094 = vmatprep.subr.bf16.mxu0 0
        %3095 = vmatpush1.bf16.msra.mxu0 %v3070
        %3096 = vmatprep.subr.bf16.mxu0 0
        %3097 = vmatpush1.bf16.msra.mxu0 %v3069
        %3098 = vmatprep.subr.bf16.mxu0 0
        %3099 = vmatpush1.bf16.msra.mxu0 %v3068
        %3100 = vmatprep.subr.bf16.mxu0 0
        %3101 = vmatpush2.bf16.msra.mxu0 0
        %3102 = vmatprep.subr.bf16.mxu0 0
        %3103 = vmatpush2.bf16.msra.mxu0 0
        %3104 = vmatprep.subr.bf16.mxu0 0
        %3105 = vmatpush2.bf16.msra.mxu0 0
        %3106 = vmatprep.subr.bf16.mxu0 0
        %3107 = vmatpush2.bf16.msra.mxu0 0
        %3108 = vmatprep.subr.bf16.mxu0 0
        %3109 = vmatpush2.bf16.msra.mxu0 0
        %3110 = vmatprep.subr.bf16.mxu0 0
        %3111 = vmatpush2.bf16.msra.mxu0 0
        %3112 = vmatprep.subr.bf16.mxu0 0
        %3113 = vmatpush2.bf16.msra.mxu0 0
        %3114 = vmatprep.subr.bf16.mxu0 0
        %3115 = vmatpush2.bf16.msra.mxu0 0
        %3116 = vmatprep.mubr.bf16.mxu0 0
        %3117 = vmatmul.mubr.bf16.gmra.mxu0 %v3032
        %v3118 = vpop.f32.mrf.mxu0
        %v3119 = vadd.f32 %v3010, %v3118
        %v3120 = vpop.f32.mrf.mxu0
        %v3121 = vpop.f32.mrf.mxu0
        %v3122 = vadd.f32 %v3013, %v3121
        %v3123 = vpop.f32.mrf.mxu0
        %3124 = vmatprep.mubr.bf16.mxu0 0
        %3125 = vmatmul.mubr.bf16.gmra.mxu0 %v3033
        %v3126 = vpop.f32.mrf.mxu0
        %v3127 = vadd.f32 %v3018, %v3126
        %v3128 = vpop.f32.mrf.mxu0
        %v3129 = vpop.f32.mrf.mxu0
        %v3130 = vadd.f32 %v3021, %v3129
        %v3131 = vpop.f32.mrf.mxu0
        %3132 = vdwg.mxu0
        %v3133 = vld [vmem:[#allocation2] sm:$0xe]
        %v3134 = vld [vmem:[#allocation2 + $0xc] sm:$0xe]
        %v3139 = vrot.slane %v3133, 5
        %v3140 = vrot.slane %v3139, 4
        %v3141 = vrot.slane %v2832, 5
        %v3142 = vsel %vm680, %v3140, %v3141
        %v3143 = vrot.slane %v3141, 4
        %v3144 = vrot.slane %v2852, 5
        %v3145 = vsel %vm680, %v3143, %v3144
        %v3146 = vrot.slane %v3134, 5
        %v3147 = vrot.slane %v3146, 4
        %v3148 = vrot.slane %v2834, 5
        %v3149 = vsel %vm680, %v3147, %v3148
        %v3150 = vrot.slane %v3148, 4
        %v3151 = vrot.slane %v2853, 5
        %v3152 = vsel %vm680, %v3150, %v3151
        %s3153 = scalar_lea.vmem [#allocation3], 448
        %v3154 = vld [vmem:[%s3153] sm:$0xf]
        %v3155 = vld [vmem:[%s3153 + $0x4] sm:$0xf]
        %v3156 = vld [vmem:[%s3153 + $0x8] sm:$0xf]
        %v3157 = vld [vmem:[%s3153 + $0xc] sm:$0xf]
        %v3158 = vld [vmem:[%s3153 + $0x10] sm:$0xf]
        %v3159 = vld [vmem:[%s3153 + $0x14] sm:$0xf]
        %v3160 = vld [vmem:[%s3153 + $0x18] sm:$0xf]
        %v3161 = vld [vmem:[%s3153 + $0x1c] sm:$0xf]
        %v3162 = vld [vmem:[%s3153 + $0x20] sm:$0xf]
        %v3163 = vld [vmem:[%s3153 + $0x24] sm:$0xf]
        %v3164 = vld [vmem:[%s3153 + $0x28] sm:$0xf]
        %v3165 = vld [vmem:[%s3153 + $0x2c] sm:$0xf]
        %v3166 = vld [vmem:[%s3153 + $0x30] sm:$0xf]
        %v3167 = vld [vmem:[%s3153 + $0x34] sm:$0xf]
        %v3168 = vld [vmem:[%s3153 + $0x38] sm:$0xf]
        %v3169 = vld [vmem:[%s3153 + $0x3c] sm:$0xf]
        %v3170 = vunpack.c.l.b16 %v3142
        %v3171 = vunpack.c.l.b16 %v3145
        %v3172 = vunpack.c.l.b16 %v3149
        %v3173 = vunpack.c.l.b16 %v3152
        %v3174 = vpack.c.b16 %v3171, %v3170
        %v3175 = vpack.c.b16 %v3173, %v3172
        %v3194 = vunpack.c.l.b16 %v3154
        %v3195 = vunpack.c.l.b16 %v3155
        %v3196 = vunpack.c.l.b16 %v3156
        %v3197 = vunpack.c.l.b16 %v3157
        %v3198 = vunpack.c.l.b16 %v3158
        %v3199 = vunpack.c.l.b16 %v3159
        %v3200 = vunpack.c.l.b16 %v3160
        %v3201 = vunpack.c.l.b16 %v3161
        %v3202 = vunpack.c.l.b16 %v3162
        %v3203 = vunpack.c.l.b16 %v3163
        %v3204 = vunpack.c.l.b16 %v3164
        %v3205 = vunpack.c.l.b16 %v3165
        %v3206 = vunpack.c.l.b16 %v3166
        %v3207 = vunpack.c.l.b16 %v3167
        %v3208 = vunpack.c.l.b16 %v3168
        %v3209 = vunpack.c.l.b16 %v3169
        %v3210 = vpack.c.b16 %v3195, %v3194
        %v3211 = vpack.c.b16 %v3197, %v3196
        %v3212 = vpack.c.b16 %v3199, %v3198
        %v3213 = vpack.c.b16 %v3201, %v3200
        %v3214 = vpack.c.b16 %v3203, %v3202
        %v3215 = vpack.c.b16 %v3205, %v3204
        %v3216 = vpack.c.b16 %v3207, %v3206
        %v3217 = vpack.c.b16 %v3209, %v3208
        %3226 = vmatprep.subr.bf16.mxu0 0
        %3227 = vmatpush1.bf16.msra.mxu0 %v3217
        %3228 = vmatprep.subr.bf16.mxu0 0
        %3229 = vmatpush1.bf16.msra.mxu0 %v3216
        %3230 = vmatprep.subr.bf16.mxu0 0
        %3231 = vmatpush1.bf16.msra.mxu0 %v3215
        %3232 = vmatprep.subr.bf16.mxu0 0
        %3233 = vmatpush1.bf16.msra.mxu0 %v3214
        %3234 = vmatprep.subr.bf16.mxu0 0
        %3235 = vmatpush1.bf16.msra.mxu0 %v3213
        %3236 = vmatprep.subr.bf16.mxu0 0
        %3237 = vmatpush1.bf16.msra.mxu0 %v3212
        %3238 = vmatprep.subr.bf16.mxu0 0
        %3239 = vmatpush1.bf16.msra.mxu0 %v3211
        %3240 = vmatprep.subr.bf16.mxu0 0
        %3241 = vmatpush1.bf16.msra.mxu0 %v3210
        %3242 = vmatprep.subr.bf16.mxu0 0
        %3243 = vmatpush2.bf16.msra.mxu0 0
        %3244 = vmatprep.subr.bf16.mxu0 0
        %3245 = vmatpush2.bf16.msra.mxu0 0
        %3246 = vmatprep.subr.bf16.mxu0 0
        %3247 = vmatpush2.bf16.msra.mxu0 0
        %3248 = vmatprep.subr.bf16.mxu0 0
        %3249 = vmatpush2.bf16.msra.mxu0 0
        %3250 = vmatprep.subr.bf16.mxu0 0
        %3251 = vmatpush2.bf16.msra.mxu0 0
        %3252 = vmatprep.subr.bf16.mxu0 0
        %3253 = vmatpush2.bf16.msra.mxu0 0
        %3254 = vmatprep.subr.bf16.mxu0 0
        %3255 = vmatpush2.bf16.msra.mxu0 0
        %3256 = vmatprep.subr.bf16.mxu0 0
        %3257 = vmatpush2.bf16.msra.mxu0 0
        %3258 = vmatprep.mubr.bf16.mxu0 0
        %3259 = vmatmul.mubr.bf16.gmra.mxu0 %v3174
        %v3260 = vpop.f32.mrf.mxu0
        %v3261 = vadd.f32 0.0, %v3260
        %v3262 = vpop.f32.mrf.mxu0
        %v3263 = vpop.f32.mrf.mxu0
        %v3264 = vadd.f32 0.0, %v3263
        %v3265 = vpop.f32.mrf.mxu0
        %3266 = vmatprep.mubr.bf16.mxu0 0
        %3267 = vmatmul.mubr.bf16.gmra.mxu0 %v3175
        %v3268 = vpop.f32.mrf.mxu0
        %v3269 = vadd.f32 0.0, %v3268
        %v3270 = vpop.f32.mrf.mxu0
        %v3271 = vpop.f32.mrf.mxu0
        %v3272 = vadd.f32 0.0, %v3271
        %v3273 = vpop.f32.mrf.mxu0
        %3274 = vdwg.mxu0
        %v3275 = vadd.f32 %v3119, %v3261
        %v3276 = vadd.f32 %v3122, %v3264
        %v3277 = vadd.f32 %v3127, %v3269
        %v3278 = vadd.f32 %v3130, %v3272
        %v3279 = vld [vmem:[#allocation2 + $0x8] sm:$0x3]
        %v3280 = vld [vmem:[#allocation2 + $0x14] sm:$0x3]
        %v3282 = vshrl.u32 %v3133, 16
        %v3284 = vrot.slane %v3282, 5
        %v3285 = vshll.u32 %v3133, 16
        %v3287 = vrot.slane %v3285, 6
        %v3288 = vor.u32 %v3284, %v3287
        %v3289 = vrot.slane %v3288, 4
        %v3290 = vrot.slane %v2868, 5
        %v3291 = vrot.slane %v2864, 6
        %v3292 = vor.u32 %v3290, %v3291
        %v3293 = vsel %vm825, %v3289, %v3292
        %v3294 = vrot.slane %v3292, 4
        %v3296 = vshrl.u32 %v3279, 16
        %v3298 = vrot.slane %v3296, 5
        %v3299 = vshll.u32 %v3279, 16
        %v3301 = vrot.slane %v3299, 6
        %v3302 = vor.u32 %v3298, %v3301
        %v3303 = vsel %vm825, %v3294, %v3302
        %v3305 = vshrl.u32 %v3134, 16
        %v3307 = vrot.slane %v3305, 5
        %v3308 = vshll.u32 %v3134, 16
        %v3310 = vrot.slane %v3308, 6
        %v3311 = vor.u32 %v3307, %v3310
        %v3312 = vrot.slane %v3311, 4
        %v3313 = vrot.slane %v2892, 5
        %v3314 = vrot.slane %v2888, 6
        %v3315 = vor.u32 %v3313, %v3314
        %v3316 = vsel %vm825, %v3312, %v3315
        %v3317 = vrot.slane %v3315, 4
        %v3319 = vshrl.u32 %v3280, 16
        %v3321 = vrot.slane %v3319, 5
        %v3322 = vshll.u32 %v3280, 16
        %v3324 = vrot.slane %v3322, 6
        %v3325 = vor.u32 %v3321, %v3324
        %v3326 = vsel %vm825, %v3317, %v3325
        %s3327 = scalar_lea.vmem [#allocation3], 512
        %v3328 = vld [vmem:[%s3327] sm:$0xf]
        %v3329 = vld [vmem:[%s3327 + $0x4] sm:$0xf]
        %v3330 = vld [vmem:[%s3327 + $0x8] sm:$0xf]
        %v3331 = vld [vmem:[%s3327 + $0xc] sm:$0xf]
        %v3332 = vld [vmem:[%s3327 + $0x10] sm:$0xf]
        %v3333 = vld [vmem:[%s3327 + $0x14] sm:$0xf]
        %v3334 = vld [vmem:[%s3327 + $0x18] sm:$0xf]
        %v3335 = vld [vmem:[%s3327 + $0x1c] sm:$0xf]
        %v3336 = vld [vmem:[%s3327 + $0x20] sm:$0xf]
        %v3337 = vld [vmem:[%s3327 + $0x24] sm:$0xf]
        %v3338 = vld [vmem:[%s3327 + $0x28] sm:$0xf]
        %v3339 = vld [vmem:[%s3327 + $0x2c] sm:$0xf]
        %v3340 = vld [vmem:[%s3327 + $0x30] sm:$0xf]
        %v3341 = vld [vmem:[%s3327 + $0x34] sm:$0xf]
        %v3342 = vld [vmem:[%s3327 + $0x38] sm:$0xf]
        %v3343 = vld [vmem:[%s3327 + $0x3c] sm:$0xf]
        %v3344 = vunpack.c.l.b16 %v3293
        %v3345 = vunpack.c.l.b16 %v3303
        %v3346 = vunpack.c.l.b16 %v3316
        %v3347 = vunpack.c.l.b16 %v3326
        %v3348 = vpack.c.b16 %v3345, %v3344
        %v3349 = vpack.c.b16 %v3347, %v3346
        %v3368 = vunpack.c.l.b16 %v3328
        %v3369 = vunpack.c.l.b16 %v3329
        %v3370 = vunpack.c.l.b16 %v3330
        %v3371 = vunpack.c.l.b16 %v3331
        %v3372 = vunpack.c.l.b16 %v3332
        %v3373 = vunpack.c.l.b16 %v3333
        %v3374 = vunpack.c.l.b16 %v3334
        %v3375 = vunpack.c.l.b16 %v3335
        %v3376 = vunpack.c.l.b16 %v3336
        %v3377 = vunpack.c.l.b16 %v3337
        %v3378 = vunpack.c.l.b16 %v3338
        %v3379 = vunpack.c.l.b16 %v3339
        %v3380 = vunpack.c.l.b16 %v3340
        %v3381 = vunpack.c.l.b16 %v3341
        %v3382 = vunpack.c.l.b16 %v3342
        %v3383 = vunpack.c.l.b16 %v3343
        %v3384 = vpack.c.b16 %v3369, %v3368
        %v3385 = vpack.c.b16 %v3371, %v3370
        %v3386 = vpack.c.b16 %v3373, %v3372
        %v3387 = vpack.c.b16 %v3375, %v3374
        %v3388 = vpack.c.b16 %v3377, %v3376
        %v3389 = vpack.c.b16 %v3379, %v3378
        %v3390 = vpack.c.b16 %v3381, %v3380
        %v3391 = vpack.c.b16 %v3383, %v3382
        %3400 = vmatprep.subr.bf16.mxu0 0
        %3401 = vmatpush1.bf16.msra.mxu0 %v3391
        %3402 = vmatprep.subr.bf16.mxu0 0
        %3403 = vmatpush1.bf16.msra.mxu0 %v3390
        %3404 = vmatprep.subr.bf16.mxu0 0
        %3405 = vmatpush1.bf16.msra.mxu0 %v3389
        %3406 = vmatprep.subr.bf16.mxu0 0
        %3407 = vmatpush1.bf16.msra.mxu0 %v3388
        %3408 = vmatprep.subr.bf16.mxu0 0
        %3409 = vmatpush1.bf16.msra.mxu0 %v3387
        %3410 = vmatprep.subr.bf16.mxu0 0
        %3411 = vmatpush1.bf16.msra.mxu0 %v3386
        %3412 = vmatprep.subr.bf16.mxu0 0
        %3413 = vmatpush1.bf16.msra.mxu0 %v3385
        %3414 = vmatprep.subr.bf16.mxu0 0
        %3415 = vmatpush1.bf16.msra.mxu0 %v3384
        %3416 = vmatprep.subr.bf16.mxu0 0
        %3417 = vmatpush2.bf16.msra.mxu0 0
        %3418 = vmatprep.subr.bf16.mxu0 0
        %3419 = vmatpush2.bf16.msra.mxu0 0
        %3420 = vmatprep.subr.bf16.mxu0 0
        %3421 = vmatpush2.bf16.msra.mxu0 0
        %3422 = vmatprep.subr.bf16.mxu0 0
        %3423 = vmatpush2.bf16.msra.mxu0 0
        %3424 = vmatprep.subr.bf16.mxu0 0
        %3425 = vmatpush2.bf16.msra.mxu0 0
        %3426 = vmatprep.subr.bf16.mxu0 0
        %3427 = vmatpush2.bf16.msra.mxu0 0
        %3428 = vmatprep.subr.bf16.mxu0 0
        %3429 = vmatpush2.bf16.msra.mxu0 0
        %3430 = vmatprep.subr.bf16.mxu0 0
        %3431 = vmatpush2.bf16.msra.mxu0 0
        %3432 = vmatprep.mubr.bf16.mxu0 0
        %3433 = vmatmul.mubr.bf16.gmra.mxu0 %v3348
        %v3434 = vpop.f32.mrf.mxu0
        %v3435 = vadd.f32 0.0, %v3434
        %v3436 = vpop.f32.mrf.mxu0
        %v3437 = vpop.f32.mrf.mxu0
        %v3438 = vadd.f32 0.0, %v3437
        %v3439 = vpop.f32.mrf.mxu0
        %3440 = vmatprep.mubr.bf16.mxu0 0
        %3441 = vmatmul.mubr.bf16.gmra.mxu0 %v3349
        %v3442 = vpop.f32.mrf.mxu0
        %v3443 = vadd.f32 0.0, %v3442
        %v3444 = vpop.f32.mrf.mxu0
        %v3445 = vpop.f32.mrf.mxu0
        %v3446 = vadd.f32 0.0, %v3445
        %v3447 = vpop.f32.mrf.mxu0
        %3448 = vdwg.mxu0
        %v3449 = vadd.f32 %v3275, %v3435
        %v3450 = vadd.f32 %v3276, %v3438
        %v3451 = vadd.f32 %v3277, %v3443
        %v3452 = vadd.f32 %v3278, %v3446
        %v3453 = vld [vmem:[#allocation2] sm:$0xc]
        %v3454 = vld [vmem:[#allocation2 + $0xc] sm:$0xc]
        %v3459 = vrot.slane %v3453, 6
        %v3460 = vrot.slane %v3459, 4
        %v3461 = vrot.slane %v2832, 6
        %v3462 = vsel %vm1006, %v3460, %v3461
        %v3463 = vrot.slane %v3461, 4
        %v3464 = vrot.slane %v3279, 6
        %v3465 = vsel %vm1006, %v3463, %v3464
        %v3466 = vrot.slane %v3454, 6
        %v3467 = vrot.slane %v3466, 4
        %v3468 = vrot.slane %v2834, 6
        %v3469 = vsel %vm1006, %v3467, %v3468
        %v3470 = vrot.slane %v3468, 4
        %v3471 = vrot.slane %v3280, 6
        %v3472 = vsel %vm1006, %v3470, %v3471
        %s3473 = scalar_lea.vmem [#allocation3], 576
        %v3474 = vld [vmem:[%s3473] sm:$0xf]
        %v3475 = vld [vmem:[%s3473 + $0x4] sm:$0xf]
        %v3476 = vld [vmem:[%s3473 + $0x8] sm:$0xf]
        %v3477 = vld [vmem:[%s3473 + $0xc] sm:$0xf]
        %v3478 = vld [vmem:[%s3473 + $0x10] sm:$0xf]
        %v3479 = vld [vmem:[%s3473 + $0x14] sm:$0xf]
        %v3480 = vld [vmem:[%s3473 + $0x18] sm:$0xf]
        %v3481 = vld [vmem:[%s3473 + $0x1c] sm:$0xf]
        %v3482 = vld [vmem:[%s3473 + $0x20] sm:$0xf]
        %v3483 = vld [vmem:[%s3473 + $0x24] sm:$0xf]
        %v3484 = vld [vmem:[%s3473 + $0x28] sm:$0xf]
        %v3485 = vld [vmem:[%s3473 + $0x2c] sm:$0xf]
        %v3486 = vld [vmem:[%s3473 + $0x30] sm:$0xf]
        %v3487 = vld [vmem:[%s3473 + $0x34] sm:$0xf]
        %v3488 = vld [vmem:[%s3473 + $0x38] sm:$0xf]
        %v3489 = vld [vmem:[%s3473 + $0x3c] sm:$0xf]
        %v3490 = vunpack.c.l.b16 %v3462
        %v3491 = vunpack.c.l.b16 %v3465
        %v3492 = vunpack.c.l.b16 %v3469
        %v3493 = vunpack.c.l.b16 %v3472
        %v3494 = vpack.c.b16 %v3491, %v3490
        %v3495 = vpack.c.b16 %v3493, %v3492
        %v3514 = vunpack.c.l.b16 %v3474
        %v3515 = vunpack.c.l.b16 %v3475
        %v3516 = vunpack.c.l.b16 %v3476
        %v3517 = vunpack.c.l.b16 %v3477
        %v3518 = vunpack.c.l.b16 %v3478
        %v3519 = vunpack.c.l.b16 %v3479
        %v3520 = vunpack.c.l.b16 %v3480
        %v3521 = vunpack.c.l.b16 %v3481
        %v3522 = vunpack.c.l.b16 %v3482
        %v3523 = vunpack.c.l.b16 %v3483
        %v3524 = vunpack.c.l.b16 %v3484
        %v3525 = vunpack.c.l.b16 %v3485
        %v3526 = vunpack.c.l.b16 %v3486
        %v3527 = vunpack.c.l.b16 %v3487
        %v3528 = vunpack.c.l.b16 %v3488
        %v3529 = vunpack.c.l.b16 %v3489
        %v3530 = vpack.c.b16 %v3515, %v3514
        %v3531 = vpack.c.b16 %v3517, %v3516
        %v3532 = vpack.c.b16 %v3519, %v3518
        %v3533 = vpack.c.b16 %v3521, %v3520
        %v3534 = vpack.c.b16 %v3523, %v3522
        %v3535 = vpack.c.b16 %v3525, %v3524
        %v3536 = vpack.c.b16 %v3527, %v3526
        %v3537 = vpack.c.b16 %v3529, %v3528
        %3546 = vmatprep.subr.bf16.mxu0 0
        %3547 = vmatpush1.bf16.msra.mxu0 %v3537
        %3548 = vmatprep.subr.bf16.mxu0 0
        %3549 = vmatpush1.bf16.msra.mxu0 %v3536
        %3550 = vmatprep.subr.bf16.mxu0 0
        %3551 = vmatpush1.bf16.msra.mxu0 %v3535
        %3552 = vmatprep.subr.bf16.mxu0 0
        %3553 = vmatpush1.bf16.msra.mxu0 %v3534
        %3554 = vmatprep.subr.bf16.mxu0 0
        %3555 = vmatpush1.bf16.msra.mxu0 %v3533
        %3556 = vmatprep.subr.bf16.mxu0 0
        %3557 = vmatpush1.bf16.msra.mxu0 %v3532
        %3558 = vmatprep.subr.bf16.mxu0 0
        %3559 = vmatpush1.bf16.msra.mxu0 %v3531
        %3560 = vmatprep.subr.bf16.mxu0 0
        %3561 = vmatpush1.bf16.msra.mxu0 %v3530
        %3562 = vmatprep.subr.bf16.mxu0 0
        %3563 = vmatpush2.bf16.msra.mxu0 0
        %3564 = vmatprep.subr.bf16.mxu0 0
        %3565 = vmatpush2.bf16.msra.mxu0 0
        %3566 = vmatprep.subr.bf16.mxu0 0
        %3567 = vmatpush2.bf16.msra.mxu0 0
        %3568 = vmatprep.subr.bf16.mxu0 0
        %3569 = vmatpush2.bf16.msra.mxu0 0
        %3570 = vmatprep.subr.bf16.mxu0 0
        %3571 = vmatpush2.bf16.msra.mxu0 0
        %3572 = vmatprep.subr.bf16.mxu0 0
        %3573 = vmatpush2.bf16.msra.mxu0 0
        %3574 = vmatprep.subr.bf16.mxu0 0
        %3575 = vmatpush2.bf16.msra.mxu0 0
        %3576 = vmatprep.subr.bf16.mxu0 0
        %3577 = vmatpush2.bf16.msra.mxu0 0
        %3578 = vmatprep.mubr.bf16.mxu0 0
        %3579 = vmatmul.mubr.bf16.gmra.mxu0 %v3494
        %v3580 = vpop.f32.mrf.mxu0
        %v3581 = vadd.f32 0.0, %v3580
        %v3582 = vpop.f32.mrf.mxu0
        %v3583 = vpop.f32.mrf.mxu0
        %v3584 = vadd.f32 0.0, %v3583
        %v3585 = vpop.f32.mrf.mxu0
        %3586 = vmatprep.mubr.bf16.mxu0 0
        %3587 = vmatmul.mubr.bf16.gmra.mxu0 %v3495
        %v3588 = vpop.f32.mrf.mxu0
        %v3589 = vadd.f32 0.0, %v3588
        %v3590 = vpop.f32.mrf.mxu0
        %v3591 = vpop.f32.mrf.mxu0
        %v3592 = vadd.f32 0.0, %v3591
        %v3593 = vpop.f32.mrf.mxu0
        %3594 = vdwg.mxu0
        %v3595 = vadd.f32 %v3449, %v3581
        %v3596 = vadd.f32 %v3450, %v3584
        %v3597 = vadd.f32 %v3451, %v3589
        %v3598 = vadd.f32 %v3452, %v3592
        %v3600 = vlaneseq
        %v3601 = vshrl.u32 %v3600, 7
        %v3602 = vsub.s32 0, %v3601
        %v3603 = vrot.slane %v2830, %v3602
        %v3605 = vadd.f32 %v3595, %v3603
        %v3606 = vadd.f32 %v3596, %v3603
        %v3607 = vadd.f32 %v3597, %v3603
        %v3608 = vadd.f32 %v3598, %v3603
        %v3609 = vadd.f32 %v1973, %v3605
        %v3610 = vadd.f32 %v1974, %v3606
        %v3611 = vadd.f32 %v1975, %v3607
        %v3612 = vadd.f32 %v1976, %v3608
        %v3613 = vpack.c.bf16 %v3610, %v3609
        %v3614 = vpack.c.bf16 %v3612, %v3611
        %v3617 = vunpack.c.l.b16 %v3613
        %v3618 = vunpack.c.h.b16 %v3613
        %v3619 = vunpack.c.l.b16 %v3614
        %v3620 = vunpack.c.h.b16 %v3614
        %v3621 = vpack.c.b16 %v3617, %v3617
        %v3622 = vpack.c.b16 %v3618, %v3618
        %v3623 = vpack.c.b16 %v3619, %v3619
        %v3624 = vpack.c.b16 %v3620, %v3620
        %v3625 = vrot.slane %v3621, 7
        %v3626 = vrot.slane %v3625, 4
        %v3627 = vrot.slane %v3622, 7
        %v3628 = vsel %vm344, %v3626, %v3627
        %v3629 = vrot.slane %v3627, 4
        %v3630 = vrot.slane %v3623, 7
        %v3631 = vrot.slane %v3630, 4
        %v3632 = vrot.slane %v3624, 7
        %v3633 = vsel %vm344, %v3631, %v3632
        %v3634 = vrot.slane %v3632, 4
        %3641 = vst [vmem:[#allocation2] sm:$0xe] %v3625
        %3642 = vst [vmem:[#allocation2 + $0x4] sm:$0xf] %v3628
        %3643 = vst [vmem:[#allocation2 + $0x8] sm:$0x1] %v3629
        %3644 = vst [vmem:[#allocation2 + $0xc] sm:$0xe] %v3630
        %3645 = vst [vmem:[#allocation2 + $0x10] sm:$0xf] %v3633
        %3646 = vst [vmem:[#allocation2 + $0x14] sm:$0x1] %v3634
        %s3647 = scalar_lea.vmem %s2, 2
        %v3648 = vld [vmem:[%s3647] sm:$0x1]
        %v3649 = vld [vmem:[#allocation2] sm:$0xf]
        %v3650 = vld [vmem:[#allocation2 + $0x4] sm:$0xf]
        %v3651 = vld [vmem:[#allocation2 + $0xc] sm:$0xf]
        %v3652 = vld [vmem:[#allocation2 + $0x10] sm:$0xf]
        %s3653 = scalar_lea.vmem %s1, 640
        %v3654 = vld [vmem:[%s3653] sm:$0xf]
        %v3655 = vld [vmem:[%s3653 + $0x4] sm:$0xf]
        %v3656 = vld [vmem:[%s3653 + $0x8] sm:$0xf]
        %v3657 = vld [vmem:[%s3653 + $0xc] sm:$0xf]
        %v3658 = vld [vmem:[%s3653 + $0x10] sm:$0xf]
        %v3659 = vld [vmem:[%s3653 + $0x14] sm:$0xf]
        %v3660 = vld [vmem:[%s3653 + $0x18] sm:$0xf]
        %v3661 = vld [vmem:[%s3653 + $0x1c] sm:$0xf]
        %v3662 = vld [vmem:[%s3653 + $0x20] sm:$0xf]
        %v3663 = vld [vmem:[%s3653 + $0x24] sm:$0xf]
        %v3664 = vld [vmem:[%s3653 + $0x28] sm:$0xf]
        %v3665 = vld [vmem:[%s3653 + $0x2c] sm:$0xf]
        %v3666 = vld [vmem:[%s3653 + $0x30] sm:$0xf]
        %v3667 = vld [vmem:[%s3653 + $0x34] sm:$0xf]
        %v3668 = vld [vmem:[%s3653 + $0x38] sm:$0xf]
        %v3669 = vld [vmem:[%s3653 + $0x3c] sm:$0xf]
        %v3670 = vld [vmem:[#allocation2 + $0x8] sm:$0x1]
        %v3671 = vld [vmem:[#allocation2 + $0x14] sm:$0x1]
        %v3673 = vshrl.u32 %v3649, 16
        %v3675 = vrot.slane %v3673, 4
        %v3676 = vshll.u32 %v3649, 16
        %v3678 = vrot.slane %v3676, 5
        %v3679 = vor.u32 %v3675, %v3678
        %v3680 = vrot.slane %v3679, 4
        %v3682 = vshll.u32 %v3650, 16
        %v3684 = vrot.slane %v3682, 5
        %v3685 = vsel %vm392, %v3680, %v3684
        %v3686 = vshrl.u32 %v3650, 16
        %v3688 = vrot.slane %v3686, 4
        %v3689 = vor.u32 %v3688, %v3684
        %v3690 = vrot.slane %v3689, 4
        %v3692 = vshll.u32 %v3670, 16
        %v3694 = vrot.slane %v3692, 5
        %v3695 = vsel %vm392, %v3690, %v3694
        %v3697 = vshrl.u32 %v3651, 16
        %v3699 = vrot.slane %v3697, 4
        %v3700 = vshll.u32 %v3651, 16
        %v3702 = vrot.slane %v3700, 5
        %v3703 = vor.u32 %v3699, %v3702
        %v3704 = vrot.slane %v3703, 4
        %v3706 = vshll.u32 %v3652, 16
        %v3708 = vrot.slane %v3706, 5
        %v3709 = vsel %vm392, %v3704, %v3708
        %v3710 = vshrl.u32 %v3652, 16
        %v3712 = vrot.slane %v3710, 4
        %v3713 = vor.u32 %v3712, %v3708
        %v3714 = vrot.slane %v3713, 4
        %v3716 = vshll.u32 %v3671, 16
        %v3718 = vrot.slane %v3716, 5
        %v3719 = vsel %vm392, %v3714, %v3718
        %s3720 = scalar_lea.vmem %s1, 704
        %v3721 = vld [vmem:[%s3720] sm:$0xf]
        %v3722 = vld [vmem:[%s3720 + $0x4] sm:$0xf]
        %v3723 = vld [vmem:[%s3720 + $0x8] sm:$0xf]
        %v3724 = vld [vmem:[%s3720 + $0xc] sm:$0xf]
        %v3725 = vld [vmem:[%s3720 + $0x10] sm:$0xf]
        %v3726 = vld [vmem:[%s3720 + $0x14] sm:$0xf]
        %v3727 = vld [vmem:[%s3720 + $0x18] sm:$0xf]
        %v3728 = vld [vmem:[%s3720 + $0x1c] sm:$0xf]
        %v3729 = vld [vmem:[%s3720 + $0x20] sm:$0xf]
        %v3730 = vld [vmem:[%s3720 + $0x24] sm:$0xf]
        %v3731 = vld [vmem:[%s3720 + $0x28] sm:$0xf]
        %v3732 = vld [vmem:[%s3720 + $0x2c] sm:$0xf]
        %v3733 = vld [vmem:[%s3720 + $0x30] sm:$0xf]
        %v3734 = vld [vmem:[%s3720 + $0x34] sm:$0xf]
        %v3735 = vld [vmem:[%s3720 + $0x38] sm:$0xf]
        %v3736 = vld [vmem:[%s3720 + $0x3c] sm:$0xf]
        %v3737 = vunpack.c.l.b16 %v3685
        %v3738 = vunpack.c.l.b16 %v3695
        %v3739 = vunpack.c.l.b16 %v3709
        %v3740 = vunpack.c.l.b16 %v3719
        %v3741 = vpack.c.b16 %v3738, %v3737
        %v3742 = vpack.c.b16 %v3740, %v3739
        %v3761 = vunpack.c.l.b16 %v3721
        %v3762 = vunpack.c.l.b16 %v3722
        %v3763 = vunpack.c.l.b16 %v3723
        %v3764 = vunpack.c.l.b16 %v3724
        %v3765 = vunpack.c.l.b16 %v3725
        %v3766 = vunpack.c.l.b16 %v3726
        %v3767 = vunpack.c.l.b16 %v3727
        %v3768 = vunpack.c.l.b16 %v3728
        %v3769 = vunpack.c.l.b16 %v3729
        %v3770 = vunpack.c.l.b16 %v3730
        %v3771 = vunpack.c.l.b16 %v3731
        %v3772 = vunpack.c.l.b16 %v3732
        %v3773 = vunpack.c.l.b16 %v3733
        %v3774 = vunpack.c.l.b16 %v3734
        %v3775 = vunpack.c.l.b16 %v3735
        %v3776 = vunpack.c.l.b16 %v3736
        %v3777 = vpack.c.b16 %v3762, %v3761
        %v3778 = vpack.c.b16 %v3764, %v3763
        %v3779 = vpack.c.b16 %v3766, %v3765
        %v3780 = vpack.c.b16 %v3768, %v3767
        %v3781 = vpack.c.b16 %v3770, %v3769
        %v3782 = vpack.c.b16 %v3772, %v3771
        %v3783 = vpack.c.b16 %v3774, %v3773
        %v3784 = vpack.c.b16 %v3776, %v3775
        %3793 = vmatprep.subr.bf16.mxu0 0
        %3794 = vmatpush1.bf16.msra.mxu0 %v3784
        %3795 = vmatprep.subr.bf16.mxu0 0
        %3796 = vmatpush1.bf16.msra.mxu0 %v3783
        %3797 = vmatprep.subr.bf16.mxu0 0
        %3798 = vmatpush1.bf16.msra.mxu0 %v3782
        %3799 = vmatprep.subr.bf16.mxu0 0
        %3800 = vmatpush1.bf16.msra.mxu0 %v3781
        %3801 = vmatprep.subr.bf16.mxu0 0
        %3802 = vmatpush1.bf16.msra.mxu0 %v3780
        %3803 = vmatprep.subr.bf16.mxu0 0
        %3804 = vmatpush1.bf16.msra.mxu0 %v3779
        %3805 = vmatprep.subr.bf16.mxu0 0
        %3806 = vmatpush1.bf16.msra.mxu0 %v3778
        %3807 = vmatprep.subr.bf16.mxu0 0
        %3808 = vmatpush1.bf16.msra.mxu0 %v3777
        %3809 = vmatprep.subr.bf16.mxu0 0
        %3810 = vmatpush2.bf16.msra.mxu0 0
        %3811 = vmatprep.subr.bf16.mxu0 0
        %3812 = vmatpush2.bf16.msra.mxu0 0
        %3813 = vmatprep.subr.bf16.mxu0 0
        %3814 = vmatpush2.bf16.msra.mxu0 0
        %3815 = vmatprep.subr.bf16.mxu0 0
        %3816 = vmatpush2.bf16.msra.mxu0 0
        %3817 = vmatprep.subr.bf16.mxu0 0
        %3818 = vmatpush2.bf16.msra.mxu0 0
        %3819 = vmatprep.subr.bf16.mxu0 0
        %3820 = vmatpush2.bf16.msra.mxu0 0
        %3821 = vmatprep.subr.bf16.mxu0 0
        %3822 = vmatpush2.bf16.msra.mxu0 0
        %3823 = vmatprep.subr.bf16.mxu0 0
        %3824 = vmatpush2.bf16.msra.mxu0 0
        %3825 = vmatprep.mubr.bf16.mxu0 0
        %3826 = vmatmul.mubr.bf16.gmra.mxu0 %v3741
        %v3827 = vpop.f32.mrf.mxu0
        %v3828 = vadd.f32 0.0, %v3827
        %v3829 = vpop.f32.mrf.mxu0
        %v3830 = vpop.f32.mrf.mxu0
        %v3831 = vadd.f32 0.0, %v3830
        %v3832 = vpop.f32.mrf.mxu0
        %3833 = vmatprep.mubr.bf16.mxu0 0
        %3834 = vmatmul.mubr.bf16.gmra.mxu0 %v3742
        %v3835 = vpop.f32.mrf.mxu0
        %v3836 = vadd.f32 0.0, %v3835
        %v3837 = vpop.f32.mrf.mxu0
        %v3838 = vpop.f32.mrf.mxu0
        %v3839 = vadd.f32 0.0, %v3838
        %v3840 = vpop.f32.mrf.mxu0
        %3841 = vdwg.mxu0
        %v3846 = vunpack.c.l.b16 %v3649
        %v3847 = vunpack.c.l.b16 %v3650
        %v3848 = vunpack.c.l.b16 %v3651
        %v3849 = vunpack.c.l.b16 %v3652
        %v3850 = vpack.c.b16 %v3847, %v3846
        %v3851 = vpack.c.b16 %v3849, %v3848
        %v3870 = vunpack.c.l.b16 %v3654
        %v3871 = vunpack.c.l.b16 %v3655
        %v3872 = vunpack.c.l.b16 %v3656
        %v3873 = vunpack.c.l.b16 %v3657
        %v3874 = vunpack.c.l.b16 %v3658
        %v3875 = vunpack.c.l.b16 %v3659
        %v3876 = vunpack.c.l.b16 %v3660
        %v3877 = vunpack.c.l.b16 %v3661
        %v3878 = vunpack.c.l.b16 %v3662
        %v3879 = vunpack.c.l.b16 %v3663
        %v3880 = vunpack.c.l.b16 %v3664
        %v3881 = vunpack.c.l.b16 %v3665
        %v3882 = vunpack.c.l.b16 %v3666
        %v3883 = vunpack.c.l.b16 %v3667
        %v3884 = vunpack.c.l.b16 %v3668
        %v3885 = vunpack.c.l.b16 %v3669
        %v3886 = vpack.c.b16 %v3871, %v3870
        %v3887 = vpack.c.b16 %v3873, %v3872
        %v3888 = vpack.c.b16 %v3875, %v3874
        %v3889 = vpack.c.b16 %v3877, %v3876
        %v3890 = vpack.c.b16 %v3879, %v3878
        %v3891 = vpack.c.b16 %v3881, %v3880
        %v3892 = vpack.c.b16 %v3883, %v3882
        %v3893 = vpack.c.b16 %v3885, %v3884
        %3902 = vmatprep.subr.bf16.mxu0 0
        %3903 = vmatpush1.bf16.msra.mxu0 %v3893
        %3904 = vmatprep.subr.bf16.mxu0 0
        %3905 = vmatpush1.bf16.msra.mxu0 %v3892
        %3906 = vmatprep.subr.bf16.mxu0 0
        %3907 = vmatpush1.bf16.msra.mxu0 %v3891
        %3908 = vmatprep.subr.bf16.mxu0 0
        %3909 = vmatpush1.bf16.msra.mxu0 %v3890
        %3910 = vmatprep.subr.bf16.mxu0 0
        %3911 = vmatpush1.bf16.msra.mxu0 %v3889
        %3912 = vmatprep.subr.bf16.mxu0 0
        %3913 = vmatpush1.bf16.msra.mxu0 %v3888
        %3914 = vmatprep.subr.bf16.mxu0 0
        %3915 = vmatpush1.bf16.msra.mxu0 %v3887
        %3916 = vmatprep.subr.bf16.mxu0 0
        %3917 = vmatpush1.bf16.msra.mxu0 %v3886
        %3918 = vmatprep.subr.bf16.mxu0 0
        %3919 = vmatpush2.bf16.msra.mxu0 0
        %3920 = vmatprep.subr.bf16.mxu0 0
        %3921 = vmatpush2.bf16.msra.mxu0 0
        %3922 = vmatprep.subr.bf16.mxu0 0
        %3923 = vmatpush2.bf16.msra.mxu0 0
        %3924 = vmatprep.subr.bf16.mxu0 0
        %3925 = vmatpush2.bf16.msra.mxu0 0
        %3926 = vmatprep.subr.bf16.mxu0 0
        %3927 = vmatpush2.bf16.msra.mxu0 0
        %3928 = vmatprep.subr.bf16.mxu0 0
        %3929 = vmatpush2.bf16.msra.mxu0 0
        %3930 = vmatprep.subr.bf16.mxu0 0
        %3931 = vmatpush2.bf16.msra.mxu0 0
        %3932 = vmatprep.subr.bf16.mxu0 0
        %3933 = vmatpush2.bf16.msra.mxu0 0
        %3934 = vmatprep.mubr.bf16.mxu0 0
        %3935 = vmatmul.mubr.bf16.gmra.mxu0 %v3850
        %v3936 = vpop.f32.mrf.mxu0
        %v3937 = vadd.f32 %v3828, %v3936
        %v3938 = vpop.f32.mrf.mxu0
        %v3939 = vpop.f32.mrf.mxu0
        %v3940 = vadd.f32 %v3831, %v3939
        %v3941 = vpop.f32.mrf.mxu0
        %3942 = vmatprep.mubr.bf16.mxu0 0
        %3943 = vmatmul.mubr.bf16.gmra.mxu0 %v3851
        %v3944 = vpop.f32.mrf.mxu0
        %v3945 = vadd.f32 %v3836, %v3944
        %v3946 = vpop.f32.mrf.mxu0
        %v3947 = vpop.f32.mrf.mxu0
        %v3948 = vadd.f32 %v3839, %v3947
        %v3949 = vpop.f32.mrf.mxu0
        %3950 = vdwg.mxu0
        %v3951 = vld [vmem:[#allocation2] sm:$0xe]
        %v3952 = vld [vmem:[#allocation2 + $0xc] sm:$0xe]
        %v3957 = vrot.slane %v3951, 5
        %v3958 = vrot.slane %v3957, 4
        %v3959 = vrot.slane %v3650, 5
        %v3960 = vsel %vm680, %v3958, %v3959
        %v3961 = vrot.slane %v3959, 4
        %v3962 = vrot.slane %v3670, 5
        %v3963 = vsel %vm680, %v3961, %v3962
        %v3964 = vrot.slane %v3952, 5
        %v3965 = vrot.slane %v3964, 4
        %v3966 = vrot.slane %v3652, 5
        %v3967 = vsel %vm680, %v3965, %v3966
        %v3968 = vrot.slane %v3966, 4
        %v3969 = vrot.slane %v3671, 5
        %v3970 = vsel %vm680, %v3968, %v3969
        %s3971 = scalar_lea.vmem %s1, 768
        %v3972 = vld [vmem:[%s3971] sm:$0xf]
        %v3973 = vld [vmem:[%s3971 + $0x4] sm:$0xf]
        %v3974 = vld [vmem:[%s3971 + $0x8] sm:$0xf]
        %v3975 = vld [vmem:[%s3971 + $0xc] sm:$0xf]
        %v3976 = vld [vmem:[%s3971 + $0x10] sm:$0xf]
        %v3977 = vld [vmem:[%s3971 + $0x14] sm:$0xf]
        %v3978 = vld [vmem:[%s3971 + $0x18] sm:$0xf]
        %v3979 = vld [vmem:[%s3971 + $0x1c] sm:$0xf]
        %v3980 = vld [vmem:[%s3971 + $0x20] sm:$0xf]
        %v3981 = vld [vmem:[%s3971 + $0x24] sm:$0xf]
        %v3982 = vld [vmem:[%s3971 + $0x28] sm:$0xf]
        %v3983 = vld [vmem:[%s3971 + $0x2c] sm:$0xf]
        %v3984 = vld [vmem:[%s3971 + $0x30] sm:$0xf]
        %v3985 = vld [vmem:[%s3971 + $0x34] sm:$0xf]
        %v3986 = vld [vmem:[%s3971 + $0x38] sm:$0xf]
        %v3987 = vld [vmem:[%s3971 + $0x3c] sm:$0xf]
        %v3988 = vunpack.c.l.b16 %v3960
        %v3989 = vunpack.c.l.b16 %v3963
        %v3990 = vunpack.c.l.b16 %v3967
        %v3991 = vunpack.c.l.b16 %v3970
        %v3992 = vpack.c.b16 %v3989, %v3988
        %v3993 = vpack.c.b16 %v3991, %v3990
        %v4012 = vunpack.c.l.b16 %v3972
        %v4013 = vunpack.c.l.b16 %v3973
        %v4014 = vunpack.c.l.b16 %v3974
        %v4015 = vunpack.c.l.b16 %v3975
        %v4016 = vunpack.c.l.b16 %v3976
        %v4017 = vunpack.c.l.b16 %v3977
        %v4018 = vunpack.c.l.b16 %v3978
        %v4019 = vunpack.c.l.b16 %v3979
        %v4020 = vunpack.c.l.b16 %v3980
        %v4021 = vunpack.c.l.b16 %v3981
        %v4022 = vunpack.c.l.b16 %v3982
        %v4023 = vunpack.c.l.b16 %v3983
        %v4024 = vunpack.c.l.b16 %v3984
        %v4025 = vunpack.c.l.b16 %v3985
        %v4026 = vunpack.c.l.b16 %v3986
        %v4027 = vunpack.c.l.b16 %v3987
        %v4028 = vpack.c.b16 %v4013, %v4012
        %v4029 = vpack.c.b16 %v4015, %v4014
        %v4030 = vpack.c.b16 %v4017, %v4016
        %v4031 = vpack.c.b16 %v4019, %v4018
        %v4032 = vpack.c.b16 %v4021, %v4020
        %v4033 = vpack.c.b16 %v4023, %v4022
        %v4034 = vpack.c.b16 %v4025, %v4024
        %v4035 = vpack.c.b16 %v4027, %v4026
        %4044 = vmatprep.subr.bf16.mxu0 0
        %4045 = vmatpush1.bf16.msra.mxu0 %v4035
        %4046 = vmatprep.subr.bf16.mxu0 0
        %4047 = vmatpush1.bf16.msra.mxu0 %v4034
        %4048 = vmatprep.subr.bf16.mxu0 0
        %4049 = vmatpush1.bf16.msra.mxu0 %v4033
        %4050 = vmatprep.subr.bf16.mxu0 0
        %4051 = vmatpush1.bf16.msra.mxu0 %v4032
        %4052 = vmatprep.subr.bf16.mxu0 0
        %4053 = vmatpush1.bf16.msra.mxu0 %v4031
        %4054 = vmatprep.subr.bf16.mxu0 0
        %4055 = vmatpush1.bf16.msra.mxu0 %v4030
        %4056 = vmatprep.subr.bf16.mxu0 0
        %4057 = vmatpush1.bf16.msra.mxu0 %v4029
        %4058 = vmatprep.subr.bf16.mxu0 0
        %4059 = vmatpush1.bf16.msra.mxu0 %v4028
        %4060 = vmatprep.subr.bf16.mxu0 0
        %4061 = vmatpush2.bf16.msra.mxu0 0
        %4062 = vmatprep.subr.bf16.mxu0 0
        %4063 = vmatpush2.bf16.msra.mxu0 0
        %4064 = vmatprep.subr.bf16.mxu0 0
        %4065 = vmatpush2.bf16.msra.mxu0 0
        %4066 = vmatprep.subr.bf16.mxu0 0
        %4067 = vmatpush2.bf16.msra.mxu0 0
        %4068 = vmatprep.subr.bf16.mxu0 0
        %4069 = vmatpush2.bf16.msra.mxu0 0
        %4070 = vmatprep.subr.bf16.mxu0 0
        %4071 = vmatpush2.bf16.msra.mxu0 0
        %4072 = vmatprep.subr.bf16.mxu0 0
        %4073 = vmatpush2.bf16.msra.mxu0 0
        %4074 = vmatprep.subr.bf16.mxu0 0
        %4075 = vmatpush2.bf16.msra.mxu0 0
        %4076 = vmatprep.mubr.bf16.mxu0 0
        %4077 = vmatmul.mubr.bf16.gmra.mxu0 %v3992
        %v4078 = vpop.f32.mrf.mxu0
        %v4079 = vadd.f32 0.0, %v4078
        %v4080 = vpop.f32.mrf.mxu0
        %v4081 = vpop.f32.mrf.mxu0
        %v4082 = vadd.f32 0.0, %v4081
        %v4083 = vpop.f32.mrf.mxu0
        %4084 = vmatprep.mubr.bf16.mxu0 0
        %4085 = vmatmul.mubr.bf16.gmra.mxu0 %v3993
        %v4086 = vpop.f32.mrf.mxu0
        %v4087 = vadd.f32 0.0, %v4086
        %v4088 = vpop.f32.mrf.mxu0
        %v4089 = vpop.f32.mrf.mxu0
        %v4090 = vadd.f32 0.0, %v4089
        %v4091 = vpop.f32.mrf.mxu0
        %4092 = vdwg.mxu0
        %v4093 = vadd.f32 %v3937, %v4079
        %v4094 = vadd.f32 %v3940, %v4082
        %v4095 = vadd.f32 %v3945, %v4087
        %v4096 = vadd.f32 %v3948, %v4090
        %v4097 = vld [vmem:[#allocation2 + $0x8] sm:$0x3]
        %v4098 = vld [vmem:[#allocation2 + $0x14] sm:$0x3]
        %v4100 = vshrl.u32 %v3951, 16
        %v4102 = vrot.slane %v4100, 5
        %v4103 = vshll.u32 %v3951, 16
        %v4105 = vrot.slane %v4103, 6
        %v4106 = vor.u32 %v4102, %v4105
        %v4107 = vrot.slane %v4106, 4
        %v4108 = vrot.slane %v3686, 5
        %v4109 = vrot.slane %v3682, 6
        %v4110 = vor.u32 %v4108, %v4109
        %v4111 = vsel %vm825, %v4107, %v4110
        %v4112 = vrot.slane %v4110, 4
        %v4114 = vshrl.u32 %v4097, 16
        %v4116 = vrot.slane %v4114, 5
        %v4117 = vshll.u32 %v4097, 16
        %v4119 = vrot.slane %v4117, 6
        %v4120 = vor.u32 %v4116, %v4119
        %v4121 = vsel %vm825, %v4112, %v4120
        %v4123 = vshrl.u32 %v3952, 16
        %v4125 = vrot.slane %v4123, 5
        %v4126 = vshll.u32 %v3952, 16
        %v4128 = vrot.slane %v4126, 6
        %v4129 = vor.u32 %v4125, %v4128
        %v4130 = vrot.slane %v4129, 4
        %v4131 = vrot.slane %v3710, 5
        %v4132 = vrot.slane %v3706, 6
        %v4133 = vor.u32 %v4131, %v4132
        %v4134 = vsel %vm825, %v4130, %v4133
        %v4135 = vrot.slane %v4133, 4
        %v4137 = vshrl.u32 %v4098, 16
        %v4139 = vrot.slane %v4137, 5
        %v4140 = vshll.u32 %v4098, 16
        %v4142 = vrot.slane %v4140, 6
        %v4143 = vor.u32 %v4139, %v4142
        %v4144 = vsel %vm825, %v4135, %v4143
        %s4145 = scalar_lea.vmem %s1, 832
        %v4146 = vld [vmem:[%s4145] sm:$0xf]
        %v4147 = vld [vmem:[%s4145 + $0x4] sm:$0xf]
        %v4148 = vld [vmem:[%s4145 + $0x8] sm:$0xf]
        %v4149 = vld [vmem:[%s4145 + $0xc] sm:$0xf]
        %v4150 = vld [vmem:[%s4145 + $0x10] sm:$0xf]
        %v4151 = vld [vmem:[%s4145 + $0x14] sm:$0xf]
        %v4152 = vld [vmem:[%s4145 + $0x18] sm:$0xf]
        %v4153 = vld [vmem:[%s4145 + $0x1c] sm:$0xf]
        %v4154 = vld [vmem:[%s4145 + $0x20] sm:$0xf]
        %v4155 = vld [vmem:[%s4145 + $0x24] sm:$0xf]
        %v4156 = vld [vmem:[%s4145 + $0x28] sm:$0xf]
        %v4157 = vld [vmem:[%s4145 + $0x2c] sm:$0xf]
        %v4158 = vld [vmem:[%s4145 + $0x30] sm:$0xf]
        %v4159 = vld [vmem:[%s4145 + $0x34] sm:$0xf]
        %v4160 = vld [vmem:[%s4145 + $0x38] sm:$0xf]
        %v4161 = vld [vmem:[%s4145 + $0x3c] sm:$0xf]
        %v4162 = vunpack.c.l.b16 %v4111
        %v4163 = vunpack.c.l.b16 %v4121
        %v4164 = vunpack.c.l.b16 %v4134
        %v4165 = vunpack.c.l.b16 %v4144
        %v4166 = vpack.c.b16 %v4163, %v4162
        %v4167 = vpack.c.b16 %v4165, %v4164
        %v4186 = vunpack.c.l.b16 %v4146
        %v4187 = vunpack.c.l.b16 %v4147
        %v4188 = vunpack.c.l.b16 %v4148
        %v4189 = vunpack.c.l.b16 %v4149
        %v4190 = vunpack.c.l.b16 %v4150
        %v4191 = vunpack.c.l.b16 %v4151
        %v4192 = vunpack.c.l.b16 %v4152
        %v4193 = vunpack.c.l.b16 %v4153
        %v4194 = vunpack.c.l.b16 %v4154
        %v4195 = vunpack.c.l.b16 %v4155
        %v4196 = vunpack.c.l.b16 %v4156
        %v4197 = vunpack.c.l.b16 %v4157
        %v4198 = vunpack.c.l.b16 %v4158
        %v4199 = vunpack.c.l.b16 %v4159
        %v4200 = vunpack.c.l.b16 %v4160
        %v4201 = vunpack.c.l.b16 %v4161
        %v4202 = vpack.c.b16 %v4187, %v4186
        %v4203 = vpack.c.b16 %v4189, %v4188
        %v4204 = vpack.c.b16 %v4191, %v4190
        %v4205 = vpack.c.b16 %v4193, %v4192
        %v4206 = vpack.c.b16 %v4195, %v4194
        %v4207 = vpack.c.b16 %v4197, %v4196
        %v4208 = vpack.c.b16 %v4199, %v4198
        %v4209 = vpack.c.b16 %v4201, %v4200
        %4218 = vmatprep.subr.bf16.mxu0 0
        %4219 = vmatpush1.bf16.msra.mxu0 %v4209
        %4220 = vmatprep.subr.bf16.mxu0 0
        %4221 = vmatpush1.bf16.msra.mxu0 %v4208
        %4222 = vmatprep.subr.bf16.mxu0 0
        %4223 = vmatpush1.bf16.msra.mxu0 %v4207
        %4224 = vmatprep.subr.bf16.mxu0 0
        %4225 = vmatpush1.bf16.msra.mxu0 %v4206
        %4226 = vmatprep.subr.bf16.mxu0 0
        %4227 = vmatpush1.bf16.msra.mxu0 %v4205
        %4228 = vmatprep.subr.bf16.mxu0 0
        %4229 = vmatpush1.bf16.msra.mxu0 %v4204
        %4230 = vmatprep.subr.bf16.mxu0 0
        %4231 = vmatpush1.bf16.msra.mxu0 %v4203
        %4232 = vmatprep.subr.bf16.mxu0 0
        %4233 = vmatpush1.bf16.msra.mxu0 %v4202
        %4234 = vmatprep.subr.bf16.mxu0 0
        %4235 = vmatpush2.bf16.msra.mxu0 0
        %4236 = vmatprep.subr.bf16.mxu0 0
        %4237 = vmatpush2.bf16.msra.mxu0 0
        %4238 = vmatprep.subr.bf16.mxu0 0
        %4239 = vmatpush2.bf16.msra.mxu0 0
        %4240 = vmatprep.subr.bf16.mxu0 0
        %4241 = vmatpush2.bf16.msra.mxu0 0
        %4242 = vmatprep.subr.bf16.mxu0 0
        %4243 = vmatpush2.bf16.msra.mxu0 0
        %4244 = vmatprep.subr.bf16.mxu0 0
        %4245 = vmatpush2.bf16.msra.mxu0 0
        %4246 = vmatprep.subr.bf16.mxu0 0
        %4247 = vmatpush2.bf16.msra.mxu0 0
        %4248 = vmatprep.subr.bf16.mxu0 0
        %4249 = vmatpush2.bf16.msra.mxu0 0
        %4250 = vmatprep.mubr.bf16.mxu0 0
        %4251 = vmatmul.mubr.bf16.gmra.mxu0 %v4166
        %v4252 = vpop.f32.mrf.mxu0
        %v4253 = vadd.f32 0.0, %v4252
        %v4254 = vpop.f32.mrf.mxu0
        %v4255 = vpop.f32.mrf.mxu0
        %v4256 = vadd.f32 0.0, %v4255
        %v4257 = vpop.f32.mrf.mxu0
        %4258 = vmatprep.mubr.bf16.mxu0 0
        %4259 = vmatmul.mubr.bf16.gmra.mxu0 %v4167
        %v4260 = vpop.f32.mrf.mxu0
        %v4261 = vadd.f32 0.0, %v4260
        %v4262 = vpop.f32.mrf.mxu0
        %v4263 = vpop.f32.mrf.mxu0
        %v4264 = vadd.f32 0.0, %v4263
        %v4265 = vpop.f32.mrf.mxu0
        %4266 = vdwg.mxu0
        %v4267 = vadd.f32 %v4093, %v4253
        %v4268 = vadd.f32 %v4094, %v4256
        %v4269 = vadd.f32 %v4095, %v4261
        %v4270 = vadd.f32 %v4096, %v4264
        %v4271 = vld [vmem:[#allocation2] sm:$0xc]
        %v4272 = vld [vmem:[#allocation2 + $0xc] sm:$0xc]
        %v4277 = vrot.slane %v4271, 6
        %v4278 = vrot.slane %v4277, 4
        %v4279 = vrot.slane %v3650, 6
        %v4280 = vsel %vm1006, %v4278, %v4279
        %v4281 = vrot.slane %v4279, 4
        %v4282 = vrot.slane %v4097, 6
        %v4283 = vsel %vm1006, %v4281, %v4282
        %v4284 = vrot.slane %v4272, 6
        %v4285 = vrot.slane %v4284, 4
        %v4286 = vrot.slane %v3652, 6
        %v4287 = vsel %vm1006, %v4285, %v4286
        %v4288 = vrot.slane %v4286, 4
        %v4289 = vrot.slane %v4098, 6
        %v4290 = vsel %vm1006, %v4288, %v4289
        %s4291 = scalar_lea.vmem %s1, 896
        %v4292 = vld [vmem:[%s4291] sm:$0xf]
        %v4293 = vld [vmem:[%s4291 + $0x4] sm:$0xf]
        %v4294 = vld [vmem:[%s4291 + $0x8] sm:$0xf]
        %v4295 = vld [vmem:[%s4291 + $0xc] sm:$0xf]
        %v4296 = vld [vmem:[%s4291 + $0x10] sm:$0xf]
        %v4297 = vld [vmem:[%s4291 + $0x14] sm:$0xf]
        %v4298 = vld [vmem:[%s4291 + $0x18] sm:$0xf]
        %v4299 = vld [vmem:[%s4291 + $0x1c] sm:$0xf]
        %v4300 = vld [vmem:[%s4291 + $0x20] sm:$0xf]
        %v4301 = vld [vmem:[%s4291 + $0x24] sm:$0xf]
        %v4302 = vld [vmem:[%s4291 + $0x28] sm:$0xf]
        %v4303 = vld [vmem:[%s4291 + $0x2c] sm:$0xf]
        %v4304 = vld [vmem:[%s4291 + $0x30] sm:$0xf]
        %v4305 = vld [vmem:[%s4291 + $0x34] sm:$0xf]
        %v4306 = vld [vmem:[%s4291 + $0x38] sm:$0xf]
        %v4307 = vld [vmem:[%s4291 + $0x3c] sm:$0xf]
        %v4308 = vunpack.c.l.b16 %v4280
        %v4309 = vunpack.c.l.b16 %v4283
        %v4310 = vunpack.c.l.b16 %v4287
        %v4311 = vunpack.c.l.b16 %v4290
        %v4312 = vpack.c.b16 %v4309, %v4308
        %v4313 = vpack.c.b16 %v4311, %v4310
        %v4332 = vunpack.c.l.b16 %v4292
        %v4333 = vunpack.c.l.b16 %v4293
        %v4334 = vunpack.c.l.b16 %v4294
        %v4335 = vunpack.c.l.b16 %v4295
        %v4336 = vunpack.c.l.b16 %v4296
        %v4337 = vunpack.c.l.b16 %v4297
        %v4338 = vunpack.c.l.b16 %v4298
        %v4339 = vunpack.c.l.b16 %v4299
        %v4340 = vunpack.c.l.b16 %v4300
        %v4341 = vunpack.c.l.b16 %v4301
        %v4342 = vunpack.c.l.b16 %v4302
        %v4343 = vunpack.c.l.b16 %v4303
        %v4344 = vunpack.c.l.b16 %v4304
        %v4345 = vunpack.c.l.b16 %v4305
        %v4346 = vunpack.c.l.b16 %v4306
        %v4347 = vunpack.c.l.b16 %v4307
        %v4348 = vpack.c.b16 %v4333, %v4332
        %v4349 = vpack.c.b16 %v4335, %v4334
        %v4350 = vpack.c.b16 %v4337, %v4336
        %v4351 = vpack.c.b16 %v4339, %v4338
        %v4352 = vpack.c.b16 %v4341, %v4340
        %v4353 = vpack.c.b16 %v4343, %v4342
        %v4354 = vpack.c.b16 %v4345, %v4344
        %v4355 = vpack.c.b16 %v4347, %v4346
        %4364 = vmatprep.subr.bf16.mxu0 0
        %4365 = vmatpush1.bf16.msra.mxu0 %v4355
        %4366 = vmatprep.subr.bf16.mxu0 0
        %4367 = vmatpush1.bf16.msra.mxu0 %v4354
        %4368 = vmatprep.subr.bf16.mxu0 0
        %4369 = vmatpush1.bf16.msra.mxu0 %v4353
        %4370 = vmatprep.subr.bf16.mxu0 0
        %4371 = vmatpush1.bf16.msra.mxu0 %v4352
        %4372 = vmatprep.subr.bf16.mxu0 0
        %4373 = vmatpush1.bf16.msra.mxu0 %v4351
        %4374 = vmatprep.subr.bf16.mxu0 0
        %4375 = vmatpush1.bf16.msra.mxu0 %v4350
        %4376 = vmatprep.subr.bf16.mxu0 0
        %4377 = vmatpush1.bf16.msra.mxu0 %v4349
        %4378 = vmatprep.subr.bf16.mxu0 0
        %4379 = vmatpush1.bf16.msra.mxu0 %v4348
        %4380 = vmatprep.subr.bf16.mxu0 0
        %4381 = vmatpush2.bf16.msra.mxu0 0
        %4382 = vmatprep.subr.bf16.mxu0 0
        %4383 = vmatpush2.bf16.msra.mxu0 0
        %4384 = vmatprep.subr.bf16.mxu0 0
        %4385 = vmatpush2.bf16.msra.mxu0 0
        %4386 = vmatprep.subr.bf16.mxu0 0
        %4387 = vmatpush2.bf16.msra.mxu0 0
        %4388 = vmatprep.subr.bf16.mxu0 0
        %4389 = vmatpush2.bf16.msra.mxu0 0
        %4390 = vmatprep.subr.bf16.mxu0 0
        %4391 = vmatpush2.bf16.msra.mxu0 0
        %4392 = vmatprep.subr.bf16.mxu0 0
        %4393 = vmatpush2.bf16.msra.mxu0 0
        %4394 = vmatprep.subr.bf16.mxu0 0
        %4395 = vmatpush2.bf16.msra.mxu0 0
        %4396 = vmatprep.mubr.bf16.mxu0 0
        %4397 = vmatmul.mubr.bf16.gmra.mxu0 %v4312
        %v4398 = vpop.f32.mrf.mxu0
        %v4399 = vadd.f32 0.0, %v4398
        %v4400 = vpop.f32.mrf.mxu0
        %v4401 = vpop.f32.mrf.mxu0
        %v4402 = vadd.f32 0.0, %v4401
        %v4403 = vpop.f32.mrf.mxu0
        %4404 = vmatprep.mubr.bf16.mxu0 0
        %4405 = vmatmul.mubr.bf16.gmra.mxu0 %v4313
        %v4406 = vpop.f32.mrf.mxu0
        %v4407 = vadd.f32 0.0, %v4406
        %v4408 = vpop.f32.mrf.mxu0
        %v4409 = vpop.f32.mrf.mxu0
        %v4410 = vadd.f32 0.0, %v4409
        %v4411 = vpop.f32.mrf.mxu0
        %4412 = vdwg.mxu0
        %v4413 = vadd.f32 %v4267, %v4399
        %v4414 = vadd.f32 %v4268, %v4402
        %v4415 = vadd.f32 %v4269, %v4407
        %v4416 = vadd.f32 %v4270, %v4410
        %v4418 = vlaneseq
        %v4419 = vshrl.u32 %v4418, 7
        %v4420 = vsub.s32 0, %v4419
        %v4421 = vrot.slane %v3648, %v4420
        %v4423 = vadd.f32 %v4413, %v4421
        %v4424 = vadd.f32 %v4414, %v4421
        %v4425 = vadd.f32 %v4415, %v4421
        %v4426 = vadd.f32 %v4416, %v4421
        %v4427 = vmax.f32 %v4423, 0.0
        %v4428 = vmax.f32 %v4424, 0.0
        %v4429 = vmax.f32 %v4425, 0.0
        %v4430 = vmax.f32 %v4426, 0.0
        %v4431 = vpack.c.bf16 %v4428, %v4427
        %v4432 = vpack.c.bf16 %v4430, %v4429
        %v4435 = vunpack.c.l.b16 %v4431
        %v4436 = vunpack.c.h.b16 %v4431
        %v4437 = vunpack.c.l.b16 %v4432
        %v4438 = vunpack.c.h.b16 %v4432
        %v4439 = vpack.c.b16 %v4435, %v4435
        %v4440 = vpack.c.b16 %v4436, %v4436
        %v4441 = vpack.c.b16 %v4437, %v4437
        %v4442 = vpack.c.b16 %v4438, %v4438
        %v4443 = vrot.slane %v4439, 7
        %v4444 = vrot.slane %v4443, 4
        %v4445 = vrot.slane %v4440, 7
        %v4446 = vsel %vm344, %v4444, %v4445
        %v4447 = vrot.slane %v4445, 4
        %v4448 = vrot.slane %v4441, 7
        %v4449 = vrot.slane %v4448, 4
        %v4450 = vrot.slane %v4442, 7
        %v4451 = vsel %vm344, %v4449, %v4450
        %v4452 = vrot.slane %v4450, 4
        %4459 = vst [vmem:[#allocation2] sm:$0xe] %v4443
        %4460 = vst [vmem:[#allocation2 + $0x4] sm:$0xf] %v4446
        %4461 = vst [vmem:[#allocation2 + $0x8] sm:$0x1] %v4447
        %4462 = vst [vmem:[#allocation2 + $0xc] sm:$0xe] %v4448
        %4463 = vst [vmem:[#allocation2 + $0x10] sm:$0xf] %v4451
        %4464 = vst [vmem:[#allocation2 + $0x14] sm:$0x1] %v4452
        %s4465 = scalar_lea.vmem %s4, 2
        %v4466 = vld [vmem:[%s4465] sm:$0x1]
        %v4467 = vld [vmem:[#allocation2] sm:$0xf]
        %v4468 = vld [vmem:[#allocation2 + $0x4] sm:$0xf]
        %v4469 = vld [vmem:[#allocation2 + $0xc] sm:$0xf]
        %v4470 = vld [vmem:[#allocation2 + $0x10] sm:$0xf]
        %s4471 = scalar_lea.vmem [#allocation3], 640
        %v4472 = vld [vmem:[%s4471] sm:$0xf]
        %v4473 = vld [vmem:[%s4471 + $0x4] sm:$0xf]
        %v4474 = vld [vmem:[%s4471 + $0x8] sm:$0xf]
        %v4475 = vld [vmem:[%s4471 + $0xc] sm:$0xf]
        %v4476 = vld [vmem:[%s4471 + $0x10] sm:$0xf]
        %v4477 = vld [vmem:[%s4471 + $0x14] sm:$0xf]
        %v4478 = vld [vmem:[%s4471 + $0x18] sm:$0xf]
        %v4479 = vld [vmem:[%s4471 + $0x1c] sm:$0xf]
        %v4480 = vld [vmem:[%s4471 + $0x20] sm:$0xf]
        %v4481 = vld [vmem:[%s4471 + $0x24] sm:$0xf]
        %v4482 = vld [vmem:[%s4471 + $0x28] sm:$0xf]
        %v4483 = vld [vmem:[%s4471 + $0x2c] sm:$0xf]
        %v4484 = vld [vmem:[%s4471 + $0x30] sm:$0xf]
        %v4485 = vld [vmem:[%s4471 + $0x34] sm:$0xf]
        %v4486 = vld [vmem:[%s4471 + $0x38] sm:$0xf]
        %v4487 = vld [vmem:[%s4471 + $0x3c] sm:$0xf]
        %v4488 = vld [vmem:[#allocation2 + $0x8] sm:$0x1]
        %v4489 = vld [vmem:[#allocation2 + $0x14] sm:$0x1]
        %v4491 = vshrl.u32 %v4467, 16
        %v4493 = vrot.slane %v4491, 4
        %v4494 = vshll.u32 %v4467, 16
        %v4496 = vrot.slane %v4494, 5
        %v4497 = vor.u32 %v4493, %v4496
        %v4498 = vrot.slane %v4497, 4
        %v4500 = vshll.u32 %v4468, 16
        %v4502 = vrot.slane %v4500, 5
        %v4503 = vsel %vm392, %v4498, %v4502
        %v4504 = vshrl.u32 %v4468, 16
        %v4506 = vrot.slane %v4504, 4
        %v4507 = vor.u32 %v4506, %v4502
        %v4508 = vrot.slane %v4507, 4
        %v4510 = vshll.u32 %v4488, 16
        %v4512 = vrot.slane %v4510, 5
        %v4513 = vsel %vm392, %v4508, %v4512
        %v4515 = vshrl.u32 %v4469, 16
        %v4517 = vrot.slane %v4515, 4
        %v4518 = vshll.u32 %v4469, 16
        %v4520 = vrot.slane %v4518, 5
        %v4521 = vor.u32 %v4517, %v4520
        %v4522 = vrot.slane %v4521, 4
        %v4524 = vshll.u32 %v4470, 16
        %v4526 = vrot.slane %v4524, 5
        %v4527 = vsel %vm392, %v4522, %v4526
        %v4528 = vshrl.u32 %v4470, 16
        %v4530 = vrot.slane %v4528, 4
        %v4531 = vor.u32 %v4530, %v4526
        %v4532 = vrot.slane %v4531, 4
        %v4534 = vshll.u32 %v4489, 16
        %v4536 = vrot.slane %v4534, 5
        %v4537 = vsel %vm392, %v4532, %v4536
        %s4538 = scalar_lea.vmem [#allocation3], 704
        %v4539 = vld [vmem:[%s4538] sm:$0xf]
        %v4540 = vld [vmem:[%s4538 + $0x4] sm:$0xf]
        %v4541 = vld [vmem:[%s4538 + $0x8] sm:$0xf]
        %v4542 = vld [vmem:[%s4538 + $0xc] sm:$0xf]
        %v4543 = vld [vmem:[%s4538 + $0x10] sm:$0xf]
        %v4544 = vld [vmem:[%s4538 + $0x14] sm:$0xf]
        %v4545 = vld [vmem:[%s4538 + $0x18] sm:$0xf]
        %v4546 = vld [vmem:[%s4538 + $0x1c] sm:$0xf]
        %v4547 = vld [vmem:[%s4538 + $0x20] sm:$0xf]
        %v4548 = vld [vmem:[%s4538 + $0x24] sm:$0xf]
        %v4549 = vld [vmem:[%s4538 + $0x28] sm:$0xf]
        %v4550 = vld [vmem:[%s4538 + $0x2c] sm:$0xf]
        %v4551 = vld [vmem:[%s4538 + $0x30] sm:$0xf]
        %v4552 = vld [vmem:[%s4538 + $0x34] sm:$0xf]
        %v4553 = vld [vmem:[%s4538 + $0x38] sm:$0xf]
        %v4554 = vld [vmem:[%s4538 + $0x3c] sm:$0xf]
        %v4555 = vunpack.c.l.b16 %v4503
        %v4556 = vunpack.c.l.b16 %v4513
        %v4557 = vunpack.c.l.b16 %v4527
        %v4558 = vunpack.c.l.b16 %v4537
        %v4559 = vpack.c.b16 %v4556, %v4555
        %v4560 = vpack.c.b16 %v4558, %v4557
        %v4579 = vunpack.c.l.b16 %v4539
        %v4580 = vunpack.c.l.b16 %v4540
        %v4581 = vunpack.c.l.b16 %v4541
        %v4582 = vunpack.c.l.b16 %v4542
        %v4583 = vunpack.c.l.b16 %v4543
        %v4584 = vunpack.c.l.b16 %v4544
        %v4585 = vunpack.c.l.b16 %v4545
        %v4586 = vunpack.c.l.b16 %v4546
        %v4587 = vunpack.c.l.b16 %v4547
        %v4588 = vunpack.c.l.b16 %v4548
        %v4589 = vunpack.c.l.b16 %v4549
        %v4590 = vunpack.c.l.b16 %v4550
        %v4591 = vunpack.c.l.b16 %v4551
        %v4592 = vunpack.c.l.b16 %v4552
        %v4593 = vunpack.c.l.b16 %v4553
        %v4594 = vunpack.c.l.b16 %v4554
        %v4595 = vpack.c.b16 %v4580, %v4579
        %v4596 = vpack.c.b16 %v4582, %v4581
        %v4597 = vpack.c.b16 %v4584, %v4583
        %v4598 = vpack.c.b16 %v4586, %v4585
        %v4599 = vpack.c.b16 %v4588, %v4587
        %v4600 = vpack.c.b16 %v4590, %v4589
        %v4601 = vpack.c.b16 %v4592, %v4591
        %v4602 = vpack.c.b16 %v4594, %v4593
        %4611 = vmatprep.subr.bf16.mxu0 0
        %4612 = vmatpush1.bf16.msra.mxu0 %v4602
        %4613 = vmatprep.subr.bf16.mxu0 0
        %4614 = vmatpush1.bf16.msra.mxu0 %v4601
        %4615 = vmatprep.subr.bf16.mxu0 0
        %4616 = vmatpush1.bf16.msra.mxu0 %v4600
        %4617 = vmatprep.subr.bf16.mxu0 0
        %4618 = vmatpush1.bf16.msra.mxu0 %v4599
        %4619 = vmatprep.subr.bf16.mxu0 0
        %4620 = vmatpush1.bf16.msra.mxu0 %v4598
        %4621 = vmatprep.subr.bf16.mxu0 0
        %4622 = vmatpush1.bf16.msra.mxu0 %v4597
        %4623 = vmatprep.subr.bf16.mxu0 0
        %4624 = vmatpush1.bf16.msra.mxu0 %v4596
        %4625 = vmatprep.subr.bf16.mxu0 0
        %4626 = vmatpush1.bf16.msra.mxu0 %v4595
        %4627 = vmatprep.subr.bf16.mxu0 0
        %4628 = vmatpush2.bf16.msra.mxu0 0
        %4629 = vmatprep.subr.bf16.mxu0 0
        %4630 = vmatpush2.bf16.msra.mxu0 0
        %4631 = vmatprep.subr.bf16.mxu0 0
        %4632 = vmatpush2.bf16.msra.mxu0 0
        %4633 = vmatprep.subr.bf16.mxu0 0
        %4634 = vmatpush2.bf16.msra.mxu0 0
        %4635 = vmatprep.subr.bf16.mxu0 0
        %4636 = vmatpush2.bf16.msra.mxu0 0
        %4637 = vmatprep.subr.bf16.mxu0 0
        %4638 = vmatpush2.bf16.msra.mxu0 0
        %4639 = vmatprep.subr.bf16.mxu0 0
        %4640 = vmatpush2.bf16.msra.mxu0 0
        %4641 = vmatprep.subr.bf16.mxu0 0
        %4642 = vmatpush2.bf16.msra.mxu0 0
        %4643 = vmatprep.mubr.bf16.mxu0 0
        %4644 = vmatmul.mubr.bf16.gmra.mxu0 %v4559
        %v4645 = vpop.f32.mrf.mxu0
        %v4646 = vadd.f32 0.0, %v4645
        %v4647 = vpop.f32.mrf.mxu0
        %v4648 = vpop.f32.mrf.mxu0
        %v4649 = vadd.f32 0.0, %v4648
        %v4650 = vpop.f32.mrf.mxu0
        %4651 = vmatprep.mubr.bf16.mxu0 0
        %4652 = vmatmul.mubr.bf16.gmra.mxu0 %v4560
        %v4653 = vpop.f32.mrf.mxu0
        %v4654 = vadd.f32 0.0, %v4653
        %v4655 = vpop.f32.mrf.mxu0
        %v4656 = vpop.f32.mrf.mxu0
        %v4657 = vadd.f32 0.0, %v4656
        %v4658 = vpop.f32.mrf.mxu0
        %4659 = vdwg.mxu0
        %v4664 = vunpack.c.l.b16 %v4467
        %v4665 = vunpack.c.l.b16 %v4468
        %v4666 = vunpack.c.l.b16 %v4469
        %v4667 = vunpack.c.l.b16 %v4470
        %v4668 = vpack.c.b16 %v4665, %v4664
        %v4669 = vpack.c.b16 %v4667, %v4666
        %v4688 = vunpack.c.l.b16 %v4472
        %v4689 = vunpack.c.l.b16 %v4473
        %v4690 = vunpack.c.l.b16 %v4474
        %v4691 = vunpack.c.l.b16 %v4475
        %v4692 = vunpack.c.l.b16 %v4476
        %v4693 = vunpack.c.l.b16 %v4477
        %v4694 = vunpack.c.l.b16 %v4478
        %v4695 = vunpack.c.l.b16 %v4479
        %v4696 = vunpack.c.l.b16 %v4480
        %v4697 = vunpack.c.l.b16 %v4481
        %v4698 = vunpack.c.l.b16 %v4482
        %v4699 = vunpack.c.l.b16 %v4483
        %v4700 = vunpack.c.l.b16 %v4484
        %v4701 = vunpack.c.l.b16 %v4485
        %v4702 = vunpack.c.l.b16 %v4486
        %v4703 = vunpack.c.l.b16 %v4487
        %v4704 = vpack.c.b16 %v4689, %v4688
        %v4705 = vpack.c.b16 %v4691, %v4690
        %v4706 = vpack.c.b16 %v4693, %v4692
        %v4707 = vpack.c.b16 %v4695, %v4694
        %v4708 = vpack.c.b16 %v4697, %v4696
        %v4709 = vpack.c.b16 %v4699, %v4698
        %v4710 = vpack.c.b16 %v4701, %v4700
        %v4711 = vpack.c.b16 %v4703, %v4702
        %4720 = vmatprep.subr.bf16.mxu0 0
        %4721 = vmatpush1.bf16.msra.mxu0 %v4711
        %4722 = vmatprep.subr.bf16.mxu0 0
        %4723 = vmatpush1.bf16.msra.mxu0 %v4710
        %4724 = vmatprep.subr.bf16.mxu0 0
        %4725 = vmatpush1.bf16.msra.mxu0 %v4709
        %4726 = vmatprep.subr.bf16.mxu0 0
        %4727 = vmatpush1.bf16.msra.mxu0 %v4708
        %4728 = vmatprep.subr.bf16.mxu0 0
        %4729 = vmatpush1.bf16.msra.mxu0 %v4707
        %4730 = vmatprep.subr.bf16.mxu0 0
        %4731 = vmatpush1.bf16.msra.mxu0 %v4706
        %4732 = vmatprep.subr.bf16.mxu0 0
        %4733 = vmatpush1.bf16.msra.mxu0 %v4705
        %4734 = vmatprep.subr.bf16.mxu0 0
        %4735 = vmatpush1.bf16.msra.mxu0 %v4704
        %4736 = vmatprep.subr.bf16.mxu0 0
        %4737 = vmatpush2.bf16.msra.mxu0 0
        %4738 = vmatprep.subr.bf16.mxu0 0
        %4739 = vmatpush2.bf16.msra.mxu0 0
        %4740 = vmatprep.subr.bf16.mxu0 0
        %4741 = vmatpush2.bf16.msra.mxu0 0
        %4742 = vmatprep.subr.bf16.mxu0 0
        %4743 = vmatpush2.bf16.msra.mxu0 0
        %4744 = vmatprep.subr.bf16.mxu0 0
        %4745 = vmatpush2.bf16.msra.mxu0 0
        %4746 = vmatprep.subr.bf16.mxu0 0
        %4747 = vmatpush2.bf16.msra.mxu0 0
        %4748 = vmatprep.subr.bf16.mxu0 0
        %4749 = vmatpush2.bf16.msra.mxu0 0
        %4750 = vmatprep.subr.bf16.mxu0 0
        %4751 = vmatpush2.bf16.msra.mxu0 0
        %4752 = vmatprep.mubr.bf16.mxu0 0
        %4753 = vmatmul.mubr.bf16.gmra.mxu0 %v4668
        %v4754 = vpop.f32.mrf.mxu0
        %v4755 = vadd.f32 %v4646, %v4754
        %v4756 = vpop.f32.mrf.mxu0
        %v4757 = vpop.f32.mrf.mxu0
        %v4758 = vadd.f32 %v4649, %v4757
        %v4759 = vpop.f32.mrf.mxu0
        %4760 = vmatprep.mubr.bf16.mxu0 0
        %4761 = vmatmul.mubr.bf16.gmra.mxu0 %v4669
        %v4762 = vpop.f32.mrf.mxu0
        %v4763 = vadd.f32 %v4654, %v4762
        %v4764 = vpop.f32.mrf.mxu0
        %v4765 = vpop.f32.mrf.mxu0
        %v4766 = vadd.f32 %v4657, %v4765
        %v4767 = vpop.f32.mrf.mxu0
        %4768 = vdwg.mxu0
        %v4769 = vld [vmem:[#allocation2] sm:$0xe]
        %v4770 = vld [vmem:[#allocation2 + $0xc] sm:$0xe]
        %v4775 = vrot.slane %v4769, 5
        %v4776 = vrot.slane %v4775, 4
        %v4777 = vrot.slane %v4468, 5
        %v4778 = vsel %vm680, %v4776, %v4777
        %v4779 = vrot.slane %v4777, 4
        %v4780 = vrot.slane %v4488, 5
        %v4781 = vsel %vm680, %v4779, %v4780
        %v4782 = vrot.slane %v4770, 5
        %v4783 = vrot.slane %v4782, 4
        %v4784 = vrot.slane %v4470, 5
        %v4785 = vsel %vm680, %v4783, %v4784
        %v4786 = vrot.slane %v4784, 4
        %v4787 = vrot.slane %v4489, 5
        %v4788 = vsel %vm680, %v4786, %v4787
        %s4789 = scalar_lea.vmem [#allocation3], 768
        %v4790 = vld [vmem:[%s4789] sm:$0xf]
        %v4791 = vld [vmem:[%s4789 + $0x4] sm:$0xf]
        %v4792 = vld [vmem:[%s4789 + $0x8] sm:$0xf]
        %v4793 = vld [vmem:[%s4789 + $0xc] sm:$0xf]
        %v4794 = vld [vmem:[%s4789 + $0x10] sm:$0xf]
        %v4795 = vld [vmem:[%s4789 + $0x14] sm:$0xf]
        %v4796 = vld [vmem:[%s4789 + $0x18] sm:$0xf]
        %v4797 = vld [vmem:[%s4789 + $0x1c] sm:$0xf]
        %v4798 = vld [vmem:[%s4789 + $0x20] sm:$0xf]
        %v4799 = vld [vmem:[%s4789 + $0x24] sm:$0xf]
        %v4800 = vld [vmem:[%s4789 + $0x28] sm:$0xf]
        %v4801 = vld [vmem:[%s4789 + $0x2c] sm:$0xf]
        %v4802 = vld [vmem:[%s4789 + $0x30] sm:$0xf]
        %v4803 = vld [vmem:[%s4789 + $0x34] sm:$0xf]
        %v4804 = vld [vmem:[%s4789 + $0x38] sm:$0xf]
        %v4805 = vld [vmem:[%s4789 + $0x3c] sm:$0xf]
        %v4806 = vunpack.c.l.b16 %v4778
        %v4807 = vunpack.c.l.b16 %v4781
        %v4808 = vunpack.c.l.b16 %v4785
        %v4809 = vunpack.c.l.b16 %v4788
        %v4810 = vpack.c.b16 %v4807, %v4806
        %v4811 = vpack.c.b16 %v4809, %v4808
        %v4830 = vunpack.c.l.b16 %v4790
        %v4831 = vunpack.c.l.b16 %v4791
        %v4832 = vunpack.c.l.b16 %v4792
        %v4833 = vunpack.c.l.b16 %v4793
        %v4834 = vunpack.c.l.b16 %v4794
        %v4835 = vunpack.c.l.b16 %v4795
        %v4836 = vunpack.c.l.b16 %v4796
        %v4837 = vunpack.c.l.b16 %v4797
        %v4838 = vunpack.c.l.b16 %v4798
        %v4839 = vunpack.c.l.b16 %v4799
        %v4840 = vunpack.c.l.b16 %v4800
        %v4841 = vunpack.c.l.b16 %v4801
        %v4842 = vunpack.c.l.b16 %v4802
        %v4843 = vunpack.c.l.b16 %v4803
        %v4844 = vunpack.c.l.b16 %v4804
        %v4845 = vunpack.c.l.b16 %v4805
        %v4846 = vpack.c.b16 %v4831, %v4830
        %v4847 = vpack.c.b16 %v4833, %v4832
        %v4848 = vpack.c.b16 %v4835, %v4834
        %v4849 = vpack.c.b16 %v4837, %v4836
        %v4850 = vpack.c.b16 %v4839, %v4838
        %v4851 = vpack.c.b16 %v4841, %v4840
        %v4852 = vpack.c.b16 %v4843, %v4842
        %v4853 = vpack.c.b16 %v4845, %v4844
        %4862 = vmatprep.subr.bf16.mxu0 0
        %4863 = vmatpush1.bf16.msra.mxu0 %v4853
        %4864 = vmatprep.subr.bf16.mxu0 0
        %4865 = vmatpush1.bf16.msra.mxu0 %v4852
        %4866 = vmatprep.subr.bf16.mxu0 0
        %4867 = vmatpush1.bf16.msra.mxu0 %v4851
        %4868 = vmatprep.subr.bf16.mxu0 0
        %4869 = vmatpush1.bf16.msra.mxu0 %v4850
        %4870 = vmatprep.subr.bf16.mxu0 0
        %4871 = vmatpush1.bf16.msra.mxu0 %v4849
        %4872 = vmatprep.subr.bf16.mxu0 0
        %4873 = vmatpush1.bf16.msra.mxu0 %v4848
        %4874 = vmatprep.subr.bf16.mxu0 0
        %4875 = vmatpush1.bf16.msra.mxu0 %v4847
        %4876 = vmatprep.subr.bf16.mxu0 0
        %4877 = vmatpush1.bf16.msra.mxu0 %v4846
        %4878 = vmatprep.subr.bf16.mxu0 0
        %4879 = vmatpush2.bf16.msra.mxu0 0
        %4880 = vmatprep.subr.bf16.mxu0 0
        %4881 = vmatpush2.bf16.msra.mxu0 0
        %4882 = vmatprep.subr.bf16.mxu0 0
        %4883 = vmatpush2.bf16.msra.mxu0 0
        %4884 = vmatprep.subr.bf16.mxu0 0
        %4885 = vmatpush2.bf16.msra.mxu0 0
        %4886 = vmatprep.subr.bf16.mxu0 0
        %4887 = vmatpush2.bf16.msra.mxu0 0
        %4888 = vmatprep.subr.bf16.mxu0 0
        %4889 = vmatpush2.bf16.msra.mxu0 0
        %4890 = vmatprep.subr.bf16.mxu0 0
        %4891 = vmatpush2.bf16.msra.mxu0 0
        %4892 = vmatprep.subr.bf16.mxu0 0
        %4893 = vmatpush2.bf16.msra.mxu0 0
        %4894 = vmatprep.mubr.bf16.mxu0 0
        %4895 = vmatmul.mubr.bf16.gmra.mxu0 %v4810
        %v4896 = vpop.f32.mrf.mxu0
        %v4897 = vadd.f32 0.0, %v4896
        %v4898 = vpop.f32.mrf.mxu0
        %v4899 = vpop.f32.mrf.mxu0
        %v4900 = vadd.f32 0.0, %v4899
        %v4901 = vpop.f32.mrf.mxu0
        %4902 = vmatprep.mubr.bf16.mxu0 0
        %4903 = vmatmul.mubr.bf16.gmra.mxu0 %v4811
        %v4904 = vpop.f32.mrf.mxu0
        %v4905 = vadd.f32 0.0, %v4904
        %v4906 = vpop.f32.mrf.mxu0
        %v4907 = vpop.f32.mrf.mxu0
        %v4908 = vadd.f32 0.0, %v4907
        %v4909 = vpop.f32.mrf.mxu0
        %4910 = vdwg.mxu0
        %v4911 = vadd.f32 %v4755, %v4897
        %v4912 = vadd.f32 %v4758, %v4900
        %v4913 = vadd.f32 %v4763, %v4905
        %v4914 = vadd.f32 %v4766, %v4908
        %v4915 = vld [vmem:[#allocation2 + $0x8] sm:$0x3]
        %v4916 = vld [vmem:[#allocation2 + $0x14] sm:$0x3]
        %v4918 = vshrl.u32 %v4769, 16
        %v4920 = vrot.slane %v4918, 5
        %v4921 = vshll.u32 %v4769, 16
        %v4923 = vrot.slane %v4921, 6
        %v4924 = vor.u32 %v4920, %v4923
        %v4925 = vrot.slane %v4924, 4
        %v4926 = vrot.slane %v4504, 5
        %v4927 = vrot.slane %v4500, 6
        %v4928 = vor.u32 %v4926, %v4927
        %v4929 = vsel %vm825, %v4925, %v4928
        %v4930 = vrot.slane %v4928, 4
        %v4932 = vshrl.u32 %v4915, 16
        %v4934 = vrot.slane %v4932, 5
        %v4935 = vshll.u32 %v4915, 16
        %v4937 = vrot.slane %v4935, 6
        %v4938 = vor.u32 %v4934, %v4937
        %v4939 = vsel %vm825, %v4930, %v4938
        %v4941 = vshrl.u32 %v4770, 16
        %v4943 = vrot.slane %v4941, 5
        %v4944 = vshll.u32 %v4770, 16
        %v4946 = vrot.slane %v4944, 6
        %v4947 = vor.u32 %v4943, %v4946
        %v4948 = vrot.slane %v4947, 4
        %v4949 = vrot.slane %v4528, 5
        %v4950 = vrot.slane %v4524, 6
        %v4951 = vor.u32 %v4949, %v4950
        %v4952 = vsel %vm825, %v4948, %v4951
        %v4953 = vrot.slane %v4951, 4
        %v4955 = vshrl.u32 %v4916, 16
        %v4957 = vrot.slane %v4955, 5
        %v4958 = vshll.u32 %v4916, 16
        %v4960 = vrot.slane %v4958, 6
        %v4961 = vor.u32 %v4957, %v4960
        %v4962 = vsel %vm825, %v4953, %v4961
        %s4963 = scalar_lea.vmem [#allocation3], 832
        %v4964 = vld [vmem:[%s4963] sm:$0xf]
        %v4965 = vld [vmem:[%s4963 + $0x4] sm:$0xf]
        %v4966 = vld [vmem:[%s4963 + $0x8] sm:$0xf]
        %v4967 = vld [vmem:[%s4963 + $0xc] sm:$0xf]
        %v4968 = vld [vmem:[%s4963 + $0x10] sm:$0xf]
        %v4969 = vld [vmem:[%s4963 + $0x14] sm:$0xf]
        %v4970 = vld [vmem:[%s4963 + $0x18] sm:$0xf]
        %v4971 = vld [vmem:[%s4963 + $0x1c] sm:$0xf]
        %v4972 = vld [vmem:[%s4963 + $0x20] sm:$0xf]
        %v4973 = vld [vmem:[%s4963 + $0x24] sm:$0xf]
        %v4974 = vld [vmem:[%s4963 + $0x28] sm:$0xf]
        %v4975 = vld [vmem:[%s4963 + $0x2c] sm:$0xf]
        %v4976 = vld [vmem:[%s4963 + $0x30] sm:$0xf]
        %v4977 = vld [vmem:[%s4963 + $0x34] sm:$0xf]
        %v4978 = vld [vmem:[%s4963 + $0x38] sm:$0xf]
        %v4979 = vld [vmem:[%s4963 + $0x3c] sm:$0xf]
        %v4980 = vunpack.c.l.b16 %v4929
        %v4981 = vunpack.c.l.b16 %v4939
        %v4982 = vunpack.c.l.b16 %v4952
        %v4983 = vunpack.c.l.b16 %v4962
        %v4984 = vpack.c.b16 %v4981, %v4980
        %v4985 = vpack.c.b16 %v4983, %v4982
        %v5004 = vunpack.c.l.b16 %v4964
        %v5005 = vunpack.c.l.b16 %v4965
        %v5006 = vunpack.c.l.b16 %v4966
        %v5007 = vunpack.c.l.b16 %v4967
        %v5008 = vunpack.c.l.b16 %v4968
        %v5009 = vunpack.c.l.b16 %v4969
        %v5010 = vunpack.c.l.b16 %v4970
        %v5011 = vunpack.c.l.b16 %v4971
        %v5012 = vunpack.c.l.b16 %v4972
        %v5013 = vunpack.c.l.b16 %v4973
        %v5014 = vunpack.c.l.b16 %v4974
        %v5015 = vunpack.c.l.b16 %v4975
        %v5016 = vunpack.c.l.b16 %v4976
        %v5017 = vunpack.c.l.b16 %v4977
        %v5018 = vunpack.c.l.b16 %v4978
        %v5019 = vunpack.c.l.b16 %v4979
        %v5020 = vpack.c.b16 %v5005, %v5004
        %v5021 = vpack.c.b16 %v5007, %v5006
        %v5022 = vpack.c.b16 %v5009, %v5008
        %v5023 = vpack.c.b16 %v5011, %v5010
        %v5024 = vpack.c.b16 %v5013, %v5012
        %v5025 = vpack.c.b16 %v5015, %v5014
        %v5026 = vpack.c.b16 %v5017, %v5016
        %v5027 = vpack.c.b16 %v5019, %v5018
        %5036 = vmatprep.subr.bf16.mxu0 0
        %5037 = vmatpush1.bf16.msra.mxu0 %v5027
        %5038 = vmatprep.subr.bf16.mxu0 0
        %5039 = vmatpush1.bf16.msra.mxu0 %v5026
        %5040 = vmatprep.subr.bf16.mxu0 0
        %5041 = vmatpush1.bf16.msra.mxu0 %v5025
        %5042 = vmatprep.subr.bf16.mxu0 0
        %5043 = vmatpush1.bf16.msra.mxu0 %v5024
        %5044 = vmatprep.subr.bf16.mxu0 0
        %5045 = vmatpush1.bf16.msra.mxu0 %v5023
        %5046 = vmatprep.subr.bf16.mxu0 0
        %5047 = vmatpush1.bf16.msra.mxu0 %v5022
        %5048 = vmatprep.subr.bf16.mxu0 0
        %5049 = vmatpush1.bf16.msra.mxu0 %v5021
        %5050 = vmatprep.subr.bf16.mxu0 0
        %5051 = vmatpush1.bf16.msra.mxu0 %v5020
        %5052 = vmatprep.subr.bf16.mxu0 0
        %5053 = vmatpush2.bf16.msra.mxu0 0
        %5054 = vmatprep.subr.bf16.mxu0 0
        %5055 = vmatpush2.bf16.msra.mxu0 0
        %5056 = vmatprep.subr.bf16.mxu0 0
        %5057 = vmatpush2.bf16.msra.mxu0 0
        %5058 = vmatprep.subr.bf16.mxu0 0
        %5059 = vmatpush2.bf16.msra.mxu0 0
        %5060 = vmatprep.subr.bf16.mxu0 0
        %5061 = vmatpush2.bf16.msra.mxu0 0
        %5062 = vmatprep.subr.bf16.mxu0 0
        %5063 = vmatpush2.bf16.msra.mxu0 0
        %5064 = vmatprep.subr.bf16.mxu0 0
        %5065 = vmatpush2.bf16.msra.mxu0 0
        %5066 = vmatprep.subr.bf16.mxu0 0
        %5067 = vmatpush2.bf16.msra.mxu0 0
        %5068 = vmatprep.mubr.bf16.mxu0 0
        %5069 = vmatmul.mubr.bf16.gmra.mxu0 %v4984
        %v5070 = vpop.f32.mrf.mxu0
        %v5071 = vadd.f32 0.0, %v5070
        %v5072 = vpop.f32.mrf.mxu0
        %v5073 = vpop.f32.mrf.mxu0
        %v5074 = vadd.f32 0.0, %v5073
        %v5075 = vpop.f32.mrf.mxu0
        %5076 = vmatprep.mubr.bf16.mxu0 0
        %5077 = vmatmul.mubr.bf16.gmra.mxu0 %v4985
        %v5078 = vpop.f32.mrf.mxu0
        %v5079 = vadd.f32 0.0, %v5078
        %v5080 = vpop.f32.mrf.mxu0
        %v5081 = vpop.f32.mrf.mxu0
        %v5082 = vadd.f32 0.0, %v5081
        %v5083 = vpop.f32.mrf.mxu0
        %5084 = vdwg.mxu0
        %v5085 = vadd.f32 %v4911, %v5071
        %v5086 = vadd.f32 %v4912, %v5074
        %v5087 = vadd.f32 %v4913, %v5079
        %v5088 = vadd.f32 %v4914, %v5082
        %v5089 = vld [vmem:[#allocation2] sm:$0xc]
        %v5090 = vld [vmem:[#allocation2 + $0xc] sm:$0xc]
        %v5095 = vrot.slane %v5089, 6
        %v5096 = vrot.slane %v5095, 4
        %v5097 = vrot.slane %v4468, 6
        %v5098 = vsel %vm1006, %v5096, %v5097
        %v5099 = vrot.slane %v5097, 4
        %v5100 = vrot.slane %v4915, 6
        %v5101 = vsel %vm1006, %v5099, %v5100
        %v5102 = vrot.slane %v5090, 6
        %v5103 = vrot.slane %v5102, 4
        %v5104 = vrot.slane %v4470, 6
        %v5105 = vsel %vm1006, %v5103, %v5104
        %v5106 = vrot.slane %v5104, 4
        %v5107 = vrot.slane %v4916, 6
        %v5108 = vsel %vm1006, %v5106, %v5107
        %s5109 = scalar_lea.vmem [#allocation3], 896
        %v5110 = vld [vmem:[%s5109] sm:$0xf]
        %v5111 = vld [vmem:[%s5109 + $0x4] sm:$0xf]
        %v5112 = vld [vmem:[%s5109 + $0x8] sm:$0xf]
        %v5113 = vld [vmem:[%s5109 + $0xc] sm:$0xf]
        %v5114 = vld [vmem:[%s5109 + $0x10] sm:$0xf]
        %v5115 = vld [vmem:[%s5109 + $0x14] sm:$0xf]
        %v5116 = vld [vmem:[%s5109 + $0x18] sm:$0xf]
        %v5117 = vld [vmem:[%s5109 + $0x1c] sm:$0xf]
        %v5118 = vld [vmem:[%s5109 + $0x20] sm:$0xf]
        %v5119 = vld [vmem:[%s5109 + $0x24] sm:$0xf]
        %v5120 = vld [vmem:[%s5109 + $0x28] sm:$0xf]
        %v5121 = vld [vmem:[%s5109 + $0x2c] sm:$0xf]
        %v5122 = vld [vmem:[%s5109 + $0x30] sm:$0xf]
        %v5123 = vld [vmem:[%s5109 + $0x34] sm:$0xf]
        %v5124 = vld [vmem:[%s5109 + $0x38] sm:$0xf]
        %v5125 = vld [vmem:[%s5109 + $0x3c] sm:$0xf]
        %v5126 = vunpack.c.l.b16 %v5098
        %v5127 = vunpack.c.l.b16 %v5101
        %v5128 = vunpack.c.l.b16 %v5105
        %v5129 = vunpack.c.l.b16 %v5108
        %v5130 = vpack.c.b16 %v5127, %v5126
        %v5131 = vpack.c.b16 %v5129, %v5128
        %v5150 = vunpack.c.l.b16 %v5110
        %v5151 = vunpack.c.l.b16 %v5111
        %v5152 = vunpack.c.l.b16 %v5112
        %v5153 = vunpack.c.l.b16 %v5113
        %v5154 = vunpack.c.l.b16 %v5114
        %v5155 = vunpack.c.l.b16 %v5115
        %v5156 = vunpack.c.l.b16 %v5116
        %v5157 = vunpack.c.l.b16 %v5117
        %v5158 = vunpack.c.l.b16 %v5118
        %v5159 = vunpack.c.l.b16 %v5119
        %v5160 = vunpack.c.l.b16 %v5120
        %v5161 = vunpack.c.l.b16 %v5121
        %v5162 = vunpack.c.l.b16 %v5122
        %v5163 = vunpack.c.l.b16 %v5123
        %v5164 = vunpack.c.l.b16 %v5124
        %v5165 = vunpack.c.l.b16 %v5125
        %v5166 = vpack.c.b16 %v5151, %v5150
        %v5167 = vpack.c.b16 %v5153, %v5152
        %v5168 = vpack.c.b16 %v5155, %v5154
        %v5169 = vpack.c.b16 %v5157, %v5156
        %v5170 = vpack.c.b16 %v5159, %v5158
        %v5171 = vpack.c.b16 %v5161, %v5160
        %v5172 = vpack.c.b16 %v5163, %v5162
        %v5173 = vpack.c.b16 %v5165, %v5164
        %5182 = vmatprep.subr.bf16.mxu0 0
        %5183 = vmatpush1.bf16.msra.mxu0 %v5173
        %5184 = vmatprep.subr.bf16.mxu0 0
        %5185 = vmatpush1.bf16.msra.mxu0 %v5172
        %5186 = vmatprep.subr.bf16.mxu0 0
        %5187 = vmatpush1.bf16.msra.mxu0 %v5171
        %5188 = vmatprep.subr.bf16.mxu0 0
        %5189 = vmatpush1.bf16.msra.mxu0 %v5170
        %5190 = vmatprep.subr.bf16.mxu0 0
        %5191 = vmatpush1.bf16.msra.mxu0 %v5169
        %5192 = vmatprep.subr.bf16.mxu0 0
        %5193 = vmatpush1.bf16.msra.mxu0 %v5168
        %5194 = vmatprep.subr.bf16.mxu0 0
        %5195 = vmatpush1.bf16.msra.mxu0 %v5167
        %5196 = vmatprep.subr.bf16.mxu0 0
        %5197 = vmatpush1.bf16.msra.mxu0 %v5166
        %5198 = vmatprep.subr.bf16.mxu0 0
        %5199 = vmatpush2.bf16.msra.mxu0 0
        %5200 = vmatprep.subr.bf16.mxu0 0
        %5201 = vmatpush2.bf16.msra.mxu0 0
        %5202 = vmatprep.subr.bf16.mxu0 0
        %5203 = vmatpush2.bf16.msra.mxu0 0
        %5204 = vmatprep.subr.bf16.mxu0 0
        %5205 = vmatpush2.bf16.msra.mxu0 0
        %5206 = vmatprep.subr.bf16.mxu0 0
        %5207 = vmatpush2.bf16.msra.mxu0 0
        %5208 = vmatprep.subr.bf16.mxu0 0
        %5209 = vmatpush2.bf16.msra.mxu0 0
        %5210 = vmatprep.subr.bf16.mxu0 0
        %5211 = vmatpush2.bf16.msra.mxu0 0
        %5212 = vmatprep.subr.bf16.mxu0 0
        %5213 = vmatpush2.bf16.msra.mxu0 0
        %5214 = vmatprep.mubr.bf16.mxu0 0
        %5215 = vmatmul.mubr.bf16.gmra.mxu0 %v5130
        %v5216 = vpop.f32.mrf.mxu0
        %v5217 = vadd.f32 0.0, %v5216
        %v5218 = vpop.f32.mrf.mxu0
        %v5219 = vpop.f32.mrf.mxu0
        %v5220 = vadd.f32 0.0, %v5219
        %v5221 = vpop.f32.mrf.mxu0
        %5222 = vmatprep.mubr.bf16.mxu0 0
        %5223 = vmatmul.mubr.bf16.gmra.mxu0 %v5131
        %v5224 = vpop.f32.mrf.mxu0
        %v5225 = vadd.f32 0.0, %v5224
        %v5226 = vpop.f32.mrf.mxu0
        %v5227 = vpop.f32.mrf.mxu0
        %v5228 = vadd.f32 0.0, %v5227
        %v5229 = vpop.f32.mrf.mxu0
        %5230 = vdwg.mxu0
        %v5231 = vadd.f32 %v5085, %v5217
        %v5232 = vadd.f32 %v5086, %v5220
        %v5233 = vadd.f32 %v5087, %v5225
        %v5234 = vadd.f32 %v5088, %v5228
        %v5236 = vlaneseq
        %v5237 = vshrl.u32 %v5236, 7
        %v5238 = vsub.s32 0, %v5237
        %v5239 = vrot.slane %v4466, %v5238
        %v5241 = vadd.f32 %v5231, %v5239
        %v5242 = vadd.f32 %v5232, %v5239
        %v5243 = vadd.f32 %v5233, %v5239
        %v5244 = vadd.f32 %v5234, %v5239
        %v5245 = vadd.f32 %v3609, %v5241
        %v5246 = vadd.f32 %v3610, %v5242
        %v5247 = vadd.f32 %v3611, %v5243
        %v5248 = vadd.f32 %v3612, %v5244
        %v5249 = vpack.c.bf16 %v5246, %v5245
        %v5250 = vpack.c.bf16 %v5248, %v5247
        %v5253 = vunpack.c.l.b16 %v5249
        %v5254 = vunpack.c.h.b16 %v5249
        %v5255 = vunpack.c.l.b16 %v5250
        %v5256 = vunpack.c.h.b16 %v5250
        %v5257 = vpack.c.b16 %v5253, %v5253
        %v5258 = vpack.c.b16 %v5254, %v5254
        %v5259 = vpack.c.b16 %v5255, %v5255
        %v5260 = vpack.c.b16 %v5256, %v5256
        %v5261 = vrot.slane %v5257, 7
        %v5262 = vrot.slane %v5261, 4
        %v5263 = vrot.slane %v5258, 7
        %v5264 = vsel %vm344, %v5262, %v5263
        %v5265 = vrot.slane %v5263, 4
        %v5266 = vrot.slane %v5259, 7
        %v5267 = vrot.slane %v5266, 4
        %v5268 = vrot.slane %v5260, 7
        %v5269 = vsel %vm344, %v5267, %v5268
        %v5270 = vrot.slane %v5268, 4
        %5277 = vst [vmem:[#allocation2] sm:$0xe] %v5261
        %5278 = vst [vmem:[#allocation2 + $0x4] sm:$0xf] %v5264
        %5279 = vst [vmem:[#allocation2 + $0x8] sm:$0x1] %v5265
        %5280 = vst [vmem:[#allocation2 + $0xc] sm:$0xe] %v5266
        %5281 = vst [vmem:[#allocation2 + $0x10] sm:$0xf] %v5269
        %5282 = vst [vmem:[#allocation2 + $0x14] sm:$0x1] %v5270
        %v5283 = vld [vmem:[#allocation2] sm:$0xf]
        %v5284 = vld [vmem:[#allocation2 + $0x4] sm:$0xf]
        %v5285 = vld [vmem:[#allocation2 + $0x8] sm:$0x1]
        %v5286 = vld [vmem:[#allocation2 + $0xc] sm:$0xf]
        %v5287 = vld [vmem:[#allocation2 + $0x10] sm:$0xf]
        %v5288 = vld [vmem:[#allocation2 + $0x14] sm:$0x1]
        %v5290 = vshrl.u32 %v5283, 16
        %v5292 = vrot.slane %v5290, 4
        %v5293 = vshll.u32 %v5283, 16
        %v5295 = vrot.slane %v5293, 5
        %v5296 = vor.u32 %v5292, %v5295
        %v5297 = vrot.slane %v5296, 4
        %v5299 = vshll.u32 %v5284, 16
        %v5301 = vrot.slane %v5299, 5
        %v5302 = vsel %vm392, %v5297, %v5301
        %v5303 = vshrl.u32 %v5284, 16
        %v5305 = vrot.slane %v5303, 4
        %v5306 = vor.u32 %v5305, %v5301
        %v5307 = vrot.slane %v5306, 4
        %v5309 = vshll.u32 %v5285, 16
        %v5311 = vrot.slane %v5309, 5
        %v5312 = vsel %vm392, %v5307, %v5311
        %v5314 = vshrl.u32 %v5286, 16
        %v5316 = vrot.slane %v5314, 4
        %v5317 = vshll.u32 %v5286, 16
        %v5319 = vrot.slane %v5317, 5
        %v5320 = vor.u32 %v5316, %v5319
        %v5321 = vrot.slane %v5320, 4
        %v5323 = vshll.u32 %v5287, 16
        %v5325 = vrot.slane %v5323, 5
        %v5326 = vsel %vm392, %v5321, %v5325
        %v5327 = vshrl.u32 %v5287, 16
        %v5329 = vrot.slane %v5327, 4
        %v5330 = vor.u32 %v5329, %v5325
        %v5331 = vrot.slane %v5330, 4
        %v5333 = vshll.u32 %v5288, 16
        %v5335 = vrot.slane %v5333, 5
        %v5336 = vsel %vm392, %v5331, %v5335
        %v5337 = vld [vmem:[%s5] sm:$0xf]
        %v5338 = vld [vmem:[%s5 + $0x4] sm:$0xf]
        %v5339 = vld [vmem:[%s5 + $0x8] sm:$0xf]
        %v5340 = vld [vmem:[%s5 + $0xc] sm:$0xf]
        %v5341 = vld [vmem:[%s5 + $0x10] sm:$0xf]
        %v5342 = vld [vmem:[%s5 + $0x14] sm:$0xf]
        %v5343 = vld [vmem:[%s5 + $0x18] sm:$0xf]
        %v5344 = vld [vmem:[%s5 + $0x1c] sm:$0xf]
        %v5345 = vld [vmem:[%s5 + $0x20] sm:$0xf]
        %v5346 = vld [vmem:[%s5 + $0x24] sm:$0xf]
        %v5347 = vld [vmem:[%s5 + $0x28] sm:$0xf]
        %v5348 = vld [vmem:[%s5 + $0x2c] sm:$0xf]
        %v5349 = vld [vmem:[%s5 + $0x30] sm:$0xf]
        %v5350 = vld [vmem:[%s5 + $0x34] sm:$0xf]
        %v5351 = vld [vmem:[%s5 + $0x38] sm:$0xf]
        %v5352 = vld [vmem:[%s5 + $0x3c] sm:$0xf]
        %v5353 = vld [vmem:[#allocation2] sm:$0xe]
        %v5354 = vld [vmem:[#allocation2 + $0xc] sm:$0xe]
        %v5361 = vrot.slane %v5353, 5
        %v5362 = vrot.slane %v5361, 4
        %v5363 = vrot.slane %v5284, 5
        %v5364 = vsel %vm680, %v5362, %v5363
        %v5365 = vrot.slane %v5363, 4
        %v5366 = vrot.slane %v5285, 5
        %v5367 = vsel %vm680, %v5365, %v5366
        %v5368 = vrot.slane %v5354, 5
        %v5369 = vrot.slane %v5368, 4
        %v5370 = vrot.slane %v5287, 5
        %v5371 = vsel %vm680, %v5369, %v5370
        %v5372 = vrot.slane %v5370, 4
        %v5373 = vrot.slane %v5288, 5
        %v5374 = vsel %vm680, %v5372, %v5373
        %v5375 = vld [vmem:[%s6] sm:$0xff]
        %v5376 = vld [vmem:[%s6 + $0x8] sm:$0xff]
        %v5377 = vld [vmem:[%s6 + $0x10] sm:$0xff]
        %v5378 = vld [vmem:[%s6 + $0x18] sm:$0xff]
        %v5379 = vld [vmem:[%s6 + $0x20] sm:$0xff]
        %v5380 = vld [vmem:[%s6 + $0x28] sm:$0xff]
        %v5381 = vld [vmem:[%s6 + $0x30] sm:$0xff]
        %v5382 = vld [vmem:[%s6 + $0x38] sm:$0xff]
        %v5383 = vld [vmem:[%s6 + $0x40] sm:$0xff]
        %v5384 = vld [vmem:[%s6 + $0x48] sm:$0xff]
        %v5385 = vld [vmem:[%s6 + $0x50] sm:$0xff]
        %v5386 = vld [vmem:[%s6 + $0x58] sm:$0xff]
        %v5387 = vld [vmem:[%s6 + $0x60] sm:$0xff]
        %v5388 = vld [vmem:[%s6 + $0x68] sm:$0xff]
        %v5389 = vld [vmem:[%s6 + $0x70] sm:$0xff]
        %v5390 = vld [vmem:[%s6 + $0x78] sm:$0xff]
        %v5391 = vunpack.c.l.b16 %v5364
        %v5392 = vunpack.c.l.b16 %v5367
        %v5393 = vunpack.c.l.b16 %v5371
        %v5394 = vunpack.c.l.b16 %v5374
        %v5395 = vpack.c.b16 %v5392, %v5391
        %v5396 = vpack.c.b16 %v5394, %v5393
        %v5415 = vunpack.c.l.b16 %v5375
        %v5416 = vunpack.c.h.b16 %v5375
        %v5417 = vunpack.c.l.b16 %v5376
        %v5418 = vunpack.c.h.b16 %v5376
        %v5419 = vunpack.c.l.b16 %v5377
        %v5420 = vunpack.c.h.b16 %v5377
        %v5421 = vunpack.c.l.b16 %v5378
        %v5422 = vunpack.c.h.b16 %v5378
        %v5423 = vunpack.c.l.b16 %v5379
        %v5424 = vunpack.c.h.b16 %v5379
        %v5425 = vunpack.c.l.b16 %v5380
        %v5426 = vunpack.c.h.b16 %v5380
        %v5427 = vunpack.c.l.b16 %v5381
        %v5428 = vunpack.c.h.b16 %v5381
        %v5429 = vunpack.c.l.b16 %v5382
        %v5430 = vunpack.c.h.b16 %v5382
        %v5431 = vunpack.c.l.b16 %v5383
        %v5432 = vunpack.c.h.b16 %v5383
        %v5433 = vunpack.c.l.b16 %v5384
        %v5434 = vunpack.c.h.b16 %v5384
        %v5435 = vunpack.c.l.b16 %v5385
        %v5436 = vunpack.c.h.b16 %v5385
        %v5437 = vunpack.c.l.b16 %v5386
        %v5438 = vunpack.c.h.b16 %v5386
        %v5439 = vunpack.c.l.b16 %v5387
        %v5440 = vunpack.c.h.b16 %v5387
        %v5441 = vunpack.c.l.b16 %v5388
        %v5442 = vunpack.c.h.b16 %v5388
        %v5443 = vunpack.c.l.b16 %v5389
        %v5444 = vunpack.c.h.b16 %v5389
        %v5445 = vunpack.c.l.b16 %v5390
        %v5446 = vunpack.c.h.b16 %v5390
        %v5447 = vpack.c.b16 %v5417, %v5415
        %v5448 = vpack.c.b16 %v5418, %v5416
        %v5449 = vpack.c.b16 %v5421, %v5419
        %v5450 = vpack.c.b16 %v5422, %v5420
        %v5451 = vpack.c.b16 %v5425, %v5423
        %v5452 = vpack.c.b16 %v5426, %v5424
        %v5453 = vpack.c.b16 %v5429, %v5427
        %v5454 = vpack.c.b16 %v5430, %v5428
        %v5455 = vpack.c.b16 %v5433, %v5431
        %v5456 = vpack.c.b16 %v5434, %v5432
        %v5457 = vpack.c.b16 %v5437, %v5435
        %v5458 = vpack.c.b16 %v5438, %v5436
        %v5459 = vpack.c.b16 %v5441, %v5439
        %v5460 = vpack.c.b16 %v5442, %v5440
        %v5461 = vpack.c.b16 %v5445, %v5443
        %v5462 = vpack.c.b16 %v5446, %v5444
        %5479 = vmatprep.subr.bf16.mxu0 %v5462
        %5480 = vmatpush1.bf16.msra.mxu0 %v5461
        %5481 = vmatprep.subr.bf16.mxu0 %v5460
        %5482 = vmatpush1.bf16.msra.mxu0 %v5459
        %5483 = vmatprep.subr.bf16.mxu0 %v5458
        %5484 = vmatpush1.bf16.msra.mxu0 %v5457
        %5485 = vmatprep.subr.bf16.mxu0 %v5456
        %5486 = vmatpush1.bf16.msra.mxu0 %v5455
        %5487 = vmatprep.subr.bf16.mxu0 %v5454
        %5488 = vmatpush1.bf16.msra.mxu0 %v5453
        %5489 = vmatprep.subr.bf16.mxu0 %v5452
        %5490 = vmatpush1.bf16.msra.mxu0 %v5451
        %5491 = vmatprep.subr.bf16.mxu0 %v5450
        %5492 = vmatpush1.bf16.msra.mxu0 %v5449
        %5493 = vmatprep.subr.bf16.mxu0 %v5448
        %5494 = vmatpush1.bf16.msra.mxu0 %v5447
        %5495 = vmatprep.subr.bf16.mxu0 0
        %5496 = vmatpush2.bf16.msra.mxu0 0
        %5497 = vmatprep.subr.bf16.mxu0 0
        %5498 = vmatpush2.bf16.msra.mxu0 0
        %5499 = vmatprep.subr.bf16.mxu0 0
        %5500 = vmatpush2.bf16.msra.mxu0 0
        %5501 = vmatprep.subr.bf16.mxu0 0
        %5502 = vmatpush2.bf16.msra.mxu0 0
        %5503 = vmatprep.subr.bf16.mxu0 0
        %5504 = vmatpush2.bf16.msra.mxu0 0
        %5505 = vmatprep.subr.bf16.mxu0 0
        %5506 = vmatpush2.bf16.msra.mxu0 0
        %5507 = vmatprep.subr.bf16.mxu0 0
        %5508 = vmatpush2.bf16.msra.mxu0 0
        %5509 = vmatprep.subr.bf16.mxu0 0
        %5510 = vmatpush2.bf16.msra.mxu0 0
        %5511 = vmatprep.mubr.bf16.mxu0 0
        %5512 = vmatmul.mubr.bf16.gmra.mxu0 %v5395
        %v5513 = vpop.f32.mrf.mxu0
        %v5514 = vadd.f32 0.0, %v5513
        %v5515 = vpop.f32.mrf.mxu0
        %v5516 = vadd.f32 0.0, %v5515
        %v5517 = vpop.f32.mrf.mxu0
        %v5518 = vadd.f32 0.0, %v5517
        %v5519 = vpop.f32.mrf.mxu0
        %v5520 = vadd.f32 0.0, %v5519
        %5521 = vmatprep.mubr.bf16.mxu0 0
        %5522 = vmatmul.mubr.bf16.gmra.mxu0 %v5396
        %v5523 = vpop.f32.mrf.mxu0
        %v5524 = vadd.f32 0.0, %v5523
        %v5525 = vpop.f32.mrf.mxu0
        %v5526 = vadd.f32 0.0, %v5525
        %v5527 = vpop.f32.mrf.mxu0
        %v5528 = vadd.f32 0.0, %v5527
        %v5529 = vpop.f32.mrf.mxu0
        %v5530 = vadd.f32 0.0, %v5529
        %5531 = vdwg.mxu0
        %v5532 = vld [vmem:[#allocation2 + $0x8] sm:$0x3]
        %v5533 = vld [vmem:[#allocation2 + $0x14] sm:$0x3]
        %v5535 = vshrl.u32 %v5353, 16
        %v5537 = vrot.slane %v5535, 5
        %v5538 = vshll.u32 %v5353, 16
        %v5540 = vrot.slane %v5538, 6
        %v5541 = vor.u32 %v5537, %v5540
        %v5542 = vrot.slane %v5541, 4
        %v5543 = vrot.slane %v5303, 5
        %v5544 = vrot.slane %v5299, 6
        %v5545 = vor.u32 %v5543, %v5544
        %v5546 = vsel %vm825, %v5542, %v5545
        %v5547 = vrot.slane %v5545, 4
        %v5549 = vshrl.u32 %v5532, 16
        %v5551 = vrot.slane %v5549, 5
        %v5552 = vshll.u32 %v5532, 16
        %v5554 = vrot.slane %v5552, 6
        %v5555 = vor.u32 %v5551, %v5554
        %v5556 = vsel %vm825, %v5547, %v5555
        %v5558 = vshrl.u32 %v5354, 16
        %v5560 = vrot.slane %v5558, 5
        %v5561 = vshll.u32 %v5354, 16
        %v5563 = vrot.slane %v5561, 6
        %v5564 = vor.u32 %v5560, %v5563
        %v5565 = vrot.slane %v5564, 4
        %v5566 = vrot.slane %v5327, 5
        %v5567 = vrot.slane %v5323, 6
        %v5568 = vor.u32 %v5566, %v5567
        %v5569 = vsel %vm825, %v5565, %v5568
        %v5570 = vrot.slane %v5568, 4
        %v5572 = vshrl.u32 %v5533, 16
        %v5574 = vrot.slane %v5572, 5
        %v5575 = vshll.u32 %v5533, 16
        %v5577 = vrot.slane %v5575, 6
        %v5578 = vor.u32 %v5574, %v5577
        %v5579 = vsel %vm825, %v5570, %v5578
        %s5580 = scalar_lea.vmem %s6, 128
        %v5581 = vld [vmem:[%s5580] sm:$0xff]
        %v5582 = vld [vmem:[%s5580 + $0x8] sm:$0xff]
        %v5583 = vld [vmem:[%s5580 + $0x10] sm:$0xff]
        %v5584 = vld [vmem:[%s5580 + $0x18] sm:$0xff]
        %v5585 = vld [vmem:[%s5580 + $0x20] sm:$0xff]
        %v5586 = vld [vmem:[%s5580 + $0x28] sm:$0xff]
        %v5587 = vld [vmem:[%s5580 + $0x30] sm:$0xff]
        %v5588 = vld [vmem:[%s5580 + $0x38] sm:$0xff]
        %v5589 = vld [vmem:[%s5580 + $0x40] sm:$0xff]
        %v5590 = vld [vmem:[%s5580 + $0x48] sm:$0xff]
        %v5591 = vld [vmem:[%s5580 + $0x50] sm:$0xff]
        %v5592 = vld [vmem:[%s5580 + $0x58] sm:$0xff]
        %v5593 = vld [vmem:[%s5580 + $0x60] sm:$0xff]
        %v5594 = vld [vmem:[%s5580 + $0x68] sm:$0xff]
        %v5595 = vld [vmem:[%s5580 + $0x70] sm:$0xff]
        %v5596 = vld [vmem:[%s5580 + $0x78] sm:$0xff]
        %v5597 = vunpack.c.l.b16 %v5546
        %v5598 = vunpack.c.l.b16 %v5556
        %v5599 = vunpack.c.l.b16 %v5569
        %v5600 = vunpack.c.l.b16 %v5579
        %v5601 = vpack.c.b16 %v5598, %v5597
        %v5602 = vpack.c.b16 %v5600, %v5599
        %v5621 = vunpack.c.l.b16 %v5581
        %v5622 = vunpack.c.h.b16 %v5581
        %v5623 = vunpack.c.l.b16 %v5582
        %v5624 = vunpack.c.h.b16 %v5582
        %v5625 = vunpack.c.l.b16 %v5583
        %v5626 = vunpack.c.h.b16 %v5583
        %v5627 = vunpack.c.l.b16 %v5584
        %v5628 = vunpack.c.h.b16 %v5584
        %v5629 = vunpack.c.l.b16 %v5585
        %v5630 = vunpack.c.h.b16 %v5585
        %v5631 = vunpack.c.l.b16 %v5586
        %v5632 = vunpack.c.h.b16 %v5586
        %v5633 = vunpack.c.l.b16 %v5587
        %v5634 = vunpack.c.h.b16 %v5587
        %v5635 = vunpack.c.l.b16 %v5588
        %v5636 = vunpack.c.h.b16 %v5588
        %v5637 = vunpack.c.l.b16 %v5589
        %v5638 = vunpack.c.h.b16 %v5589
        %v5639 = vunpack.c.l.b16 %v5590
        %v5640 = vunpack.c.h.b16 %v5590
        %v5641 = vunpack.c.l.b16 %v5591
        %v5642 = vunpack.c.h.b16 %v5591
        %v5643 = vunpack.c.l.b16 %v5592
        %v5644 = vunpack.c.h.b16 %v5592
        %v5645 = vunpack.c.l.b16 %v5593
        %v5646 = vunpack.c.h.b16 %v5593
        %v5647 = vunpack.c.l.b16 %v5594
        %v5648 = vunpack.c.h.b16 %v5594
        %v5649 = vunpack.c.l.b16 %v5595
        %v5650 = vunpack.c.h.b16 %v5595
        %v5651 = vunpack.c.l.b16 %v5596
        %v5652 = vunpack.c.h.b16 %v5596
        %v5653 = vpack.c.b16 %v5623, %v5621
        %v5654 = vpack.c.b16 %v5624, %v5622
        %v5655 = vpack.c.b16 %v5627, %v5625
        %v5656 = vpack.c.b16 %v5628, %v5626
        %v5657 = vpack.c.b16 %v5631, %v5629
        %v5658 = vpack.c.b16 %v5632, %v5630
        %v5659 = vpack.c.b16 %v5635, %v5633
        %v5660 = vpack.c.b16 %v5636, %v5634
        %v5661 = vpack.c.b16 %v5639, %v5637
        %v5662 = vpack.c.b16 %v5640, %v5638
        %v5663 = vpack.c.b16 %v5643, %v5641
        %v5664 = vpack.c.b16 %v5644, %v5642
        %v5665 = vpack.c.b16 %v5647, %v5645
        %v5666 = vpack.c.b16 %v5648, %v5646
        %v5667 = vpack.c.b16 %v5651, %v5649
        %v5668 = vpack.c.b16 %v5652, %v5650
        %5685 = vmatprep.subr.bf16.mxu0 %v5668
        %5686 = vmatpush1.bf16.msra.mxu0 %v5667
        %5687 = vmatprep.subr.bf16.mxu0 %v5666
        %5688 = vmatpush1.bf16.msra.mxu0 %v5665
        %5689 = vmatprep.subr.bf16.mxu0 %v5664
        %5690 = vmatpush1.bf16.msra.mxu0 %v5663
        %5691 = vmatprep.subr.bf16.mxu0 %v5662
        %5692 = vmatpush1.bf16.msra.mxu0 %v5661
        %5693 = vmatprep.subr.bf16.mxu0 %v5660
        %5694 = vmatpush1.bf16.msra.mxu0 %v5659
        %5695 = vmatprep.subr.bf16.mxu0 %v5658
        %5696 = vmatpush1.bf16.msra.mxu0 %v5657
        %5697 = vmatprep.subr.bf16.mxu0 %v5656
        %5698 = vmatpush1.bf16.msra.mxu0 %v5655
        %5699 = vmatprep.subr.bf16.mxu0 %v5654
        %5700 = vmatpush1.bf16.msra.mxu0 %v5653
        %5701 = vmatprep.subr.bf16.mxu0 0
        %5702 = vmatpush2.bf16.msra.mxu0 0
        %5703 = vmatprep.subr.bf16.mxu0 0
        %5704 = vmatpush2.bf16.msra.mxu0 0
        %5705 = vmatprep.subr.bf16.mxu0 0
        %5706 = vmatpush2.bf16.msra.mxu0 0
        %5707 = vmatprep.subr.bf16.mxu0 0
        %5708 = vmatpush2.bf16.msra.mxu0 0
        %5709 = vmatprep.subr.bf16.mxu0 0
        %5710 = vmatpush2.bf16.msra.mxu0 0
        %5711 = vmatprep.subr.bf16.mxu0 0
        %5712 = vmatpush2.bf16.msra.mxu0 0
        %5713 = vmatprep.subr.bf16.mxu0 0
        %5714 = vmatpush2.bf16.msra.mxu0 0
        %5715 = vmatprep.subr.bf16.mxu0 0
        %5716 = vmatpush2.bf16.msra.mxu0 0
        %5717 = vmatprep.mubr.bf16.mxu0 0
        %5718 = vmatmul.mubr.bf16.gmra.mxu0 %v5601
        %v5719 = vpop.f32.mrf.mxu0
        %v5720 = vadd.f32 0.0, %v5719
        %v5721 = vpop.f32.mrf.mxu0
        %v5722 = vadd.f32 0.0, %v5721
        %v5723 = vpop.f32.mrf.mxu0
        %v5724 = vadd.f32 0.0, %v5723
        %v5725 = vpop.f32.mrf.mxu0
        %v5726 = vadd.f32 0.0, %v5725
        %5727 = vmatprep.mubr.bf16.mxu0 0
        %5728 = vmatmul.mubr.bf16.gmra.mxu0 %v5602
        %v5729 = vpop.f32.mrf.mxu0
        %v5730 = vadd.f32 0.0, %v5729
        %v5731 = vpop.f32.mrf.mxu0
        %v5732 = vadd.f32 0.0, %v5731
        %v5733 = vpop.f32.mrf.mxu0
        %v5734 = vadd.f32 0.0, %v5733
        %v5735 = vpop.f32.mrf.mxu0
        %v5736 = vadd.f32 0.0, %v5735
        %5737 = vdwg.mxu0
        %v5738 = vunpack.c.l.b16 %v5302
        %v5739 = vunpack.c.l.b16 %v5312
        %v5740 = vunpack.c.l.b16 %v5326
        %v5741 = vunpack.c.l.b16 %v5336
        %v5742 = vpack.c.b16 %v5739, %v5738
        %v5743 = vpack.c.b16 %v5741, %v5740
        %v5762 = vunpack.c.l.b16 %v5337
        %v5763 = vunpack.c.l.b16 %v5338
        %v5764 = vunpack.c.l.b16 %v5339
        %v5765 = vunpack.c.l.b16 %v5340
        %v5766 = vunpack.c.l.b16 %v5341
        %v5767 = vunpack.c.l.b16 %v5342
        %v5768 = vunpack.c.l.b16 %v5343
        %v5769 = vunpack.c.l.b16 %v5344
        %v5770 = vunpack.c.l.b16 %v5345
        %v5771 = vunpack.c.l.b16 %v5346
        %v5772 = vunpack.c.l.b16 %v5347
        %v5773 = vunpack.c.l.b16 %v5348
        %v5774 = vunpack.c.l.b16 %v5349
        %v5775 = vunpack.c.l.b16 %v5350
        %v5776 = vunpack.c.l.b16 %v5351
        %v5777 = vunpack.c.l.b16 %v5352
        %v5778 = vpack.c.b16 %v5763, %v5762
        %v5779 = vpack.c.b16 %v5765, %v5764
        %v5780 = vpack.c.b16 %v5767, %v5766
        %v5781 = vpack.c.b16 %v5769, %v5768
        %v5782 = vpack.c.b16 %v5771, %v5770
        %v5783 = vpack.c.b16 %v5773, %v5772
        %v5784 = vpack.c.b16 %v5775, %v5774
        %v5785 = vpack.c.b16 %v5777, %v5776
        %5794 = vmatprep.subr.bf16.mxu0 0
        %5795 = vmatpush1.bf16.msra.mxu0 %v5785
        %5796 = vmatprep.subr.bf16.mxu0 0
        %5797 = vmatpush1.bf16.msra.mxu0 %v5784
        %5798 = vmatprep.subr.bf16.mxu0 0
        %5799 = vmatpush1.bf16.msra.mxu0 %v5783
        %5800 = vmatprep.subr.bf16.mxu0 0
        %5801 = vmatpush1.bf16.msra.mxu0 %v5782
        %5802 = vmatprep.subr.bf16.mxu0 0
        %5803 = vmatpush1.bf16.msra.mxu0 %v5781
        %5804 = vmatprep.subr.bf16.mxu0 0
        %5805 = vmatpush1.bf16.msra.mxu0 %v5780
        %5806 = vmatprep.subr.bf16.mxu0 0
        %5807 = vmatpush1.bf16.msra.mxu0 %v5779
        %5808 = vmatprep.subr.bf16.mxu0 0
        %5809 = vmatpush1.bf16.msra.mxu0 %v5778
        %5810 = vmatprep.subr.bf16.mxu0 0
        %5811 = vmatpush2.bf16.msra.mxu0 0
        %5812 = vmatprep.subr.bf16.mxu0 0
        %5813 = vmatpush2.bf16.msra.mxu0 0
        %5814 = vmatprep.subr.bf16.mxu0 0
        %5815 = vmatpush2.bf16.msra.mxu0 0
        %5816 = vmatprep.subr.bf16.mxu0 0
        %5817 = vmatpush2.bf16.msra.mxu0 0
        %5818 = vmatprep.subr.bf16.mxu0 0
        %5819 = vmatpush2.bf16.msra.mxu0 0
        %5820 = vmatprep.subr.bf16.mxu0 0
        %5821 = vmatpush2.bf16.msra.mxu0 0
        %5822 = vmatprep.subr.bf16.mxu0 0
        %5823 = vmatpush2.bf16.msra.mxu0 0
        %5824 = vmatprep.subr.bf16.mxu0 0
        %5825 = vmatpush2.bf16.msra.mxu0 0
        %5826 = vmatprep.mubr.bf16.mxu0 0
        %5827 = vmatmul.mubr.bf16.gmra.mxu0 %v5742
        %v5828 = vpop.f32.mrf.mxu0
        %v5829 = vadd.f32 %v5514, %v5828
        %v5830 = vpop.f32.mrf.mxu0
        %v5831 = vpop.f32.mrf.mxu0
        %v5832 = vadd.f32 %v5518, %v5831
        %v5833 = vpop.f32.mrf.mxu0
        %5834 = vmatprep.mubr.bf16.mxu0 0
        %5835 = vmatmul.mubr.bf16.gmra.mxu0 %v5743
        %v5836 = vpop.f32.mrf.mxu0
        %v5837 = vadd.f32 %v5524, %v5836
        %v5838 = vpop.f32.mrf.mxu0
        %v5839 = vpop.f32.mrf.mxu0
        %v5840 = vadd.f32 %v5528, %v5839
        %v5841 = vpop.f32.mrf.mxu0
        %5842 = vdwg.mxu0
        %v5843 = vadd.f32 %v5829, %v5720
        %v5844 = vadd.f32 %v5832, %v5724
        %v5845 = vadd.f32 %v5837, %v5730
        %v5846 = vadd.f32 %v5840, %v5734
        %v5847 = vadd.f32 %v5516, %v5722
        %v5848 = vadd.f32 %v5520, %v5726
        %v5849 = vadd.f32 %v5526, %v5732
        %v5850 = vadd.f32 %v5530, %v5736
        %v5851 = vld [vmem:[%s7] sm:$0x1]
        %v5853 = vlaneseq
        %v5854 = vshrl.u32 %v5853, 7
        %v5855 = vsub.s32 0, %v5854
        %v5856 = vrot.slane %v5851, %v5855
        %v5858 = vadd.f32 %v5843, %v5856
        %v5859 = vadd.f32 %v5844, %v5856
        %v5860 = vadd.f32 %v5845, %v5856
        %v5861 = vadd.f32 %v5846, %v5856
        %v5862 = vmax.f32 %v5858, 0.0
        %v5863 = vmax.f32 %v5859, 0.0
        %v5864 = vmax.f32 %v5860, 0.0
        %v5865 = vmax.f32 %v5861, 0.0
        %5866 = vst [vmem:[%s312] sm:$0xff] %v5862
        %5867 = vst [vmem:[%s312 + $0x8] sm:$0xff] %v5863
        %5868 = vst [vmem:[%s312 + $0x10] sm:$0xff] %v5864
        %5869 = vst [vmem:[%s312 + $0x18] sm:$0xff] %v5865
        %v5870 = vadd.f32 %v5847, %v5856
        %v5871 = vadd.f32 %v5848, %v5856
        %v5872 = vadd.f32 %v5849, %v5856
        %v5873 = vadd.f32 %v5850, %v5856
        %v5874 = vmax.f32 %v5870, 0.0
        %v5875 = vmax.f32 %v5871, 0.0
        %v5876 = vmax.f32 %v5872, 0.0
        %v5877 = vmax.f32 %v5873, 0.0
        %s5878 = scalar_lea.vmem %s312, 32 [#allocation5]
        %5879 = vst [vmem:[%s5878] sm:$0xff] %v5874
        %5880 = vst [vmem:[%s5878 + $0x8] sm:$0xff] %v5875
        %5881 = vst [vmem:[%s5878 + $0x10] sm:$0xff] %v5876
        %5882 = vst [vmem:[%s5878 + $0x18] sm:$0xff] %v5877
        %s5883 = sand.u32 %s201, 1
        %s5884 = sand.u32 %s201, 1
        %s5885 = smul.addr %s5884, 64
        %s5886 = scalar_lea.vmem [#allocation5], %s5885
        // Predicated region
        $region57: #{_dblock_forward.1} parent=51 // pred_check
          %p5887 = pneg %p211
        $region58: #{_dblock_forward.1} parent=51 // pred_check_branch
          %5889 = sbr.rel (%p5887) target = $region60
        $region59: #{_dblock_forward.1} parent=51 // pred_region
          %s5890 = smul.u32 2, %s20
          %s5891 = smul.addr %s5890, 2
          %s5892 = smul.addr %s5891, 8
          %s5893 = scalar_lea.vmem %s8, %s5892
          // Predicated region
          $region61: #{_dblock_forward.1} parent=59 // pred_check
            _
          $region62: #{_dblock_forward.1} parent=59 // pred_check_branch
            %5895 = sbr.rel (0) target = $region64
          $region63: #{_dblock_forward.1} parent=59 // pred_region
            // Predicated region
            $region65: #{_dblock_forward.1} parent=63 // pred_check
              _
            $region66: #{_dblock_forward.1} parent=63 // pred_check_branch
              %5897 = sbr.rel (0) target = $region68
            $region67: #{_dblock_forward.1} parent=63 // pred_region
              // Predicated region
              $region80: #{_dblock_forward.1} parent=67 // pred_check
                _
              $region81: #{_dblock_forward.1} parent=67 // pred_check_branch
                %5927 = sbr.rel (0) target = $region83
              $region82: #{_dblock_forward.1} parent=67 // pred_region
                loop: start=0, step=1, limit=1
                $region84: #{_dblock_forward.1} parent=82 // loop_pre_header
                  _
                $region85: #{_dblock_forward.1} parent=82 // loop_header
                  %s5929 = sphi 0, %s5933
                  %p5930 = scmp.ge.s32.totalorder %s5929, 1
                  %s5934 = sphi %s5886, %s5886
                  %s5935 = sphi %s5893, %s5893
                $region86: #{_dblock_forward.1} parent=82 // loop_header_branch
                  %5932 = sbr.rel (%p5930) target = $region90
                $region87: #{_dblock_forward.1} parent=82 // loop_body
                  %v5936 = vld [vmem:[%s5934] sm:$0xff]
                  %5937 = vst [vmem:[%s5935] sm:$0xff] %v5936
                  %v5938 = vld [vmem:[%s5934 + $0x8] sm:$0xff]
                  %5939 = vst [vmem:[%s5935 + $0x8] sm:$0xff] %v5938
                  %v5940 = vld [vmem:[%s5934 + $0x10] sm:$0xff]
                  %5941 = vst [vmem:[%s5935 + $0x10] sm:$0xff] %v5940
                  %v5942 = vld [vmem:[%s5934 + $0x18] sm:$0xff]
                  %5943 = vst [vmem:[%s5935 + $0x18] sm:$0xff] %v5942
                  %v5944 = vld [vmem:[%s5934 + $0x20] sm:$0xff]
                  %5945 = vst [vmem:[%s5935 + $0x40] sm:$0xff] %v5944
                  %v5946 = vld [vmem:[%s5934 + $0x28] sm:$0xff]
                  %5947 = vst [vmem:[%s5935 + $0x48] sm:$0xff] %v5946
                  %v5948 = vld [vmem:[%s5934 + $0x30] sm:$0xff]
                  %5949 = vst [vmem:[%s5935 + $0x50] sm:$0xff] %v5948
                  %v5950 = vld [vmem:[%s5934 + $0x38] sm:$0xff]
                  %5951 = vst [vmem:[%s5935 + $0x58] sm:$0xff] %v5950
                $region88: #{_dblock_forward.1} parent=82 // loop_footer
                  %s5933 = sadd.s32 1, %s5929
                $region89: #{_dblock_forward.1} parent=82 // loop_footer_branch
                  %5928 = sbr.rel target = $region85
                $region90: #{_dblock_forward.1} parent=82 // loop_exit
                  _
              $region83: #{_dblock_forward.1} parent=67 // pred_fallthru
                _
              // Predicated region
              $region91: #{_dblock_forward.1} parent=67 // pred_check
                _
              $region92: #{_dblock_forward.1} parent=67 // pred_check_branch
                %5953 = sbr.rel target = $region94
              $region93: #{_dblock_forward.1} parent=67 // pred_region
                _
              $region94: #{_dblock_forward.1} parent=67 // pred_fallthru
                _
            $region68: #{_dblock_forward.1} parent=63 // pred_fallthru
              _
            // Predicated region
            $region69: #{_dblock_forward.1} parent=63 // pred_check
              _
            $region70: #{_dblock_forward.1} parent=63 // pred_check_branch
              %5899 = sbr.rel target = $region72
            $region71: #{_dblock_forward.1} parent=63 // pred_region
              %s5901 = ssub.s32 256, 1
              loop: start=0, step=1, limit=1
              $region73: #{_dblock_forward.1} parent=71 // loop_pre_header
                _
              $region74: #{_dblock_forward.1} parent=71 // loop_header
                %s5903 = sphi 0, %s5907
                %p5904 = scmp.ge.s32.totalorder %s5903, 1
                %s5908 = sphi %s5886, %s5886
                %s5909 = sphi %s5893, %s5893
              $region75: #{_dblock_forward.1} parent=71 // loop_header_branch
                %5906 = sbr.rel (%p5904) target = $region79
              $region76: #{_dblock_forward.1} parent=71 // loop_body
                %v5910 = vld [vmem:[%s5908] sm:%s5901]
                %5911 = vst [vmem:[%s5909] sm:%s5901] %v5910
                %v5912 = vld [vmem:[%s5908 + $0x8] sm:%s5901]
                %5913 = vst [vmem:[%s5909 + $0x8] sm:%s5901] %v5912
                %v5914 = vld [vmem:[%s5908 + $0x10] sm:%s5901]
                %5915 = vst [vmem:[%s5909 + $0x10] sm:%s5901] %v5914
                %v5916 = vld [vmem:[%s5908 + $0x18] sm:%s5901]
                %5917 = vst [vmem:[%s5909 + $0x18] sm:%s5901] %v5916
                %v5918 = vld [vmem:[%s5908 + $0x20] sm:%s5901]
                %5919 = vst [vmem:[%s5909 + $0x40] sm:%s5901] %v5918
                %v5920 = vld [vmem:[%s5908 + $0x28] sm:%s5901]
                %5921 = vst [vmem:[%s5909 + $0x48] sm:%s5901] %v5920
                %v5922 = vld [vmem:[%s5908 + $0x30] sm:%s5901]
                %5923 = vst [vmem:[%s5909 + $0x50] sm:%s5901] %v5922
                %v5924 = vld [vmem:[%s5908 + $0x38] sm:%s5901]
                %5925 = vst [vmem:[%s5909 + $0x58] sm:%s5901] %v5924
              $region77: #{_dblock_forward.1} parent=71 // loop_footer
                %s5907 = sadd.s32 1, %s5903
              $region78: #{_dblock_forward.1} parent=71 // loop_footer_branch
                %5902 = sbr.rel target = $region74
              $region79: #{_dblock_forward.1} parent=71 // loop_exit
                _
            $region72: #{_dblock_forward.1} parent=63 // pred_fallthru
              _
          $region64: #{_dblock_forward.1} parent=59 // pred_fallthru
            _
          %5954 = vnop
        $region60: #{_dblock_forward.1} parent=51 // pred_fallthru
          _
      $region52: #{_dblock_forward.1} parent=5 // pred_fallthru
        _
      %p5955 = scmp.le.s32.totalorder 2, %s15
      // Predicated region
      $region95: #{_dblock_forward.1} parent=5 // pred_check
        %p5956 = pneg %p5955
      $region96: #{_dblock_forward.1} parent=5 // pred_check_branch
        %5958 = sbr.rel (%p5956) target = $region98
      $region97: #{_dblock_forward.1} parent=5 // pred_region
        %s5959 = ssub.s32 %s15, 2
        // Predicated region
        $region99: #{_dblock_forward.1} parent=97 // pred_check
          %p5960 = pneg %p217
        $region100: #{_dblock_forward.1} parent=97 // pred_check_branch
          %5962 = sbr.rel (%p5960) target = $region102
        $region101: #{_dblock_forward.1} parent=97 // pred_region
          %s5963 = sand.u32 %s202, 1
          %s5964 = sand.u32 %s202, 1
          %s5965 = smul.addr %s5964, 64
          %s5966 = scalar_lea.vmem [#allocation5], %s5965
        $region102: #{_dblock_forward.1} parent=97 // pred_fallthru
          _
      $region98: #{_dblock_forward.1} parent=5 // pred_fallthru
        _
    $region6: #{_dblock_forward.1} parent=1 // loop_footer
      %s19 = sadd.s32 1, %s15
    $region7: #{_dblock_forward.1} parent=1 // loop_footer_branch
      %14 = sbr.rel target = $region3
    $region8: #{_dblock_forward.1} parent=1 // loop_exit
      _
    %5967 = vsyncpa [#allocation4], 1
    %s5968 = scalar_lea.sflag [#allocation4], 1
    %5969 = vsyncpa %s5968, 1

</llo_original>
